<compile_context>
chip_gen: v7x
topology: tpu7x:2x2x1
jax: 0.10.0
libtpu: 0.0.40
codegen_flags: <defaults>
</compile_context>

<pallas_src>
import jax
import jax.numpy as jnp
from jax import lax
from jax.experimental import pallas as pl
from jax.experimental.pallas import tpu as pltpu

_MiB = 1024 * 1024


def _pick_tile(n, pref=512):
    """Largest multiple-of-8 divisor of n that is <= pref (else n itself)."""
    if n % pref == 0:
        return pref
    t = min(pref, n)
    t -= t % 8
    while t >= 8:
        if n % t == 0:
            return t
        t -= 8
    # TODO(synk): no multiple-of-8 divisor <= pref; fall back to the full dim
    # (valid as a BlockSpec since block == array dim, but may be VMEM-heavy).
    return n


# ---------------------------------------------------------------------------
# Kernel 1: fused GroupNorm (folded affine) + single fused q|k|v projection.
# ---------------------------------------------------------------------------
def _norm_qkv_kernel(x_ref, scale_ref, shift_ref, w_ref, b_ref,
                     q_ref, k_ref, v_ref):
    # x_ref    : (1, TQ, C)   input tokens
    # scale_ref: (1, 1, C)    rstd_g * gamma_c
    # shift_ref: (1, 1, C)    beta_c - mean_g * rstd_g * gamma_c
    # w_ref    : (C, 3C)      [Wq*s | Wk | Wv]  (bf16, attn scale folded in)
    # b_ref    : (1, 3C)      [bq*s | bk | bv]  (f32)
    # q/k/v_ref: (1, TQ, C)   bf16 outputs
    C = q_ref.shape[2]
    x = x_ref[0].astype(jnp.float32)
    h = x * scale_ref[0] + shift_ref[0]          # GroupNorm with folded affine
    h = h.astype(w_ref.dtype)                    # narrow MXU operands
    y = jnp.dot(h, w_ref[...], preferred_element_type=jnp.float32)
    y = y + b_ref[...].astype(jnp.float32)       # (TQ, 3C), f32
    q_ref[0] = y[:, :C].astype(q_ref.dtype)
    k_ref[0] = y[:, C:2 * C].astype(k_ref.dtype)
    v_ref[0] = y[:, 2 * C:].astype(v_ref.dtype)


# ---------------------------------------------------------------------------
# Kernel 2: flash-style attention + proj_out + residual add.
# grid = (N, q_tiles, k_tiles); online softmax over the k axis.
# q already carries the 1/sqrt(C) scale, so no per-step scaling here.
# ---------------------------------------------------------------------------
def _attn_proj_kernel(q_ref, k_ref, v_ref, xr_ref, wp_ref, bp_ref,
                      o_ref, m_sc, l_sc, acc_sc):
    ki = pl.program_id(2)

    @pl.when(ki == 0)
    def _():
        m_sc[...] = jnp.full_like(m_sc, -jnp.inf)
        l_sc[...] = jnp.zeros_like(l_sc)
        acc_sc[...] = jnp.zeros_like(acc_sc)

    q = q_ref[0]                                     # (TQ, C) bf16, pre-scaled
    k = k_ref[0]                                     # (TK, C) bf16
    s = lax.dot_general(q, k, (((1,), (1,)), ((), ())),
                        preferred_element_type=jnp.float32)        # (TQ, TK)

    m_prev = m_sc[...]
    m_new = jnp.maximum(m_prev, s.max(axis=-1, keepdims=True))
    alpha = jnp.exp(m_prev - m_new)
    p = jnp.exp(s - m_new)
    l_sc[...] = alpha * l_sc[...] + p.sum(axis=-1, keepdims=True)
    acc_sc[...] = alpha * acc_sc[...] + jnp.dot(
        p.astype(v_ref.dtype), v_ref[0], preferred_element_type=jnp.float32)
    m_sc[...] = m_new

    @pl.when(ki == pl.num_programs(2) - 1)
    def _():
        attn = acc_sc[...] * pl.reciprocal(l_sc[...], approx=True)   # (TQ, C)
        y = jnp.dot(attn.astype(wp_ref.dtype), wp_ref[...],
                    preferred_element_type=jnp.float32)
        y = y + bp_ref[...].astype(jnp.float32)
        y = y + xr_ref[0].astype(jnp.float32)                        # residual
        o_ref[0] = y.astype(o_ref.dtype)


# ---------------------------------------------------------------------------
# Public wrapper: PyTorch-compatible AttnBlock.forward on NCHW input.
# ---------------------------------------------------------------------------
def attn_block_forward(x, gn_gamma, gn_beta, wq, bq, wk, bk, wv, bv, wp, bp,
                       *, num_groups=32, eps=1e-6):
    N, C, H, W = x.shape
    assert C % num_groups == 0, "GroupNorm requires C % num_groups == 0"
    HW = H * W
    G = num_groups
    Cg = C // G
    compute_dtype = jnp.bfloat16
    attn_scale = float(C) ** -0.5
    xbytes = jnp.dtype(x.dtype).itemsize

    # GroupNorm statistics straight off the NCHW input (one XLA reduction,
    # before the layout transpose). Folded into a per-(n, c) affine.
    # TODO(synk): mean/var reduction is a single cheap pass left to XLA.
    xg = x.reshape(N, G, Cg, HW).astype(jnp.float32)
    mean = xg.mean(axis=(2, 3))                       # (N, G)
    var = xg.var(axis=(2, 3))                         # biased, like torch
    rstd = lax.rsqrt(var + eps)
    mean_c = jnp.repeat(mean, Cg, axis=1)             # (N, C)
    rstd_c = jnp.repeat(rstd, Cg, axis=1)
    gamma = gn_gamma.astype(jnp.float32)[None]
    beta = gn_beta.astype(jnp.float32)[None]
    scale_nc = (rstd_c * gamma).reshape(N, 1, C)
    shift_nc = (beta - mean_c * rstd_c * gamma).reshape(N, 1, C)

    # NCHW -> (N, HW, C) tokens.
    # TODO(synk): keep activations token-major end-to-end in the surrounding
    # model so these edge transposes (an extra HBM round trip each) disappear.
    x_tok = jnp.transpose(x, (0, 2, 3, 1)).reshape(N, HW, C)

    # PyTorch 1x1 conv weight (C_out, C_in, 1, 1) -> (C_in, C_out) matmul form.
    def mat(wc):
        return jnp.transpose(wc.reshape(C, C), (1, 0))

    # Fused [q|k|v] projection; attention scale folded into Wq / bq.
    w_qkv = jnp.concatenate([mat(wq) * attn_scale, mat(wk), mat(wv)], axis=1)
    w_qkv = w_qkv.astype(compute_dtype)                        # (C, 3C) bf16
    b_qkv = jnp.concatenate([bq * attn_scale, bk, bv])
    b_qkv = b_qkv.reshape(1, 3 * C).astype(jnp.float32)        # (1, 3C) f32
    wp_m = mat(wp).astype(compute_dtype)                       # (C, C)  bf16
    bp_m = bp.reshape(1, C).astype(jnp.float32)

    # ----------------------- tile / VMEM budgeting -------------------------
    budget = 40 * _MiB          # safe even against v7x's 64 MiB physical VMEM

    def k1_footprint(tq):
        f = 2 * tq * C * xbytes                      # x tile (double buffered)
        f += 2 * 2 * C * 4                           # scale / shift
        f += 2 * (C * 3 * C * 2 + 3 * C * 4)         # weights / bias
        f += 3 * 2 * tq * C * 2                      # q/k/v outputs (bf16)
        f += tq * 3 * C * 4 * 2                      # f32 intermediates
        return f

    def k2_footprint(tq, tk):
        f = 2 * tq * C * 2                           # q (bf16)
        f += 2 * 2 * tk * C * 2                      # k, v (bf16)
        f += 2 * tq * C * xbytes                     # residual
        f += 2 * (C * C * 2 + C * 4)                 # wp, bp
        f += 2 * tq * C * xbytes                     # output
        f += 2 * tq * 4 + tq * C * 4                 # scratch m, l, acc
        f += tq * tk * (4 + 2)                       # s (f32) + p (bf16)
        return f

    def _vmem_limit(nbytes):
        return int(min(max(2 * nbytes, 32 * _MiB), 56 * _MiB))

    # Kernel 1 tiling.
    TQ1 = _pick_tile(HW, 512)
    while k1_footprint(TQ1) > budget and TQ1 % 16 == 0 and TQ1 > 64:
        TQ1 //= 2
    while N * (HW // TQ1) < 2 and TQ1 % 16 == 0:     # keep both TCs busy (v7x)
        TQ1 //= 2
    n_q1 = HW // TQ1

    # Kernel 2 tiling: K/V VMEM-resident per batch (TK = HW) when it fits,
    # otherwise large K tiles.
    TQ = _pick_tile(HW, 512)
    TK = HW
    if k2_footprint(TQ, TK) > budget:
        TK = _pick_tile(HW, 512)
    while k2_footprint(TQ, TK) > budget and TQ % 16 == 0 and TQ > 64:
        TQ //= 2
    while k2_footprint(TQ, TK) > budget and TK % 16 == 0 and TK > 64:
        TK //= 2
    while N * (HW // TQ) < 2 and TQ % 16 == 0:       # keep both TCs busy (v7x)
        TQ //= 2
    n_q = HW // TQ
    n_k = HW // TK

    # ---------------- kernel 1: norm + fused q/k/v projection --------------
    qkv_shape = jax.ShapeDtypeStruct((N, HW, C), compute_dtype)
    q, k, v = pl.pallas_call(
        _norm_qkv_kernel,
        out_shape=(qkv_shape, qkv_shape, qkv_shape),
        grid_spec=pltpu.PrefetchScalarGridSpec(
            num_scalar_prefetch=0,
            grid=(N, n_q1),
            in_specs=[
                pl.BlockSpec((1, TQ1, C), lambda n, t: (n, t, 0)),   # x tokens
                pl.BlockSpec((1, 1, C), lambda n, t: (n, 0, 0)),     # scale
                pl.BlockSpec((1, 1, C), lambda n, t: (n, 0, 0)),     # shift
                pl.BlockSpec((C, 3 * C), lambda n, t: (0, 0)),       # w_qkv
                pl.BlockSpec((1, 3 * C), lambda n, t: (0, 0)),       # b_qkv
            ],
            out_specs=(
                pl.BlockSpec((1, TQ1, C), lambda n, t: (n, t, 0)),
                pl.BlockSpec((1, TQ1, C), lambda n, t: (n, t, 0)),
                pl.BlockSpec((1, TQ1, C), lambda n, t: (n, t, 0)),
            ),
        ),
        compiler_params=pltpu.CompilerParams(
            dimension_semantics=("parallel", "parallel"),
            vmem_limit_bytes=_vmem_limit(k1_footprint(TQ1))),
    )(x_tok, scale_nc, shift_nc, w_qkv, b_qkv)

    # ---------------- kernel 2: attention + proj_out + residual ------------
    y_tok = pl.pallas_call(
        _attn_proj_kernel,
        out_shape=jax.ShapeDtypeStruct((N, HW, C), x.dtype),
        grid_spec=pltpu.PrefetchScalarGridSpec(
            num_scalar_prefetch=0,
            grid=(N, n_q, n_k),
            in_specs=[
                pl.BlockSpec((1, TQ, C), lambda n, qi, ki: (n, qi, 0)),  # q
                pl.BlockSpec((1, TK, C), lambda n, qi, ki: (n, ki, 0)),  # k
                pl.BlockSpec((1, TK, C), lambda n, qi, ki: (n, ki, 0)),  # v
                pl.BlockSpec((1, TQ, C), lambda n, qi, ki: (n, qi, 0)),  # x res
                pl.BlockSpec((C, C), lambda n, qi, ki: (0, 0)),          # wp
                pl.BlockSpec((1, C), lambda n, qi, ki: (0, 0)),          # bp
            ],
            out_specs=pl.BlockSpec((1, TQ, C), lambda n, qi, ki: (n, qi, 0)),
            scratch_shapes=[
                pltpu.VMEM((TQ, 1), jnp.float32),   # running max
                pltpu.VMEM((TQ, 1), jnp.float32),   # running denom
                pltpu.VMEM((TQ, C), jnp.float32),   # output accumulator
            ],
        ),
        compiler_params=pltpu.CompilerParams(
            dimension_semantics=("parallel", "parallel", "arbitrary"),
            vmem_limit_bytes=_vmem_limit(k2_footprint(TQ, TK))),
    )(q, k, v, x_tok, wp_m, bp_m)

    return jnp.transpose(y_tok.reshape(N, H, W, C), (0, 3, 1, 2))


# ---------------------------------------------------------------------------
# Pure-JAX reference (mirrors the PyTorch AttnBlock.forward, full f32).
# ---------------------------------------------------------------------------
def _ref_attn_block(x, gn_gamma, gn_beta, wq, bq, wk, bk, wv, bv, wp, bp,
                    num_groups=32, eps=1e-6):
    N, C, H, W = x.shape
    G = num_groups
    xg = x.reshape(N, G, C // G, H, W)
    mean = xg.mean(axis=(2, 3, 4), keepdims=True)
    var = xg.var(axis=(2, 3, 4), keepdims=True)
    h = (xg - mean) * lax.rsqrt(var + eps)
    h = h.reshape(N, C, H, W) * gn_gamma[None, :, None, None] \
        + gn_beta[None, :, None, None]

    def conv1x1(t, wgt, b):
        return jnp.einsum('nchw,oc->nohw', t, wgt.reshape(C, C)) \
            + b[None, :, None, None]

    q = conv1x1(h, wq, bq)
    k = conv1x1(h, wk, bk)
    v = conv1x1(h, wv, bv)
    q = q.reshape(N, C, H * W).transpose(0, 2, 1)          # (N, HW, C)
    k = k.reshape(N, C, H * W)                             # (N, C, HW)
    w_ = jnp.einsum('nqc,nck->nqk', q, k) * (float(C) ** -0.5)
    w_ = jax.nn.softmax(w_, axis=2)
    v = v.reshape(N, C, H * W)
    h_ = jnp.einsum('nck,nqk->ncq', v, w_)
    h_ = h_.reshape(N, C, H, W)
    h_ = conv1x1(h_, wp, bp)
    return x + h_


if __name__ == "__main__":
    key = jax.random.PRNGKey(0)
    ks = jax.random.split(key, 11)

    # GroupNorm(32 groups) requires C % 32 == 0.
    N, C, H, W = 2, 32, 16, 16
    x = jax.random.normal(ks[0], (N, C, H, W), jnp.float32)

    gn_gamma = 1.0 + 0.1 * jax.random.normal(ks[1], (C,), jnp.float32)
    gn_beta = 0.1 * jax.random.normal(ks[2], (C,), jnp.float32)

    bound = 1.0 / (C ** 0.5)        # PyTorch Conv2d(1x1) default init bound

    def u(k_, shape):
        return jax.random.uniform(k_, shape, jnp.float32, -bound, bound)

    wq, bq = u(ks[3], (C, C, 1, 1)), u(ks[4], (C,))
    wk, bk = u(ks[5], (C, C, 1, 1)), u(ks[6], (C,))
    wv, bv = u(ks[7], (C, C, 1, 1)), u(ks[8], (C,))
    wp, bp = u(ks[9], (C, C, 1, 1)), u(ks[10], (C,))

    fwd = jax.jit(attn_block_forward)
    y = jax.block_until_ready(
        fwd(x, gn_gamma, gn_beta, wq, bq, wk, bk, wv, bv, wp, bp))

    y_ref = _ref_attn_block(x, gn_gamma, gn_beta, wq, bq, wk, bk, wv, bv,
                            wp, bp)

    assert y.shape == (N, C, H, W), y.shape
    assert y.dtype == x.dtype
    # bf16 MXU operands (q/k/v + weights) vs full-f32 reference -> loosened
    # tolerance; accumulation/softmax state are f32 inside the kernels.
    err = float(jnp.max(jnp.abs(y - y_ref)))
    assert jnp.allclose(y, y_ref, atol=3e-2, rtol=3e-2), err

    print("KERNEL_OK")
</pallas_src>

<mosaic_0001>
module attributes {stable_mosaic.version = 11 : i64} {
  func.func @_norm_qkv_kernel(%arg0: i32, %arg1: i32, %arg2: memref<1x256x32xf32, #tpu.memory_space<vmem>>, %arg3: memref<1x1x32xf32, #tpu.memory_space<vmem>>, %arg4: memref<1x1x32xf32, #tpu.memory_space<vmem>>, %arg5: memref<32x96xbf16, #tpu.memory_space<vmem>>, %arg6: memref<1x96xf32, #tpu.memory_space<vmem>>, %arg7: memref<1x256x32xbf16, #tpu.memory_space<vmem>>, %arg8: memref<1x256x32xbf16, #tpu.memory_space<vmem>>, %arg9: memref<1x256x32xbf16, #tpu.memory_space<vmem>>) attributes {dimension_semantics = [#tpu.dimension_semantics<parallel>, #tpu.dimension_semantics<parallel>], iteration_bounds = array<i64: 2, 1>, scalar_prefetch = 0 : i64, scratch_operands = 0 : i64, tpu.core_type = #tpu.core_type<tc>, window_params = [{transform_indices = @transform_0, window_bounds = array<i64: 1, 256, 32>}, {transform_indices = @transform_1, window_bounds = array<i64: 1, 1, 32>}, {transform_indices = @transform_2, window_bounds = array<i64: 1, 1, 32>}, {pipeline_mode = #tpu.pipeline_mode<synchronous>, transform_indices = @transform_3, window_bounds = array<i64: 32, 96>}, {pipeline_mode = #tpu.pipeline_mode<synchronous>, transform_indices = @transform_4, window_bounds = array<i64: 1, 96>}, {transform_indices = @transform_5, window_bounds = array<i64: 1, 256, 32>}, {transform_indices = @transform_6, window_bounds = array<i64: 1, 256, 32>}, {transform_indices = @transform_7, window_bounds = array<i64: 1, 256, 32>}]} {
    %c0 = arith.constant 0 : index
    %c0_0 = arith.constant 0 : index
    %c0_1 = arith.constant 0 : index
    %0 = vector.load %arg2[%c0, %c0_0, %c0_1] : memref<1x256x32xf32, #tpu.memory_space<vmem>>, vector<1x256x32xf32>
    %1 = vector.shape_cast %0 : vector<1x256x32xf32> to vector<256x32xf32>
    %c0_2 = arith.constant 0 : index
    %c0_3 = arith.constant 0 : index
    %c0_4 = arith.constant 0 : index
    %2 = vector.load %arg3[%c0_2, %c0_3, %c0_4] : memref<1x1x32xf32, #tpu.memory_space<vmem>>, vector<1x1x32xf32>
    %3 = vector.shape_cast %2 : vector<1x1x32xf32> to vector<1x32xf32>
    %4 = vector.broadcast %3 : vector<1x32xf32> to vector<256x32xf32>
    %5 = arith.mulf %1, %4 : vector<256x32xf32>
    %c0_5 = arith.constant 0 : index
    %c0_6 = arith.constant 0 : index
    %c0_7 = arith.constant 0 : index
    %6 = vector.load %arg4[%c0_5, %c0_6, %c0_7] : memref<1x1x32xf32, #tpu.memory_space<vmem>>, vector<1x1x32xf32>
    %7 = vector.shape_cast %6 : vector<1x1x32xf32> to vector<1x32xf32>
    %8 = vector.broadcast %7 : vector<1x32xf32> to vector<256x32xf32>
    %9 = arith.addf %5, %8 : vector<256x32xf32>
    %10 = arith.truncf %9 : vector<256x32xf32> to vector<256x32xbf16>
    %c0_8 = arith.constant 0 : index
    %c0_9 = arith.constant 0 : index
    %11 = vector.load %arg5[%c0_8, %c0_9] : memref<32x96xbf16, #tpu.memory_space<vmem>>, vector<32x96xbf16>
    %cst = arith.constant dense<0.000000e+00> : vector<256x96xf32>
    %12 = tpu.matmul %10, %11, %cst {dimension_numbers = #tpu.dot_dimension_numbers<[1], [0], [0], [1], [0, 0, 1, 1], [], []>} : vector<256x32xbf16>, vector<32x96xbf16>, vector<256x96xf32> -> vector<256x96xf32>
    %c0_10 = arith.constant 0 : index
    %c0_11 = arith.constant 0 : index
    %13 = vector.load %arg6[%c0_10, %c0_11] : memref<1x96xf32, #tpu.memory_space<vmem>>, vector<1x96xf32>
    %14 = vector.broadcast %13 : vector<1x96xf32> to vector<256x96xf32>
    %15 = arith.addf %12, %14 : vector<256x96xf32>
    %16 = vector.extract_strided_slice %15 {offsets = [0, 0], sizes = [256, 32], strides = [1, 1]} : vector<256x96xf32> to vector<256x32xf32>
    %17 = arith.truncf %16 : vector<256x32xf32> to vector<256x32xbf16>
    %c0_12 = arith.constant 0 : index
    %c0_13 = arith.constant 0 : index
    %c0_14 = arith.constant 0 : index
    %18 = vector.load %arg7[%c0_12, %c0_13, %c0_14] : memref<1x256x32xbf16, #tpu.memory_space<vmem>>, vector<1x256x32xbf16>
    %19 = vector.shape_cast %18 : vector<1x256x32xbf16> to vector<256x32xbf16>
    %20 = vector.shape_cast %17 : vector<256x32xbf16> to vector<1x256x32xbf16>
    tpu.vector_store %arg7[%c0_12, %c0_13, %c0_14], %20 {strides = array<i32>} : memref<1x256x32xbf16, #tpu.memory_space<vmem>>, vector<1x256x32xbf16>,
    %21 = vector.extract_strided_slice %15 {offsets = [0, 32], sizes = [256, 32], strides = [1, 1]} : vector<256x96xf32> to vector<256x32xf32>
    %22 = arith.truncf %21 : vector<256x32xf32> to vector<256x32xbf16>
    %c0_15 = arith.constant 0 : index
    %c0_16 = arith.constant 0 : index
    %c0_17 = arith.constant 0 : index
    %23 = vector.load %arg8[%c0_15, %c0_16, %c0_17] : memref<1x256x32xbf16, #tpu.memory_space<vmem>>, vector<1x256x32xbf16>
    %24 = vector.shape_cast %23 : vector<1x256x32xbf16> to vector<256x32xbf16>
    %25 = vector.shape_cast %22 : vector<256x32xbf16> to vector<1x256x32xbf16>
    tpu.vector_store %arg8[%c0_15, %c0_16, %c0_17], %25 {strides = array<i32>} : memref<1x256x32xbf16, #tpu.memory_space<vmem>>, vector<1x256x32xbf16>,
    %26 = vector.extract_strided_slice %15 {offsets = [0, 64], sizes = [256, 32], strides = [1, 1]} : vector<256x96xf32> to vector<256x32xf32>
    %27 = arith.truncf %26 : vector<256x32xf32> to vector<256x32xbf16>
    %c0_18 = arith.constant 0 : index
    %c0_19 = arith.constant 0 : index
    %c0_20 = arith.constant 0 : index
    %28 = vector.load %arg9[%c0_18, %c0_19, %c0_20] : memref<1x256x32xbf16, #tpu.memory_space<vmem>>, vector<1x256x32xbf16>
    %29 = vector.shape_cast %28 : vector<1x256x32xbf16> to vector<256x32xbf16>
    %30 = vector.shape_cast %27 : vector<256x32xbf16> to vector<1x256x32xbf16>
    tpu.vector_store %arg9[%c0_18, %c0_19, %c0_20], %30 {strides = array<i32>} : memref<1x256x32xbf16, #tpu.memory_space<vmem>>, vector<1x256x32xbf16>,
    return
  }
  func.func @transform_0(%arg0: i32, %arg1: i32) -> (i32, i32, i32) {
    %c0_i32 = arith.constant 0 : i32
    %c0_i32_0 = arith.constant 0 : i32
    return %arg0, %arg1, %c0_i32 : i32, i32, i32
  }
  func.func @transform_1(%arg0: i32, %arg1: i32) -> (i32, i32, i32) {
    %c0_i32 = arith.constant 0 : i32
    %c0_i32_0 = arith.constant 0 : i32
    %c0_i32_1 = arith.constant 0 : i32
    return %arg0, %c0_i32, %c0_i32_0 : i32, i32, i32
  }
  func.func @transform_2(%arg0: i32, %arg1: i32) -> (i32, i32, i32) {
    %c0_i32 = arith.constant 0 : i32
    %c0_i32_0 = arith.constant 0 : i32
    %c0_i32_1 = arith.constant 0 : i32
    return %arg0, %c0_i32, %c0_i32_0 : i32, i32, i32
  }
  func.func @transform_3(%arg0: i32, %arg1: i32) -> (i32, i32) {
    %c0_i32 = arith.constant 0 : i32
    %c0_i32_0 = arith.constant 0 : i32
    %c0_i32_1 = arith.constant 0 : i32
    return %c0_i32, %c0_i32_0 : i32, i32
  }
  func.func @transform_4(%arg0: i32, %arg1: i32) -> (i32, i32) {
    %c0_i32 = arith.constant 0 : i32
    %c0_i32_0 = arith.constant 0 : i32
    %c0_i32_1 = arith.constant 0 : i32
    return %c0_i32, %c0_i32_0 : i32, i32
  }
  func.func @transform_5(%arg0: i32, %arg1: i32) -> (i32, i32, i32) {
    %c0_i32 = arith.constant 0 : i32
    %c0_i32_0 = arith.constant 0 : i32
    return %arg0, %arg1, %c0_i32 : i32, i32, i32
  }
  func.func @transform_6(%arg0: i32, %arg1: i32) -> (i32, i32, i32) {
    %c0_i32 = arith.constant 0 : i32
    %c0_i32_0 = arith.constant 0 : i32
    return %arg0, %arg1, %c0_i32 : i32, i32, i32
  }
  func.func @transform_7(%arg0: i32, %arg1: i32) -> (i32, i32, i32) {
    %c0_i32 = arith.constant 0 : i32
    %c0_i32_0 = arith.constant 0 : i32
    return %arg0, %arg1, %c0_i32 : i32, i32, i32
  }
}

module attributes {stable_mosaic.version = 11 : i64} {
  func.func @_attn_proj_kernel(%arg0: i32, %arg1: i32, %arg2: i32, %arg3: memref<1x256x32xbf16, #tpu.memory_space<vmem>>, %arg4: memref<1x256x32xbf16, #tpu.memory_space<vmem>>, %arg5: memref<1x256x32xbf16, #tpu.memory_space<vmem>>, %arg6: memref<1x256x32xf32, #tpu.memory_space<vmem>>, %arg7: memref<32x32xbf16, #tpu.memory_space<vmem>>, %arg8: memref<1x32xf32, #tpu.memory_space<vmem>>, %arg9: memref<1x256x32xf32, #tpu.memory_space<vmem>>, %arg10: memref<256x1xf32, #tpu.memory_space<vmem>>, %arg11: memref<256x1xf32, #tpu.memory_space<vmem>>, %arg12: memref<256x32xf32, #tpu.memory_space<vmem>>) attributes {dimension_semantics = [#tpu.dimension_semantics<parallel>, #tpu.dimension_semantics<parallel>, #tpu.dimension_semantics<arbitrary>], iteration_bounds = array<i64: 2, 1, 1>, scalar_prefetch = 0 : i64, scratch_operands = 3 : i64, tpu.core_type = #tpu.core_type<tc>, window_params = [{transform_indices = @transform_0, window_bounds = array<i64: 1, 256, 32>}, {transform_indices = @transform_1, window_bounds = array<i64: 1, 256, 32>}, {transform_indices = @transform_2, window_bounds = array<i64: 1, 256, 32>}, {transform_indices = @transform_3, window_bounds = array<i64: 1, 256, 32>}, {pipeline_mode = #tpu.pipeline_mode<synchronous>, transform_indices = @transform_4, window_bounds = array<i64: 32, 32>}, {pipeline_mode = #tpu.pipeline_mode<synchronous>, transform_indices = @transform_5, window_bounds = array<i64: 1, 32>}, {transform_indices = @transform_6, window_bounds = array<i64: 1, 256, 32>}]} {
    %c0_i32 = arith.constant 0 : i32
    %0 = arith.cmpi eq, %arg2, %c0_i32 : i32
    %1 = arith.extui %0 : i1 to i32
    %c0_i32_0 = arith.constant 0 : i32
    %2 = arith.cmpi ne, %1, %c0_i32_0 : i32
    scf.if %2 {
      %cst_26 = arith.constant 0xFF800000 : f32
      %36 = vector.broadcast %cst_26 : f32 to vector<256x1xf32>
      %c0_27 = arith.constant 0 : index
      %c0_28 = arith.constant 0 : index
      %37 = vector.load %arg10[%c0_27, %c0_28] : memref<256x1xf32, #tpu.memory_space<vmem>>, vector<256x1xf32>
      tpu.vector_store %arg10[%c0_27, %c0_28], %36 {strides = array<i32>} : memref<256x1xf32, #tpu.memory_space<vmem>>, vector<256x1xf32>,
      %cst_29 = arith.constant 0.000000e+00 : f32
      %38 = vector.broadcast %cst_29 : f32 to vector<256x1xf32>
      %c0_30 = arith.constant 0 : index
      %c0_31 = arith.constant 0 : index
      %39 = vector.load %arg11[%c0_30, %c0_31] : memref<256x1xf32, #tpu.memory_space<vmem>>, vector<256x1xf32>
      tpu.vector_store %arg11[%c0_30, %c0_31], %38 {strides = array<i32>} : memref<256x1xf32, #tpu.memory_space<vmem>>, vector<256x1xf32>,
      %cst_32 = arith.constant 0.000000e+00 : f32
      %40 = vector.broadcast %cst_32 : f32 to vector<256x32xf32>
      %c0_33 = arith.constant 0 : index
      %c0_34 = arith.constant 0 : index
      %41 = vector.load %arg12[%c0_33, %c0_34] : memref<256x32xf32, #tpu.memory_space<vmem>>, vector<256x32xf32>
      tpu.vector_store %arg12[%c0_33, %c0_34], %40 {strides = array<i32>} : memref<256x32xf32, #tpu.memory_space<vmem>>, vector<256x32xf32>,
    } else {
    }
    %c0 = arith.constant 0 : index
    %c0_1 = arith.constant 0 : index
    %c0_2 = arith.constant 0 : index
    %3 = vector.load %arg3[%c0, %c0_1, %c0_2] : memref<1x256x32xbf16, #tpu.memory_space<vmem>>, vector<1x256x32xbf16>
    %4 = vector.shape_cast %3 : vector<1x256x32xbf16> to vector<256x32xbf16>
    %c0_3 = arith.constant 0 : index
    %c0_4 = arith.constant 0 : index
    %c0_5 = arith.constant 0 : index
    %5 = vector.load %arg4[%c0_3, %c0_4, %c0_5] : memref<1x256x32xbf16, #tpu.memory_space<vmem>>, vector<1x256x32xbf16>
    %6 = vector.shape_cast %5 : vector<1x256x32xbf16> to vector<256x32xbf16>
    %cst = arith.constant dense<0.000000e+00> : vector<256x256xf32>
    %7 = tpu.matmul %4, %6, %cst {dimension_numbers = #tpu.dot_dimension_numbers<[1], [1], [0], [0], [0, 0, 1, 0], [], []>} : vector<256x32xbf16>, vector<256x32xbf16>, vector<256x256xf32> -> vector<256x256xf32>
    %c0_6 = arith.constant 0 : index
    %c0_7 = arith.constant 0 : index
    %8 = vector.load %arg10[%c0_6, %c0_7] : memref<256x1xf32, #tpu.memory_space<vmem>>, vector<256x1xf32>
    %cst_8 = arith.constant dense<0xFF800000> : vector<256xf32>
    %9 = vector.multi_reduction <maximumf>, %7, %cst_8 [1] : vector<256x256xf32> to vector<256xf32>
    %10 = vector.shape_cast %9 : vector<256xf32> to vector<256x1xf32>
    %11 = arith.maximumf %8, %10 : vector<256x1xf32>
    %12 = arith.subf %8, %11 : vector<256x1xf32>
    %13 = math.exp %12 : vector<256x1xf32>
    %14 = vector.broadcast %11 : vector<256x1xf32> to vector<256x256xf32>
    %15 = arith.subf %7, %14 : vector<256x256xf32>
    %16 = math.exp %15 : vector<256x256xf32>
    %c0_9 = arith.constant 0 : index
    %c0_10 = arith.constant 0 : index
    %17 = vector.load %arg11[%c0_9, %c0_10] : memref<256x1xf32, #tpu.memory_space<vmem>>, vector<256x1xf32>
    %18 = arith.mulf %13, %17 : vector<256x1xf32>
    %cst_11 = arith.constant dense<0.000000e+00> : vector<256xf32>
    %19 = vector.multi_reduction <add>, %16, %cst_11 [1] : vector<256x256xf32> to vector<256xf32>
    %20 = vector.shape_cast %19 : vector<256xf32> to vector<256x1xf32>
    %21 = arith.addf %18, %20 : vector<256x1xf32>
    %c0_12 = arith.constant 0 : index
    %c0_13 = arith.constant 0 : index
    %22 = vector.load %arg11[%c0_12, %c0_13] : memref<256x1xf32, #tpu.memory_space<vmem>>, vector<256x1xf32>
    tpu.vector_store %arg11[%c0_12, %c0_13], %21 {strides = array<i32>} : memref<256x1xf32, #tpu.memory_space<vmem>>, vector<256x1xf32>,
    %c0_14 = arith.constant 0 : index
    %c0_15 = arith.constant 0 : index
    %23 = vector.load %arg12[%c0_14, %c0_15] : memref<256x32xf32, #tpu.memory_space<vmem>>, vector<256x32xf32>
    %24 = vector.broadcast %13 : vector<256x1xf32> to vector<256x32xf32>
    %25 = arith.mulf %24, %23 : vector<256x32xf32>
    %26 = arith.truncf %16 : vector<256x256xf32> to vector<256x256xbf16>
    %c0_16 = arith.constant 0 : index
    %c0_17 = arith.constant 0 : index
    %c0_18 = arith.constant 0 : index
    %27 = vector.load %arg5[%c0_16, %c0_17, %c0_18] : memref<1x256x32xbf16, #tpu.memory_space<vmem>>, vector<1x256x32xbf16>
    %28 = vector.shape_cast %27 : vector<1x256x32xbf16> to vector<256x32xbf16>
    %cst_19 = arith.constant dense<0.000000e+00> : vector<256x32xf32>
    %29 = tpu.matmul %26, %28, %cst_19 {dimension_numbers = #tpu.dot_dimension_numbers<[1], [0], [0], [1], [0, 0, 1, 1], [], []>} : vector<256x256xbf16>, vector<256x32xbf16>, vector<256x32xf32> -> vector<256x32xf32>
    %30 = arith.addf %25, %29 : vector<256x32xf32>
    %c0_20 = arith.constant 0 : index
    %c0_21 = arith.constant 0 : index
    %31 = vector.load %arg12[%c0_20, %c0_21] : memref<256x32xf32, #tpu.memory_space<vmem>>, vector<256x32xf32>
    tpu.vector_store %arg12[%c0_20, %c0_21], %30 {strides = array<i32>} : memref<256x32xf32, #tpu.memory_space<vmem>>, vector<256x32xf32>,
    %c0_22 = arith.constant 0 : index
    %c0_23 = arith.constant 0 : index
    %32 = vector.load %arg10[%c0_22, %c0_23] : memref<256x1xf32, #tpu.memory_space<vmem>>, vector<256x1xf32>
    tpu.vector_store %arg10[%c0_22, %c0_23], %11 {strides = array<i32>} : memref<256x1xf32, #tpu.memory_space<vmem>>, vector<256x1xf32>,
    %c0_i32_24 = arith.constant 0 : i32
    %33 = arith.cmpi eq, %arg2, %c0_i32_24 : i32
    %34 = arith.extui %33 : i1 to i32
    %c0_i32_25 = arith.constant 0 : i32
    %35 = arith.cmpi ne, %34, %c0_i32_25 : i32
    scf.if %35 {
      %c0_26 = arith.constant 0 : index
      %c0_27 = arith.constant 0 : index
      %36 = vector.load %arg12[%c0_26, %c0_27] : memref<256x32xf32, #tpu.memory_space<vmem>>, vector<256x32xf32>
      %c0_28 = arith.constant 0 : index
      %c0_29 = arith.constant 0 : index
      %37 = vector.load %arg11[%c0_28, %c0_29] : memref<256x1xf32, #tpu.memory_space<vmem>>, vector<256x1xf32>
      %38 = tpu.reciprocal %37 {approx = true} : vector<256x1xf32> -> vector<256x1xf32>
      %39 = vector.broadcast %38 : vector<256x1xf32> to vector<256x32xf32>
      %40 = arith.mulf %36, %39 : vector<256x32xf32>
      %41 = arith.truncf %40 : vector<256x32xf32> to vector<256x32xbf16>
      %c0_30 = arith.constant 0 : index
      %c0_31 = arith.constant 0 : index
      %42 = vector.load %arg7[%c0_30, %c0_31] : memref<32x32xbf16, #tpu.memory_space<vmem>>, vector<32x32xbf16>
      %cst_32 = arith.constant dense<0.000000e+00> : vector<256x32xf32>
      %43 = tpu.matmul %41, %42, %cst_32 {dimension_numbers = #tpu.dot_dimension_numbers<[1], [0], [0], [1], [0, 0, 1, 1], [], []>} : vector<256x32xbf16>, vector<32x32xbf16>, vector<256x32xf32> -> vector<256x32xf32>
      %c0_33 = arith.constant 0 : index
      %c0_34 = arith.constant 0 : index
      %44 = vector.load %arg8[%c0_33, %c0_34] : memref<1x32xf32, #tpu.memory_space<vmem>>, vector<1x32xf32>
      %45 = vector.broadcast %44 : vector<1x32xf32> to vector<256x32xf32>
      %46 = arith.addf %43, %45 : vector<256x32xf32>
      %c0_35 = arith.constant 0 : index
      %c0_36 = arith.constant 0 : index
      %c0_37 = arith.constant 0 : index
      %47 = vector.load %arg6[%c0_35, %c0_36, %c0_37] : memref<1x256x32xf32, #tpu.memory_space<vmem>>, vector<1x256x32xf32>
      %48 = vector.shape_cast %47 : vector<1x256x32xf32> to vector<256x32xf32>
      %49 = arith.addf %46, %48 : vector<256x32xf32>
      %c0_38 = arith.constant 0 : index
      %c0_39 = arith.constant 0 : index
      %c0_40 = arith.constant 0 : index
      %50 = vector.load %arg9[%c0_38, %c0_39, %c0_40] : memref<1x256x32xf32, #tpu.memory_space<vmem>>, vector<1x256x32xf32>
      %51 = vector.shape_cast %50 : vector<1x256x32xf32> to vector<256x32xf32>
      %52 = vector.shape_cast %49 : vector<256x32xf32> to vector<1x256x32xf32>
      tpu.vector_store %arg9[%c0_38, %c0_39, %c0_40], %52 {strides = array<i32>} : memref<1x256x32xf32, #tpu.memory_space<vmem>>, vector<1x256x32xf32>,
    } else {
    }
    return
  }
  func.func @transform_0(%arg0: i32, %arg1: i32, %arg2: i32) -> (i32, i32, i32) {
    %c0_i32 = arith.constant 0 : i32
    %c0_i32_0 = arith.constant 0 : i32
    return %arg0, %arg1, %c0_i32 : i32, i32, i32
  }
  func.func @transform_1(%arg0: i32, %arg1: i32, %arg2: i32) -> (i32, i32, i32) {
    %c0_i32 = arith.constant 0 : i32
    %c0_i32_0 = arith.constant 0 : i32
    return %arg0, %arg2, %c0_i32 : i32, i32, i32
  }
  func.func @transform_2(%arg0: i32, %arg1: i32, %arg2: i32) -> (i32, i32, i32) {
    %c0_i32 = arith.constant 0 : i32
    %c0_i32_0 = arith.constant 0 : i32
    return %arg0, %arg2, %c0_i32 : i32, i32, i32
  }
  func.func @transform_3(%arg0: i32, %arg1: i32, %arg2: i32) -> (i32, i32, i32) {
    %c0_i32 = arith.constant 0 : i32
    %c0_i32_0 = arith.constant 0 : i32
    return %arg0, %arg1, %c0_i32 : i32, i32, i32
  }
  func.func @transform_4(%arg0: i32, %arg1: i32, %arg2: i32) -> (i32, i32) {
    %c0_i32 = arith.constant 0 : i32
    %c0_i32_0 = arith.constant 0 : i32
    %c0_i32_1 = arith.constant 0 : i32
    return %c0_i32, %c0_i32_0 : i32, i32
  }
  func.func @transform_5(%arg0: i32, %arg1: i32, %arg2: i32) -> (i32, i32) {
    %c0_i32 = arith.constant 0 : i32
    %c0_i32_0 = arith.constant 0 : i32
    %c0_i32_1 = arith.constant 0 : i32
    return %c0_i32, %c0_i32_0 : i32, i32
  }
  func.func @transform_6(%arg0: i32, %arg1: i32, %arg2: i32) -> (i32, i32, i32) {
    %c0_i32 = arith.constant 0 : i32
    %c0_i32_0 = arith.constant 0 : i32
    return %arg0, %arg1, %c0_i32 : i32, i32, i32
  }
}

</mosaic_0001>

<llo_original>
// kernel: attn_block_forward.2
$region0: #{attn_block_forward.2}
  #allocation0 [shape = 'u32[]', space=smem, size = 0x4, offset = 0x4, fixed_abs, tag = 'smem constant byte address 0x4 - core index']
  #allocation1 [shape = 'u32[144,128]{1,0:T(1,128)}', space=vmem, size = 0x12000, scoped, tag = 'internal scratch']
  %s0 = inlined_call_operand.vmem [shape: f32[2,256,32], index: 0, kind: input, shape index: {}]
  %s1 = inlined_call_operand.vmem [shape: f32[2,1,32], index: 1, kind: input, shape index: {}]
  %s2 = inlined_call_operand.vmem [shape: f32[2,1,32], index: 2, kind: input, shape index: {}]
  %s3 = inlined_call_operand.vmem [shape: bf16[32,96], index: 3, kind: input, shape index: {}]
  %s4 = inlined_call_operand.vmem [shape: f32[1,96], index: 4, kind: input, shape index: {}]
  %s5 = inlined_call_operand.vmem [shape: bf16[2,256,32], index: 5, kind: output, shape index: {0}]
  %s6 = inlined_call_operand.vmem [shape: bf16[2,256,32], index: 6, kind: output, shape index: {1}]
  %s7 = inlined_call_operand.vmem [shape: bf16[2,256,32], index: 7, kind: output, shape index: {2}]
  %8 = xla_tuple %s5, %s6, %s7
  %s9 = sld [smem:[#allocation0]]
  $region69: #{attn_block_forward.2} parent=0
    _
  %s11 = ssub.s32 1, %s9
  %s12 = scalar_select 0, %s11, %s9
  loop: start=0, step=1, limit=4
  $region2: #{attn_block_forward.2} parent=0 // loop_pre_header
    _
  $region3: #{attn_block_forward.2} parent=0 // loop_header
    %s14 = sphi 0, %s18
    %p15 = scmp.ge.s32.totalorder %s14, 4
    %s21 = sphi 0, %s33
    %s22 = sphi 0, %s29
    %s23 = sphi 0, %s21
    %s24 = sphi 0, %s22
    %s25 = sphi 0, %s23
    %s26 = sphi 0, %s24
    %s38 = sphi 0, %s40
    %s41 = sphi 0, %s38
    %s42 = sphi 0, %s41
    %s58 = sphi 0, %s42
    %s64 = sphi 0, %s66
    %s67 = sphi 0, %s64
    %s68 = sphi 0, %s67
    %s84 = sphi 0, %s68
    %s90 = sphi 0, %s92
    %s93 = sphi 0, %s90
    %s94 = sphi 0, %s93
    %s110 = sphi 0, %s94
    %s114 = sphi 0, %s114
    %s116 = sphi 0, %s114
    %s117 = sphi 0, %s116
    %s131 = sphi 0, %s117
    %s135 = sphi 0, %s135
    %s137 = sphi 0, %s135
    %s138 = sphi 0, %s137
    %s152 = sphi 0, %s138
    %s160 = sphi 0, %s162
    %s163 = sphi 0, %s160
    %s164 = sphi 0, %s163
    %s180 = sphi 0, %s164
    %s188 = sphi 0, %s190
    %s191 = sphi 0, %s188
    %s192 = sphi 0, %s191
    %s208 = sphi 0, %s192
    %s216 = sphi 0, %s218
    %s219 = sphi 0, %s216
    %s220 = sphi 0, %s219
    %s236 = sphi 0, %s220
  $region4: #{attn_block_forward.2} parent=0 // loop_header_branch
    %17 = sbr.rel (%p15) target = $region8
  $region5: #{attn_block_forward.2} parent=0 // loop_body
    %s19 = ssub.s32 %s14, 1
    %s20 = ssub.s32 %s14, 2
    %s27 = sadd.s32 1, %s22
    %p28 = scmp.ge.s32.totalorder %s27, 1
    %s29 = scalar_select %p28, 0, %s27
    %s30 = sadd.s32 1, %s21
    %s31 = scalar_select %p28, %s30, %s21
    %p32 = scmp.ge.s32.totalorder %s31, 2
    %s33 = scalar_select %p32, 0, %s31
    %s34 = ssub.s32 %s21, %s33
    %s35 = ssub.s32 %s22, %s29
    %s36 = sor.u32 %s34, %s35
    %p37 = scmp.eq.s32.totalorder %s36, 0
    %s39 = sadd.s32 %s38, 1
    %s40 = scalar_select %p37, %s38, %s39
    %p43 = pneg %p37
    %p44 = scmp.eq.s32.totalorder %s14, 1
    %p45 = por %p43, %p44
    %p46 = scmp.ne.s32.totalorder %s38, %s41
    %p47 = scmp.eq.s32.totalorder %s14, 0
    %p48 = por %p46, %p47
    %p49 = scmp.ne.s32.totalorder %s38, %s41
    %p50 = scmp.eq.s32.totalorder %s19, 1
    %p51 = por %p49, %p50
    %p52 = scmp.ne.s32.totalorder %s41, %s42
    %p53 = scmp.eq.s32.totalorder %s19, 0
    %p54 = por %p52, %p53
    %p55 = scmp.ne.s32.totalorder %s41, %s42
    %p56 = scmp.eq.s32.totalorder %s20, 1
    %p57 = por %p55, %p56
    %p59 = scmp.ne.s32.totalorder %s42, %s58
    %p60 = scmp.eq.s32.totalorder %s20, 0
    %p61 = por %p59, %p60
    %s62 = ssub.s32 %s21, %s33
    %p63 = scmp.eq.s32.totalorder %s62, 0
    %s65 = sadd.s32 %s64, 1
    %s66 = scalar_select %p63, %s64, %s65
    %p69 = pneg %p63
    %p70 = scmp.eq.s32.totalorder %s14, 1
    %p71 = por %p69, %p70
    %p72 = scmp.ne.s32.totalorder %s64, %s67
    %p73 = scmp.eq.s32.totalorder %s14, 0
    %p74 = por %p72, %p73
    %p75 = scmp.ne.s32.totalorder %s64, %s67
    %p76 = scmp.eq.s32.totalorder %s19, 1
    %p77 = por %p75, %p76
    %p78 = scmp.ne.s32.totalorder %s67, %s68
    %p79 = scmp.eq.s32.totalorder %s19, 0
    %p80 = por %p78, %p79
    %p81 = scmp.ne.s32.totalorder %s67, %s68
    %p82 = scmp.eq.s32.totalorder %s20, 1
    %p83 = por %p81, %p82
    %p85 = scmp.ne.s32.totalorder %s68, %s84
    %p86 = scmp.eq.s32.totalorder %s20, 0
    %p87 = por %p85, %p86
    %s88 = ssub.s32 %s21, %s33
    %p89 = scmp.eq.s32.totalorder %s88, 0
    %s91 = sadd.s32 %s90, 1
    %s92 = scalar_select %p89, %s90, %s91
    %p95 = pneg %p89
    %p96 = scmp.eq.s32.totalorder %s14, 1
    %p97 = por %p95, %p96
    %p98 = scmp.ne.s32.totalorder %s90, %s93
    %p99 = scmp.eq.s32.totalorder %s14, 0
    %p100 = por %p98, %p99
    %p101 = scmp.ne.s32.totalorder %s90, %s93
    %p102 = scmp.eq.s32.totalorder %s19, 1
    %p103 = por %p101, %p102
    %p104 = scmp.ne.s32.totalorder %s93, %s94
    %p105 = scmp.eq.s32.totalorder %s19, 0
    %p106 = por %p104, %p105
    %p107 = scmp.ne.s32.totalorder %s93, %s94
    %p108 = scmp.eq.s32.totalorder %s20, 1
    %p109 = por %p107, %p108
    %p111 = scmp.ne.s32.totalorder %s94, %s110
    %p112 = scmp.eq.s32.totalorder %s20, 0
    %p113 = por %p111, %p112
    %s115 = sadd.s32 %s114, 1
    %p118 = scmp.eq.s32.totalorder %s14, 1
    %p119 = scmp.ne.s32.totalorder %s114, %s116
    %p120 = scmp.eq.s32.totalorder %s14, 0
    %p121 = por %p119, %p120
    %p122 = scmp.ne.s32.totalorder %s114, %s116
    %p123 = scmp.eq.s32.totalorder %s19, 1
    %p124 = por %p122, %p123
    %p125 = scmp.ne.s32.totalorder %s116, %s117
    %p126 = scmp.eq.s32.totalorder %s19, 0
    %p127 = por %p125, %p126
    %p128 = scmp.ne.s32.totalorder %s116, %s117
    %p129 = scmp.eq.s32.totalorder %s20, 1
    %p130 = por %p128, %p129
    %p132 = scmp.ne.s32.totalorder %s117, %s131
    %p133 = scmp.eq.s32.totalorder %s20, 0
    %p134 = por %p132, %p133
    %s136 = sadd.s32 %s135, 1
    %p139 = scmp.eq.s32.totalorder %s14, 1
    %p140 = scmp.ne.s32.totalorder %s135, %s137
    %p141 = scmp.eq.s32.totalorder %s14, 0
    %p142 = por %p140, %p141
    %p143 = scmp.ne.s32.totalorder %s135, %s137
    %p144 = scmp.eq.s32.totalorder %s19, 1
    %p145 = por %p143, %p144
    %p146 = scmp.ne.s32.totalorder %s137, %s138
    %p147 = scmp.eq.s32.totalorder %s19, 0
    %p148 = por %p146, %p147
    %p149 = scmp.ne.s32.totalorder %s137, %s138
    %p150 = scmp.eq.s32.totalorder %s20, 1
    %p151 = por %p149, %p150
    %p153 = scmp.ne.s32.totalorder %s138, %s152
    %p154 = scmp.eq.s32.totalorder %s20, 0
    %p155 = por %p153, %p154
    %s156 = ssub.s32 %s21, %s33
    %s157 = ssub.s32 %s22, %s29
    %s158 = sor.u32 %s156, %s157
    %p159 = scmp.eq.s32.totalorder %s158, 0
    %s161 = sadd.s32 %s160, 1
    %s162 = scalar_select %p159, %s160, %s161
    %p165 = pneg %p159
    %p166 = scmp.eq.s32.totalorder %s14, 1
    %p167 = por %p165, %p166
    %p168 = scmp.ne.s32.totalorder %s160, %s163
    %p169 = scmp.eq.s32.totalorder %s14, 0
    %p170 = por %p168, %p169
    %p171 = scmp.ne.s32.totalorder %s160, %s163
    %p172 = scmp.eq.s32.totalorder %s19, 1
    %p173 = por %p171, %p172
    %p174 = scmp.ne.s32.totalorder %s163, %s164
    %p175 = scmp.eq.s32.totalorder %s19, 0
    %p176 = por %p174, %p175
    %p177 = scmp.ne.s32.totalorder %s163, %s164
    %p178 = scmp.eq.s32.totalorder %s20, 1
    %p179 = por %p177, %p178
    %p181 = scmp.ne.s32.totalorder %s164, %s180
    %p182 = scmp.eq.s32.totalorder %s20, 0
    %p183 = por %p181, %p182
    %s184 = ssub.s32 %s21, %s33
    %s185 = ssub.s32 %s22, %s29
    %s186 = sor.u32 %s184, %s185
    %p187 = scmp.eq.s32.totalorder %s186, 0
    %s189 = sadd.s32 %s188, 1
    %s190 = scalar_select %p187, %s188, %s189
    %p193 = pneg %p187
    %p194 = scmp.eq.s32.totalorder %s14, 1
    %p195 = por %p193, %p194
    %p196 = scmp.ne.s32.totalorder %s188, %s191
    %p197 = scmp.eq.s32.totalorder %s14, 0
    %p198 = por %p196, %p197
    %p199 = scmp.ne.s32.totalorder %s188, %s191
    %p200 = scmp.eq.s32.totalorder %s19, 1
    %p201 = por %p199, %p200
    %p202 = scmp.ne.s32.totalorder %s191, %s192
    %p203 = scmp.eq.s32.totalorder %s19, 0
    %p204 = por %p202, %p203
    %p205 = scmp.ne.s32.totalorder %s191, %s192
    %p206 = scmp.eq.s32.totalorder %s20, 1
    %p207 = por %p205, %p206
    %p209 = scmp.ne.s32.totalorder %s192, %s208
    %p210 = scmp.eq.s32.totalorder %s20, 0
    %p211 = por %p209, %p210
    %s212 = ssub.s32 %s21, %s33
    %s213 = ssub.s32 %s22, %s29
    %s214 = sor.u32 %s212, %s213
    %p215 = scmp.eq.s32.totalorder %s214, 0
    %s217 = sadd.s32 %s216, 1
    %s218 = scalar_select %p215, %s216, %s217
    %p221 = pneg %p215
    %p222 = scmp.eq.s32.totalorder %s14, 1
    %p223 = por %p221, %p222
    %p224 = scmp.ne.s32.totalorder %s216, %s219
    %p225 = scmp.eq.s32.totalorder %s14, 0
    %p226 = por %p224, %p225
    %p227 = scmp.ne.s32.totalorder %s216, %s219
    %p228 = scmp.eq.s32.totalorder %s19, 1
    %p229 = por %p227, %p228
    %p230 = scmp.ne.s32.totalorder %s219, %s220
    %p231 = scmp.eq.s32.totalorder %s19, 0
    %p232 = por %p230, %p231
    %p233 = scmp.ne.s32.totalorder %s219, %s220
    %p234 = scmp.eq.s32.totalorder %s20, 1
    %p235 = por %p233, %p234
    %p237 = scmp.ne.s32.totalorder %s220, %s236
    %p238 = scmp.eq.s32.totalorder %s20, 0
    %p239 = por %p237, %p238
    %p240 = scmp.le.s32.totalorder 1, %s14
    %p241 = scmp.lt.s32.totalorder %s14, 3
    %p242 = pnand %p240, %p241
    %p243 = pneg %p242
    // Predicated region
    $region9: #{attn_block_forward.2} parent=5 // pred_check
      _
    $region10: #{attn_block_forward.2} parent=5 // pred_check_branch
      %245 = sbr.rel (%p242) target = $region12
    $region11: #{attn_block_forward.2} parent=5 // pred_region
      %s246 = ssub.s32 %s14, 1
      // Predicated region
      $region13: #{attn_block_forward.2} parent=11 // pred_check
        %p247 = pneg %p127
      $region14: #{attn_block_forward.2} parent=11 // pred_check_branch
        %249 = sbr.rel (%p247) target = $region16
      $region15: #{attn_block_forward.2} parent=11 // pred_region
        _
      $region16: #{attn_block_forward.2} parent=11 // pred_fallthru
        _
      // Predicated region
      $region17: #{attn_block_forward.2} parent=11 // pred_check
        %p250 = pneg %p148
      $region18: #{attn_block_forward.2} parent=11 // pred_check_branch
        %252 = sbr.rel (%p250) target = $region20
      $region19: #{attn_block_forward.2} parent=11 // pred_region
        _
      $region20: #{attn_block_forward.2} parent=11 // pred_fallthru
        _
    $region12: #{attn_block_forward.2} parent=5 // pred_fallthru
      _
    %p253 = scmp.lt.s32.totalorder %s14, 2
    // Predicated region
    $region21: #{attn_block_forward.2} parent=5 // pred_check
      %p254 = pneg %p253
    $region22: #{attn_block_forward.2} parent=5 // pred_check_branch
      %256 = sbr.rel (%p254) target = $region24
    $region23: #{attn_block_forward.2} parent=5 // pred_region
      // Predicated region
      $region25: #{attn_block_forward.2} parent=23 // pred_check
        %p257 = pneg %p48
      $region26: #{attn_block_forward.2} parent=23 // pred_check_branch
        %259 = sbr.rel (%p257) target = $region28
      $region27: #{attn_block_forward.2} parent=23 // pred_region
        %s260 = smul.u32 32, %s22
        %p261 = scmp.lt.s32.totalorder %s21, 1
        %s262 = scalar_select %p261, %s21, 1
        %p263 = scmp.lt.s32.totalorder %s260, 31
        %s264 = scalar_select %p263, %s260, 31
        %s265 = smul.addr %s262, 32
        %s266 = sadd.s32 %s264, %s265
        %s267 = smul.addr %s266, 8
        %s268 = scalar_lea.vmem %s0, %s267
        %s269 = smul.u32 32, %s22
      $region28: #{attn_block_forward.2} parent=23 // pred_fallthru
        _
      // Predicated region
      $region29: #{attn_block_forward.2} parent=23 // pred_check
        %p270 = pneg %p74
      $region30: #{attn_block_forward.2} parent=23 // pred_check_branch
        %272 = sbr.rel (%p270) target = $region32
      $region31: #{attn_block_forward.2} parent=23 // pred_region
        %p273 = scmp.lt.s32.totalorder %s21, 1
        %s274 = scalar_select %p273, %s21, 1
        %s275 = scalar_lea.vmem %s1, %s274
      $region32: #{attn_block_forward.2} parent=23 // pred_fallthru
        _
      // Predicated region
      $region33: #{attn_block_forward.2} parent=23 // pred_check
        %p276 = pneg %p100
      $region34: #{attn_block_forward.2} parent=23 // pred_check_branch
        %278 = sbr.rel (%p276) target = $region36
      $region35: #{attn_block_forward.2} parent=23 // pred_region
        %p279 = scmp.lt.s32.totalorder %s21, 1
        %s280 = scalar_select %p279, %s21, 1
        %s281 = scalar_lea.vmem %s2, %s280
      $region36: #{attn_block_forward.2} parent=23 // pred_fallthru
        _
    $region24: #{attn_block_forward.2} parent=5 // pred_fallthru
      _
    %p282 = scmp.le.s32.totalorder 1, %s14
    %p283 = scmp.lt.s32.totalorder %s14, 3
    %p284 = pnand %p282, %p283
    %p285 = pneg %p284
    // Predicated region
    $region37: #{attn_block_forward.2} parent=5 // pred_check
      _
    $region38: #{attn_block_forward.2} parent=5 // pred_check_branch
      %287 = sbr.rel (%p284) target = $region40
    $region39: #{attn_block_forward.2} parent=5 // pred_region
      %s288 = ssub.s32 %s14, 1
      %s289 = smul.u32 32, %s24
      %p290 = scmp.lt.s32.totalorder %s23, 1
      %s291 = scalar_select %p290, %s23, 1
      %p292 = scmp.lt.s32.totalorder %s289, 31
      %s293 = scalar_select %p292, %s289, 31
      %s294 = smul.addr %s291, 32
      %s295 = sadd.s32 %s293, %s294
      %s296 = smul.addr %s295, 8
      %s297 = scalar_lea.vmem %s0, %s296
      %p298 = pneg %p54
      %p299 = pneg %p51
      %p300 = scmp.lt.s32.totalorder %s23, 1
      %s301 = scalar_select %p300, %s23, 1
      %s302 = scalar_lea.vmem %s1, %s301
      %p303 = pneg %p80
      %p304 = pneg %p77
      %p305 = scmp.lt.s32.totalorder %s23, 1
      %s306 = scalar_select %p305, %s23, 1
      %s307 = scalar_lea.vmem %s2, %s306
      %p308 = pneg %p106
      %p309 = pneg %p103
      %p310 = pneg %p127
      %p311 = pneg %p124
      %p312 = pneg %p148
      %p313 = pneg %p145
      %p314 = pneg %p176
      %p315 = pneg %p173
      %s316 = smul.u32 32, %s24
      %p317 = scmp.lt.s32.totalorder %s23, 1
      %s318 = scalar_select %p317, %s23, 1
      %p319 = scmp.lt.s32.totalorder %s316, 31
      %s320 = scalar_select %p319, %s316, 31
      %s321 = smul.addr %s318, 32
      %s322 = sadd.s32 %s320, %s321
      %s323 = smul.addr %s322, 4
      %s324 = scalar_lea.vmem %s5, %s323
      %p325 = pneg %p204
      %p326 = pneg %p201
      %s327 = smul.u32 32, %s24
      %p328 = scmp.lt.s32.totalorder %s23, 1
      %s329 = scalar_select %p328, %s23, 1
      %p330 = scmp.lt.s32.totalorder %s327, 31
      %s331 = scalar_select %p330, %s327, 31
      %s332 = smul.addr %s329, 32
      %s333 = sadd.s32 %s331, %s332
      %s334 = smul.addr %s333, 4
      %s335 = scalar_lea.vmem %s6, %s334
      %p336 = pneg %p232
      %p337 = pneg %p229
      %s338 = smul.u32 32, %s24
      %p339 = scmp.lt.s32.totalorder %s23, 1
      %s340 = scalar_select %p339, %s23, 1
      %p341 = scmp.lt.s32.totalorder %s338, 31
      %s342 = scalar_select %p341, %s338, 31
      %s343 = smul.addr %s340, 32
      %s344 = sadd.s32 %s342, %s343
      %s345 = smul.addr %s344, 4
      %s346 = scalar_lea.vmem %s7, %s345
      %s347 = smul.u32 32, %s24
      %p348 = scmp.lt.s32.totalorder %s23, 1
      %s349 = scalar_select %p348, %s23, 1
      %p350 = scmp.lt.s32.totalorder %s347, 31
      %s351 = scalar_select %p350, %s347, 31
      %s352 = smul.addr %s349, 32
      %s353 = sadd.s32 %s351, %s352
      %s354 = smul.addr %s353, 8
      %s355 = scalar_lea.vmem %s0, %s354
      %s356 = smul.u32 32, %s24
      %p357 = scmp.lt.s32.totalorder %s23, 1
      %s358 = scalar_select %p357, %s23, 1
      %s359 = scalar_lea.vmem %s1, %s358
      %p360 = scmp.lt.s32.totalorder %s23, 1
      %s361 = scalar_select %p360, %s23, 1
      %s362 = scalar_lea.vmem %s2, %s361
      %s363 = smul.u32 32, %s24
      %p364 = scmp.lt.s32.totalorder %s23, 1
      %s365 = scalar_select %p364, %s23, 1
      %p366 = scmp.lt.s32.totalorder %s363, 31
      %s367 = scalar_select %p366, %s363, 31
      %s368 = smul.addr %s365, 32
      %s369 = sadd.s32 %s367, %s368
      %s370 = smul.addr %s369, 4
      %s371 = scalar_lea.vmem %s5, %s370
      %s372 = smul.u32 32, %s24
      %s373 = smul.u32 32, %s24
      %p374 = scmp.lt.s32.totalorder %s23, 1
      %s375 = scalar_select %p374, %s23, 1
      %p376 = scmp.lt.s32.totalorder %s373, 31
      %s377 = scalar_select %p376, %s373, 31
      %s378 = smul.addr %s375, 32
      %s379 = sadd.s32 %s377, %s378
      %s380 = smul.addr %s379, 4
      %s381 = scalar_lea.vmem %s6, %s380
      %s382 = smul.u32 32, %s24
      %s383 = smul.u32 32, %s24
      %p384 = scmp.lt.s32.totalorder %s23, 1
      %s385 = scalar_select %p384, %s23, 1
      %p386 = scmp.lt.s32.totalorder %s383, 31
      %s387 = scalar_select %p386, %s383, 31
      %s388 = smul.addr %s385, 32
      %s389 = sadd.s32 %s387, %s388
      %s390 = smul.addr %s389, 4
      %s391 = scalar_lea.vmem %s7, %s390
      %s392 = smul.u32 32, %s24
      %v394 = vld [vmem:[%s355] sm:$0xff]
      %v395 = vld [vmem:[%s355 + $0x8] sm:$0xff]
      %v396 = vld [vmem:[%s355 + $0x10] sm:$0xff]
      %v397 = vld [vmem:[%s355 + $0x18] sm:$0xff]
      %v398 = vld [vmem:[%s355 + $0x20] sm:$0xff]
      %v399 = vld [vmem:[%s355 + $0x28] sm:$0xff]
      %v400 = vld [vmem:[%s355 + $0x30] sm:$0xff]
      %v401 = vld [vmem:[%s355 + $0x38] sm:$0xff]
      %v402 = vld [vmem:[%s355 + $0x40] sm:$0xff]
      %v403 = vld [vmem:[%s355 + $0x48] sm:$0xff]
      %v404 = vld [vmem:[%s355 + $0x50] sm:$0xff]
      %v405 = vld [vmem:[%s355 + $0x58] sm:$0xff]
      %v406 = vld [vmem:[%s355 + $0x60] sm:$0xff]
      %v407 = vld [vmem:[%s355 + $0x68] sm:$0xff]
      %v408 = vld [vmem:[%s355 + $0x70] sm:$0xff]
      %v409 = vld [vmem:[%s355 + $0x78] sm:$0xff]
      %v410 = vld [vmem:[%s355 + $0x80] sm:$0xff]
      %v411 = vld [vmem:[%s355 + $0x88] sm:$0xff]
      %v412 = vld [vmem:[%s355 + $0x90] sm:$0xff]
      %v413 = vld [vmem:[%s355 + $0x98] sm:$0xff]
      %v414 = vld [vmem:[%s355 + $0xa0] sm:$0xff]
      %v415 = vld [vmem:[%s355 + $0xa8] sm:$0xff]
      %v416 = vld [vmem:[%s355 + $0xb0] sm:$0xff]
      %v417 = vld [vmem:[%s355 + $0xb8] sm:$0xff]
      %v418 = vld [vmem:[%s355 + $0xc0] sm:$0xff]
      %v419 = vld [vmem:[%s355 + $0xc8] sm:$0xff]
      %v420 = vld [vmem:[%s355 + $0xd0] sm:$0xff]
      %v421 = vld [vmem:[%s355 + $0xd8] sm:$0xff]
      %v422 = vld [vmem:[%s355 + $0xe0] sm:$0xff]
      %v423 = vld [vmem:[%s355 + $0xe8] sm:$0xff]
      %v424 = vld [vmem:[%s355 + $0xf0] sm:$0xff]
      %v425 = vld [vmem:[%s355 + $0xf8] sm:$0xff]
      %v426 = vld [vmem:[%s359] sm:$0x1]
      %v428 = vlaneseq
      %v429 = vshrl.u32 %v428, 7
      %v430 = vsub.s32 0, %v429
      %v431 = vrot.slane %v426, %v430
      %v433 = vmul.f32 %v394, %v431
      %v434 = vmul.f32 %v395, %v431
      %v435 = vmul.f32 %v396, %v431
      %v436 = vmul.f32 %v397, %v431
      %v437 = vmul.f32 %v398, %v431
      %v438 = vmul.f32 %v399, %v431
      %v439 = vmul.f32 %v400, %v431
      %v440 = vmul.f32 %v401, %v431
      %v441 = vmul.f32 %v402, %v431
      %v442 = vmul.f32 %v403, %v431
      %v443 = vmul.f32 %v404, %v431
      %v444 = vmul.f32 %v405, %v431
      %v445 = vmul.f32 %v406, %v431
      %v446 = vmul.f32 %v407, %v431
      %v447 = vmul.f32 %v408, %v431
      %v448 = vmul.f32 %v409, %v431
      %v449 = vmul.f32 %v410, %v431
      %v450 = vmul.f32 %v411, %v431
      %v451 = vmul.f32 %v412, %v431
      %v452 = vmul.f32 %v413, %v431
      %v453 = vmul.f32 %v414, %v431
      %v454 = vmul.f32 %v415, %v431
      %v455 = vmul.f32 %v416, %v431
      %v456 = vmul.f32 %v417, %v431
      %v457 = vmul.f32 %v418, %v431
      %v458 = vmul.f32 %v419, %v431
      %v459 = vmul.f32 %v420, %v431
      %v460 = vmul.f32 %v421, %v431
      %v461 = vmul.f32 %v422, %v431
      %v462 = vmul.f32 %v423, %v431
      %v463 = vmul.f32 %v424, %v431
      %v464 = vmul.f32 %v425, %v431
      %v465 = vld [vmem:[%s362] sm:$0x1]
      %v467 = vlaneseq
      %v468 = vshrl.u32 %v467, 7
      %v469 = vsub.s32 0, %v468
      %v470 = vrot.slane %v465, %v469
      %v472 = vadd.f32 %v433, %v470
      %v473 = vadd.f32 %v434, %v470
      %v474 = vadd.f32 %v435, %v470
      %v475 = vadd.f32 %v436, %v470
      %v476 = vadd.f32 %v437, %v470
      %v477 = vadd.f32 %v438, %v470
      %v478 = vadd.f32 %v439, %v470
      %v479 = vadd.f32 %v440, %v470
      %v480 = vadd.f32 %v441, %v470
      %v481 = vadd.f32 %v442, %v470
      %v482 = vadd.f32 %v443, %v470
      %v483 = vadd.f32 %v444, %v470
      %v484 = vadd.f32 %v445, %v470
      %v485 = vadd.f32 %v446, %v470
      %v486 = vadd.f32 %v447, %v470
      %v487 = vadd.f32 %v448, %v470
      %v488 = vadd.f32 %v449, %v470
      %v489 = vadd.f32 %v450, %v470
      %v490 = vadd.f32 %v451, %v470
      %v491 = vadd.f32 %v452, %v470
      %v492 = vadd.f32 %v453, %v470
      %v493 = vadd.f32 %v454, %v470
      %v494 = vadd.f32 %v455, %v470
      %v495 = vadd.f32 %v456, %v470
      %v496 = vadd.f32 %v457, %v470
      %v497 = vadd.f32 %v458, %v470
      %v498 = vadd.f32 %v459, %v470
      %v499 = vadd.f32 %v460, %v470
      %v500 = vadd.f32 %v461, %v470
      %v501 = vadd.f32 %v462, %v470
      %v502 = vadd.f32 %v463, %v470
      %v503 = vadd.f32 %v464, %v470
      %v504 = vpack.c.bf16 %v473, %v472
      %v505 = vpack.c.bf16 %v475, %v474
      %v506 = vpack.c.bf16 %v477, %v476
      %v507 = vpack.c.bf16 %v479, %v478
      %v508 = vpack.c.bf16 %v481, %v480
      %v509 = vpack.c.bf16 %v483, %v482
      %v510 = vpack.c.bf16 %v485, %v484
      %v511 = vpack.c.bf16 %v487, %v486
      %v512 = vpack.c.bf16 %v489, %v488
      %v513 = vpack.c.bf16 %v491, %v490
      %v514 = vpack.c.bf16 %v493, %v492
      %v515 = vpack.c.bf16 %v495, %v494
      %v516 = vpack.c.bf16 %v497, %v496
      %v517 = vpack.c.bf16 %v499, %v498
      %v518 = vpack.c.bf16 %v501, %v500
      %v519 = vpack.c.bf16 %v503, %v502
      %v520 = vld [vmem:[%s3] sm:$0xf]
      %v521 = vld [vmem:[%s3 + $0x4] sm:$0xf]
      %v522 = vld [vmem:[%s3 + $0x8] sm:$0xf]
      %v523 = vld [vmem:[%s3 + $0xc] sm:$0xf]
      %v524 = vld [vmem:[%s4] sm:$0x1]
      %v526 = vlaneseq
      %v527 = vshrl.u32 %v526, 7
      %v528 = vsub.s32 0, %v527
      %v529 = vrot.slane %v524, %v528
      %v535 = vunpack.c.l.b16 %v520
      %v536 = vunpack.c.l.b16 %v521
      %v537 = vunpack.c.l.b16 %v522
      %v538 = vunpack.c.l.b16 %v523
      %v539 = vpack.c.b16 %v536, %v535
      %v540 = vpack.c.b16 %v538, %v537
      %vm543 = vcmask 261120
      %v545 = vsel %vm543, %v504, 0
      %v548 = vsel %vm543, %v505, 0
      %v551 = vsel %vm543, %v506, 0
      %v554 = vsel %vm543, %v507, 0
      %v557 = vsel %vm543, %v508, 0
      %v560 = vsel %vm543, %v509, 0
      %v563 = vsel %vm543, %v510, 0
      %v566 = vsel %vm543, %v511, 0
      %v569 = vsel %vm543, %v512, 0
      %v572 = vsel %vm543, %v513, 0
      %v575 = vsel %vm543, %v514, 0
      %v578 = vsel %vm543, %v515, 0
      %v581 = vsel %vm543, %v516, 0
      %v584 = vsel %vm543, %v517, 0
      %v587 = vsel %vm543, %v518, 0
      %v590 = vsel %vm543, %v519, 0
      %592 = vmatprep.subr.bf16.mxu0 0
      %593 = vmatpush1.bf16.msra.mxu0 %v539
      %594 = vmatprep.subr.bf16.mxu0 0
      %595 = vmatpush1.bf16.msra.mxu0 %v540
      %596 = vmatprep.subr.bf16.mxu0 0
      %597 = vmatpush1.bf16.msra.mxu0 0
      %598 = vmatprep.subr.bf16.mxu0 0
      %599 = vmatpush1.bf16.msra.mxu0 0
      %600 = vmatprep.subr.bf16.mxu0 0
      %601 = vmatpush1.bf16.msra.mxu0 0
      %602 = vmatprep.subr.bf16.mxu0 0
      %603 = vmatpush1.bf16.msra.mxu0 0
      %604 = vmatprep.subr.bf16.mxu0 0
      %605 = vmatpush1.bf16.msra.mxu0 0
      %606 = vmatprep.subr.bf16.mxu0 0
      %607 = vmatpush1.bf16.msra.mxu0 0
      %608 = vmatprep.subr.bf16.mxu0 0
      %609 = vmatpush1.bf16.msra.mxu0 0
      %610 = vmatprep.subr.bf16.mxu0 0
      %611 = vmatpush1.bf16.msra.mxu0 0
      %612 = vmatprep.subr.bf16.mxu0 0
      %613 = vmatpush1.bf16.msra.mxu0 0
      %614 = vmatprep.subr.bf16.mxu0 0
      %615 = vmatpush1.bf16.msra.mxu0 0
      %616 = vmatprep.subr.bf16.mxu0 0
      %617 = vmatpush1.bf16.msra.mxu0 0
      %618 = vmatprep.subr.bf16.mxu0 0
      %619 = vmatpush1.bf16.msra.mxu0 0
      %620 = vmatprep.subr.bf16.mxu0 0
      %621 = vmatpush1.bf16.msra.mxu0 0
      %622 = vmatprep.subr.bf16.mxu0 0
      %623 = vmatpush1.bf16.msra.mxu0 0
      %624 = vmatprep.mubr.bf16.mxu0 0
      %625 = vmatmul.mubr.bf16.gmra.mrb[0].mxu0 %v545
      %v626 = vpop.f32.mrb[0].mxu0
      %v627 = vadd.f32 %v529, %v626
      %v628 = vpop.f32.mrb[0].mxu0
      %v629 = vpop.f32.mrb[0].mxu0
      %v630 = vadd.f32 %v529, %v629
      %v631 = vpop.f32.mrb[0].mxu0
      %632 = vmatprep.mubr.bf16.mxu0 0
      %633 = vmatmul.mubr.bf16.gmra.mrb[0].mxu0 %v548
      %v634 = vpop.f32.mrb[0].mxu0
      %v635 = vadd.f32 %v529, %v634
      %v636 = vpop.f32.mrb[0].mxu0
      %v637 = vpop.f32.mrb[0].mxu0
      %v638 = vadd.f32 %v529, %v637
      %v639 = vpop.f32.mrb[0].mxu0
      %640 = vmatprep.mubr.bf16.mxu0 0
      %641 = vmatmul.mubr.bf16.gmra.mrb[0].mxu0 %v551
      %v642 = vpop.f32.mrb[0].mxu0
      %v643 = vadd.f32 %v529, %v642
      %v644 = vpop.f32.mrb[0].mxu0
      %v645 = vpop.f32.mrb[0].mxu0
      %v646 = vadd.f32 %v529, %v645
      %v647 = vpop.f32.mrb[0].mxu0
      %648 = vmatprep.mubr.bf16.mxu0 0
      %649 = vmatmul.mubr.bf16.gmra.mrb[0].mxu0 %v554
      %v650 = vpop.f32.mrb[0].mxu0
      %v651 = vadd.f32 %v529, %v650
      %v652 = vpop.f32.mrb[0].mxu0
      %v653 = vpop.f32.mrb[0].mxu0
      %v654 = vadd.f32 %v529, %v653
      %v655 = vpop.f32.mrb[0].mxu0
      %656 = vmatprep.mubr.bf16.mxu0 0
      %657 = vmatmul.mubr.bf16.gmra.mrb[0].mxu0 %v557
      %v658 = vpop.f32.mrb[0].mxu0
      %v659 = vadd.f32 %v529, %v658
      %v660 = vpop.f32.mrb[0].mxu0
      %v661 = vpop.f32.mrb[0].mxu0
      %v662 = vadd.f32 %v529, %v661
      %v663 = vpop.f32.mrb[0].mxu0
      %664 = vmatprep.mubr.bf16.mxu0 0
      %665 = vmatmul.mubr.bf16.gmra.mrb[0].mxu0 %v560
      %v666 = vpop.f32.mrb[0].mxu0
      %v667 = vadd.f32 %v529, %v666
      %v668 = vpop.f32.mrb[0].mxu0
      %v669 = vpop.f32.mrb[0].mxu0
      %v670 = vadd.f32 %v529, %v669
      %v671 = vpop.f32.mrb[0].mxu0
      %672 = vmatprep.mubr.bf16.mxu0 0
      %673 = vmatmul.mubr.bf16.gmra.mrb[0].mxu0 %v563
      %v674 = vpop.f32.mrb[0].mxu0
      %v675 = vadd.f32 %v529, %v674
      %v676 = vpop.f32.mrb[0].mxu0
      %v677 = vpop.f32.mrb[0].mxu0
      %v678 = vadd.f32 %v529, %v677
      %v679 = vpop.f32.mrb[0].mxu0
      %680 = vmatprep.mubr.bf16.mxu0 0
      %681 = vmatmul.mubr.bf16.gmra.mrb[0].mxu0 %v566
      %v682 = vpop.f32.mrb[0].mxu0
      %v683 = vadd.f32 %v529, %v682
      %v684 = vpop.f32.mrb[0].mxu0
      %v685 = vpop.f32.mrb[0].mxu0
      %v686 = vadd.f32 %v529, %v685
      %v687 = vpop.f32.mrb[0].mxu0
      %688 = vmatprep.mubr.bf16.mxu0 0
      %689 = vmatmul.mubr.bf16.gmra.mrb[0].mxu0 %v569
      %v690 = vpop.f32.mrb[0].mxu0
      %v691 = vadd.f32 %v529, %v690
      %v692 = vpop.f32.mrb[0].mxu0
      %v693 = vpop.f32.mrb[0].mxu0
      %v694 = vadd.f32 %v529, %v693
      %v695 = vpop.f32.mrb[0].mxu0
      %696 = vmatprep.mubr.bf16.mxu0 0
      %697 = vmatmul.mubr.bf16.gmra.mrb[0].mxu0 %v572
      %v698 = vpop.f32.mrb[0].mxu0
      %v699 = vadd.f32 %v529, %v698
      %v700 = vpop.f32.mrb[0].mxu0
      %v701 = vpop.f32.mrb[0].mxu0
      %v702 = vadd.f32 %v529, %v701
      %v703 = vpop.f32.mrb[0].mxu0
      %704 = vmatprep.mubr.bf16.mxu0 0
      %705 = vmatmul.mubr.bf16.gmra.mrb[0].mxu0 %v575
      %v706 = vpop.f32.mrb[0].mxu0
      %v707 = vadd.f32 %v529, %v706
      %v708 = vpop.f32.mrb[0].mxu0
      %v709 = vpop.f32.mrb[0].mxu0
      %v710 = vadd.f32 %v529, %v709
      %v711 = vpop.f32.mrb[0].mxu0
      %712 = vmatprep.mubr.bf16.mxu0 0
      %713 = vmatmul.mubr.bf16.gmra.mrb[0].mxu0 %v578
      %v714 = vpop.f32.mrb[0].mxu0
      %v715 = vadd.f32 %v529, %v714
      %v716 = vpop.f32.mrb[0].mxu0
      %v717 = vpop.f32.mrb[0].mxu0
      %v718 = vadd.f32 %v529, %v717
      %v719 = vpop.f32.mrb[0].mxu0
      %720 = vmatprep.mubr.bf16.mxu0 0
      %721 = vmatmul.mubr.bf16.gmra.mrb[0].mxu0 %v581
      %v722 = vpop.f32.mrb[0].mxu0
      %v723 = vadd.f32 %v529, %v722
      %v724 = vpop.f32.mrb[0].mxu0
      %v725 = vpop.f32.mrb[0].mxu0
      %v726 = vadd.f32 %v529, %v725
      %v727 = vpop.f32.mrb[0].mxu0
      %728 = vmatprep.mubr.bf16.mxu0 0
      %729 = vmatmul.mubr.bf16.gmra.mrb[0].mxu0 %v584
      %v730 = vpop.f32.mrb[0].mxu0
      %v731 = vadd.f32 %v529, %v730
      %v732 = vpop.f32.mrb[0].mxu0
      %v733 = vpop.f32.mrb[0].mxu0
      %v734 = vadd.f32 %v529, %v733
      %v735 = vpop.f32.mrb[0].mxu0
      %736 = vmatprep.mubr.bf16.mxu0 0
      %737 = vmatmul.mubr.bf16.gmra.mrb[0].mxu0 %v587
      %v738 = vpop.f32.mrb[0].mxu0
      %v739 = vadd.f32 %v529, %v738
      %v740 = vpop.f32.mrb[0].mxu0
      %v741 = vpop.f32.mrb[0].mxu0
      %v742 = vadd.f32 %v529, %v741
      %v743 = vpop.f32.mrb[0].mxu0
      %744 = vmatprep.mubr.bf16.mxu0 0
      %745 = vmatmul.mubr.bf16.gmra.mrb[0].mxu0 %v590
      %v746 = vpop.f32.mrb[0].mxu0
      %v747 = vadd.f32 %v529, %v746
      %v748 = vpop.f32.mrb[0].mxu0
      %v749 = vpop.f32.mrb[0].mxu0
      %v750 = vadd.f32 %v529, %v749
      %v751 = vpop.f32.mrb[0].mxu0
      %752 = vdwg.mxu0
      %v753 = vpack.c.bf16 %v630, %v627
      %v754 = vpack.c.bf16 %v638, %v635
      %v755 = vpack.c.bf16 %v646, %v643
      %v756 = vpack.c.bf16 %v654, %v651
      %v757 = vpack.c.bf16 %v662, %v659
      %v758 = vpack.c.bf16 %v670, %v667
      %v759 = vpack.c.bf16 %v678, %v675
      %v760 = vpack.c.bf16 %v686, %v683
      %v761 = vpack.c.bf16 %v694, %v691
      %v762 = vpack.c.bf16 %v702, %v699
      %v763 = vpack.c.bf16 %v710, %v707
      %v764 = vpack.c.bf16 %v718, %v715
      %v765 = vpack.c.bf16 %v726, %v723
      %v766 = vpack.c.bf16 %v734, %v731
      %v767 = vpack.c.bf16 %v742, %v739
      %v768 = vpack.c.bf16 %v750, %v747
      %v785 = vunpack.c.l.b16 %v753
      %v786 = vunpack.c.h.b16 %v753
      %v787 = vunpack.c.l.b16 %v754
      %v788 = vunpack.c.h.b16 %v754
      %v789 = vunpack.c.l.b16 %v755
      %v790 = vunpack.c.h.b16 %v755
      %v791 = vunpack.c.l.b16 %v756
      %v792 = vunpack.c.h.b16 %v756
      %v793 = vunpack.c.l.b16 %v757
      %v794 = vunpack.c.h.b16 %v757
      %v795 = vunpack.c.l.b16 %v758
      %v796 = vunpack.c.h.b16 %v758
      %v797 = vunpack.c.l.b16 %v759
      %v798 = vunpack.c.h.b16 %v759
      %v799 = vunpack.c.l.b16 %v760
      %v800 = vunpack.c.h.b16 %v760
      %v801 = vunpack.c.l.b16 %v761
      %v802 = vunpack.c.h.b16 %v761
      %v803 = vunpack.c.l.b16 %v762
      %v804 = vunpack.c.h.b16 %v762
      %v805 = vunpack.c.l.b16 %v763
      %v806 = vunpack.c.h.b16 %v763
      %v807 = vunpack.c.l.b16 %v764
      %v808 = vunpack.c.h.b16 %v764
      %v809 = vunpack.c.l.b16 %v765
      %v810 = vunpack.c.h.b16 %v765
      %v811 = vunpack.c.l.b16 %v766
      %v812 = vunpack.c.h.b16 %v766
      %v813 = vunpack.c.l.b16 %v767
      %v814 = vunpack.c.h.b16 %v767
      %v815 = vunpack.c.l.b16 %v768
      %v816 = vunpack.c.h.b16 %v768
      %v817 = vpack.c.b16 %v785, %v785
      %v818 = vpack.c.b16 %v786, %v786
      %v819 = vpack.c.b16 %v787, %v787
      %v820 = vpack.c.b16 %v788, %v788
      %v821 = vpack.c.b16 %v789, %v789
      %v822 = vpack.c.b16 %v790, %v790
      %v823 = vpack.c.b16 %v791, %v791
      %v824 = vpack.c.b16 %v792, %v792
      %v825 = vpack.c.b16 %v793, %v793
      %v826 = vpack.c.b16 %v794, %v794
      %v827 = vpack.c.b16 %v795, %v795
      %v828 = vpack.c.b16 %v796, %v796
      %v829 = vpack.c.b16 %v797, %v797
      %v830 = vpack.c.b16 %v798, %v798
      %v831 = vpack.c.b16 %v799, %v799
      %v832 = vpack.c.b16 %v800, %v800
      %v833 = vpack.c.b16 %v801, %v801
      %v834 = vpack.c.b16 %v802, %v802
      %v835 = vpack.c.b16 %v803, %v803
      %v836 = vpack.c.b16 %v804, %v804
      %v837 = vpack.c.b16 %v805, %v805
      %v838 = vpack.c.b16 %v806, %v806
      %v839 = vpack.c.b16 %v807, %v807
      %v840 = vpack.c.b16 %v808, %v808
      %v841 = vpack.c.b16 %v809, %v809
      %v842 = vpack.c.b16 %v810, %v810
      %v843 = vpack.c.b16 %v811, %v811
      %v844 = vpack.c.b16 %v812, %v812
      %v845 = vpack.c.b16 %v813, %v813
      %v846 = vpack.c.b16 %v814, %v814
      %v847 = vpack.c.b16 %v815, %v815
      %v848 = vpack.c.b16 %v816, %v816
      %vm881 = vcmask 257024
      %882 = vst.msk [vmem:[%s371] sm:$0xf] %vm881, %v817
      %883 = vst.msk [vmem:[%s371 + $0x4] sm:$0xf] %vm881, %v818
      %884 = vst.msk [vmem:[%s371 + $0x8] sm:$0xf] %vm881, %v819
      %885 = vst.msk [vmem:[%s371 + $0xc] sm:$0xf] %vm881, %v820
      %886 = vst.msk [vmem:[%s371 + $0x10] sm:$0xf] %vm881, %v821
      %887 = vst.msk [vmem:[%s371 + $0x14] sm:$0xf] %vm881, %v822
      %888 = vst.msk [vmem:[%s371 + $0x18] sm:$0xf] %vm881, %v823
      %889 = vst.msk [vmem:[%s371 + $0x1c] sm:$0xf] %vm881, %v824
      %890 = vst.msk [vmem:[%s371 + $0x20] sm:$0xf] %vm881, %v825
      %891 = vst.msk [vmem:[%s371 + $0x24] sm:$0xf] %vm881, %v826
      %892 = vst.msk [vmem:[%s371 + $0x28] sm:$0xf] %vm881, %v827
      %893 = vst.msk [vmem:[%s371 + $0x2c] sm:$0xf] %vm881, %v828
      %894 = vst.msk [vmem:[%s371 + $0x30] sm:$0xf] %vm881, %v829
      %895 = vst.msk [vmem:[%s371 + $0x34] sm:$0xf] %vm881, %v830
      %896 = vst.msk [vmem:[%s371 + $0x38] sm:$0xf] %vm881, %v831
      %897 = vst.msk [vmem:[%s371 + $0x3c] sm:$0xf] %vm881, %v832
      %898 = vst.msk [vmem:[%s371 + $0x40] sm:$0xf] %vm881, %v833
      %899 = vst.msk [vmem:[%s371 + $0x44] sm:$0xf] %vm881, %v834
      %900 = vst.msk [vmem:[%s371 + $0x48] sm:$0xf] %vm881, %v835
      %901 = vst.msk [vmem:[%s371 + $0x4c] sm:$0xf] %vm881, %v836
      %902 = vst.msk [vmem:[%s371 + $0x50] sm:$0xf] %vm881, %v837
      %903 = vst.msk [vmem:[%s371 + $0x54] sm:$0xf] %vm881, %v838
      %904 = vst.msk [vmem:[%s371 + $0x58] sm:$0xf] %vm881, %v839
      %905 = vst.msk [vmem:[%s371 + $0x5c] sm:$0xf] %vm881, %v840
      %906 = vst.msk [vmem:[%s371 + $0x60] sm:$0xf] %vm881, %v841
      %907 = vst.msk [vmem:[%s371 + $0x64] sm:$0xf] %vm881, %v842
      %908 = vst.msk [vmem:[%s371 + $0x68] sm:$0xf] %vm881, %v843
      %909 = vst.msk [vmem:[%s371 + $0x6c] sm:$0xf] %vm881, %v844
      %910 = vst.msk [vmem:[%s371 + $0x70] sm:$0xf] %vm881, %v845
      %911 = vst.msk [vmem:[%s371 + $0x74] sm:$0xf] %vm881, %v846
      %912 = vst.msk [vmem:[%s371 + $0x78] sm:$0xf] %vm881, %v847
      %913 = vst.msk [vmem:[%s371 + $0x7c] sm:$0xf] %vm881, %v848
      %914 = vrot.lane.b32.xlu0 %v817, 96
      %v915 = vpop.permute.xlu0 %914
      %916 = vrot.lane.b32.xlu0 %v818, 96
      %v917 = vpop.permute.xlu0 %916
      %918 = vrot.lane.b32.xlu0 %v819, 96
      %v919 = vpop.permute.xlu0 %918
      %920 = vrot.lane.b32.xlu0 %v820, 96
      %v921 = vpop.permute.xlu0 %920
      %922 = vrot.lane.b32.xlu0 %v821, 96
      %v923 = vpop.permute.xlu0 %922
      %924 = vrot.lane.b32.xlu0 %v822, 96
      %v925 = vpop.permute.xlu0 %924
      %926 = vrot.lane.b32.xlu0 %v823, 96
      %v927 = vpop.permute.xlu0 %926
      %928 = vrot.lane.b32.xlu0 %v824, 96
      %v929 = vpop.permute.xlu0 %928
      %930 = vrot.lane.b32.xlu0 %v825, 96
      %v931 = vpop.permute.xlu0 %930
      %932 = vrot.lane.b32.xlu0 %v826, 96
      %v933 = vpop.permute.xlu0 %932
      %934 = vrot.lane.b32.xlu0 %v827, 96
      %v935 = vpop.permute.xlu0 %934
      %936 = vrot.lane.b32.xlu0 %v828, 96
      %v937 = vpop.permute.xlu0 %936
      %938 = vrot.lane.b32.xlu0 %v829, 96
      %v939 = vpop.permute.xlu0 %938
      %940 = vrot.lane.b32.xlu0 %v830, 96
      %v941 = vpop.permute.xlu0 %940
      %942 = vrot.lane.b32.xlu0 %v831, 96
      %v943 = vpop.permute.xlu0 %942
      %944 = vrot.lane.b32.xlu0 %v832, 96
      %v945 = vpop.permute.xlu0 %944
      %946 = vrot.lane.b32.xlu0 %v833, 96
      %v947 = vpop.permute.xlu0 %946
      %948 = vrot.lane.b32.xlu0 %v834, 96
      %v949 = vpop.permute.xlu0 %948
      %950 = vrot.lane.b32.xlu0 %v835, 96
      %v951 = vpop.permute.xlu0 %950
      %952 = vrot.lane.b32.xlu0 %v836, 96
      %v953 = vpop.permute.xlu0 %952
      %954 = vrot.lane.b32.xlu0 %v837, 96
      %v955 = vpop.permute.xlu0 %954
      %956 = vrot.lane.b32.xlu0 %v838, 96
      %v957 = vpop.permute.xlu0 %956
      %958 = vrot.lane.b32.xlu0 %v839, 96
      %v959 = vpop.permute.xlu0 %958
      %960 = vrot.lane.b32.xlu0 %v840, 96
      %v961 = vpop.permute.xlu0 %960
      %962 = vrot.lane.b32.xlu0 %v841, 96
      %v963 = vpop.permute.xlu0 %962
      %964 = vrot.lane.b32.xlu0 %v842, 96
      %v965 = vpop.permute.xlu0 %964
      %966 = vrot.lane.b32.xlu0 %v843, 96
      %v967 = vpop.permute.xlu0 %966
      %968 = vrot.lane.b32.xlu0 %v844, 96
      %v969 = vpop.permute.xlu0 %968
      %970 = vrot.lane.b32.xlu0 %v845, 96
      %v971 = vpop.permute.xlu0 %970
      %972 = vrot.lane.b32.xlu0 %v846, 96
      %v973 = vpop.permute.xlu0 %972
      %974 = vrot.lane.b32.xlu0 %v847, 96
      %v975 = vpop.permute.xlu0 %974
      %976 = vrot.lane.b32.xlu0 %v848, 96
      %v977 = vpop.permute.xlu0 %976
      %1010 = vst.msk [vmem:[%s381] sm:$0xf] %vm881, %v915
      %1011 = vst.msk [vmem:[%s381 + $0x4] sm:$0xf] %vm881, %v917
      %1012 = vst.msk [vmem:[%s381 + $0x8] sm:$0xf] %vm881, %v919
      %1013 = vst.msk [vmem:[%s381 + $0xc] sm:$0xf] %vm881, %v921
      %1014 = vst.msk [vmem:[%s381 + $0x10] sm:$0xf] %vm881, %v923
      %1015 = vst.msk [vmem:[%s381 + $0x14] sm:$0xf] %vm881, %v925
      %1016 = vst.msk [vmem:[%s381 + $0x18] sm:$0xf] %vm881, %v927
      %1017 = vst.msk [vmem:[%s381 + $0x1c] sm:$0xf] %vm881, %v929
      %1018 = vst.msk [vmem:[%s381 + $0x20] sm:$0xf] %vm881, %v931
      %1019 = vst.msk [vmem:[%s381 + $0x24] sm:$0xf] %vm881, %v933
      %1020 = vst.msk [vmem:[%s381 + $0x28] sm:$0xf] %vm881, %v935
      %1021 = vst.msk [vmem:[%s381 + $0x2c] sm:$0xf] %vm881, %v937
      %1022 = vst.msk [vmem:[%s381 + $0x30] sm:$0xf] %vm881, %v939
      %1023 = vst.msk [vmem:[%s381 + $0x34] sm:$0xf] %vm881, %v941
      %1024 = vst.msk [vmem:[%s381 + $0x38] sm:$0xf] %vm881, %v943
      %1025 = vst.msk [vmem:[%s381 + $0x3c] sm:$0xf] %vm881, %v945
      %1026 = vst.msk [vmem:[%s381 + $0x40] sm:$0xf] %vm881, %v947
      %1027 = vst.msk [vmem:[%s381 + $0x44] sm:$0xf] %vm881, %v949
      %1028 = vst.msk [vmem:[%s381 + $0x48] sm:$0xf] %vm881, %v951
      %1029 = vst.msk [vmem:[%s381 + $0x4c] sm:$0xf] %vm881, %v953
      %1030 = vst.msk [vmem:[%s381 + $0x50] sm:$0xf] %vm881, %v955
      %1031 = vst.msk [vmem:[%s381 + $0x54] sm:$0xf] %vm881, %v957
      %1032 = vst.msk [vmem:[%s381 + $0x58] sm:$0xf] %vm881, %v959
      %1033 = vst.msk [vmem:[%s381 + $0x5c] sm:$0xf] %vm881, %v961
      %1034 = vst.msk [vmem:[%s381 + $0x60] sm:$0xf] %vm881, %v963
      %1035 = vst.msk [vmem:[%s381 + $0x64] sm:$0xf] %vm881, %v965
      %1036 = vst.msk [vmem:[%s381 + $0x68] sm:$0xf] %vm881, %v967
      %1037 = vst.msk [vmem:[%s381 + $0x6c] sm:$0xf] %vm881, %v969
      %1038 = vst.msk [vmem:[%s381 + $0x70] sm:$0xf] %vm881, %v971
      %1039 = vst.msk [vmem:[%s381 + $0x74] sm:$0xf] %vm881, %v973
      %1040 = vst.msk [vmem:[%s381 + $0x78] sm:$0xf] %vm881, %v975
      %1041 = vst.msk [vmem:[%s381 + $0x7c] sm:$0xf] %vm881, %v977
      %1042 = vrot.lane.b32.xlu0 %v817, 64
      %v1043 = vpop.permute.xlu0 %1042
      %1044 = vrot.lane.b32.xlu0 %v818, 64
      %v1045 = vpop.permute.xlu0 %1044
      %1046 = vrot.lane.b32.xlu0 %v819, 64
      %v1047 = vpop.permute.xlu0 %1046
      %1048 = vrot.lane.b32.xlu0 %v820, 64
      %v1049 = vpop.permute.xlu0 %1048
      %1050 = vrot.lane.b32.xlu0 %v821, 64
      %v1051 = vpop.permute.xlu0 %1050
      %1052 = vrot.lane.b32.xlu0 %v822, 64
      %v1053 = vpop.permute.xlu0 %1052
      %1054 = vrot.lane.b32.xlu0 %v823, 64
      %v1055 = vpop.permute.xlu0 %1054
      %1056 = vrot.lane.b32.xlu0 %v824, 64
      %v1057 = vpop.permute.xlu0 %1056
      %1058 = vrot.lane.b32.xlu0 %v825, 64
      %v1059 = vpop.permute.xlu0 %1058
      %1060 = vrot.lane.b32.xlu0 %v826, 64
      %v1061 = vpop.permute.xlu0 %1060
      %1062 = vrot.lane.b32.xlu0 %v827, 64
      %v1063 = vpop.permute.xlu0 %1062
      %1064 = vrot.lane.b32.xlu0 %v828, 64
      %v1065 = vpop.permute.xlu0 %1064
      %1066 = vrot.lane.b32.xlu0 %v829, 64
      %v1067 = vpop.permute.xlu0 %1066
      %1068 = vrot.lane.b32.xlu0 %v830, 64
      %v1069 = vpop.permute.xlu0 %1068
      %1070 = vrot.lane.b32.xlu0 %v831, 64
      %v1071 = vpop.permute.xlu0 %1070
      %1072 = vrot.lane.b32.xlu0 %v832, 64
      %v1073 = vpop.permute.xlu0 %1072
      %1074 = vrot.lane.b32.xlu0 %v833, 64
      %v1075 = vpop.permute.xlu0 %1074
      %1076 = vrot.lane.b32.xlu0 %v834, 64
      %v1077 = vpop.permute.xlu0 %1076
      %1078 = vrot.lane.b32.xlu0 %v835, 64
      %v1079 = vpop.permute.xlu0 %1078
      %1080 = vrot.lane.b32.xlu0 %v836, 64
      %v1081 = vpop.permute.xlu0 %1080
      %1082 = vrot.lane.b32.xlu0 %v837, 64
      %v1083 = vpop.permute.xlu0 %1082
      %1084 = vrot.lane.b32.xlu0 %v838, 64
      %v1085 = vpop.permute.xlu0 %1084
      %1086 = vrot.lane.b32.xlu0 %v839, 64
      %v1087 = vpop.permute.xlu0 %1086
      %1088 = vrot.lane.b32.xlu0 %v840, 64
      %v1089 = vpop.permute.xlu0 %1088
      %1090 = vrot.lane.b32.xlu0 %v841, 64
      %v1091 = vpop.permute.xlu0 %1090
      %1092 = vrot.lane.b32.xlu0 %v842, 64
      %v1093 = vpop.permute.xlu0 %1092
      %1094 = vrot.lane.b32.xlu0 %v843, 64
      %v1095 = vpop.permute.xlu0 %1094
      %1096 = vrot.lane.b32.xlu0 %v844, 64
      %v1097 = vpop.permute.xlu0 %1096
      %1098 = vrot.lane.b32.xlu0 %v845, 64
      %v1099 = vpop.permute.xlu0 %1098
      %1100 = vrot.lane.b32.xlu0 %v846, 64
      %v1101 = vpop.permute.xlu0 %1100
      %1102 = vrot.lane.b32.xlu0 %v847, 64
      %v1103 = vpop.permute.xlu0 %1102
      %1104 = vrot.lane.b32.xlu0 %v848, 64
      %v1105 = vpop.permute.xlu0 %1104
      %1138 = vst.msk [vmem:[%s391] sm:$0xf] %vm881, %v1043
      %1139 = vst.msk [vmem:[%s391 + $0x4] sm:$0xf] %vm881, %v1045
      %1140 = vst.msk [vmem:[%s391 + $0x8] sm:$0xf] %vm881, %v1047
      %1141 = vst.msk [vmem:[%s391 + $0xc] sm:$0xf] %vm881, %v1049
      %1142 = vst.msk [vmem:[%s391 + $0x10] sm:$0xf] %vm881, %v1051
      %1143 = vst.msk [vmem:[%s391 + $0x14] sm:$0xf] %vm881, %v1053
      %1144 = vst.msk [vmem:[%s391 + $0x18] sm:$0xf] %vm881, %v1055
      %1145 = vst.msk [vmem:[%s391 + $0x1c] sm:$0xf] %vm881, %v1057
      %1146 = vst.msk [vmem:[%s391 + $0x20] sm:$0xf] %vm881, %v1059
      %1147 = vst.msk [vmem:[%s391 + $0x24] sm:$0xf] %vm881, %v1061
      %1148 = vst.msk [vmem:[%s391 + $0x28] sm:$0xf] %vm881, %v1063
      %1149 = vst.msk [vmem:[%s391 + $0x2c] sm:$0xf] %vm881, %v1065
      %1150 = vst.msk [vmem:[%s391 + $0x30] sm:$0xf] %vm881, %v1067
      %1151 = vst.msk [vmem:[%s391 + $0x34] sm:$0xf] %vm881, %v1069
      %1152 = vst.msk [vmem:[%s391 + $0x38] sm:$0xf] %vm881, %v1071
      %1153 = vst.msk [vmem:[%s391 + $0x3c] sm:$0xf] %vm881, %v1073
      %1154 = vst.msk [vmem:[%s391 + $0x40] sm:$0xf] %vm881, %v1075
      %1155 = vst.msk [vmem:[%s391 + $0x44] sm:$0xf] %vm881, %v1077
      %1156 = vst.msk [vmem:[%s391 + $0x48] sm:$0xf] %vm881, %v1079
      %1157 = vst.msk [vmem:[%s391 + $0x4c] sm:$0xf] %vm881, %v1081
      %1158 = vst.msk [vmem:[%s391 + $0x50] sm:$0xf] %vm881, %v1083
      %1159 = vst.msk [vmem:[%s391 + $0x54] sm:$0xf] %vm881, %v1085
      %1160 = vst.msk [vmem:[%s391 + $0x58] sm:$0xf] %vm881, %v1087
      %1161 = vst.msk [vmem:[%s391 + $0x5c] sm:$0xf] %vm881, %v1089
      %1162 = vst.msk [vmem:[%s391 + $0x60] sm:$0xf] %vm881, %v1091
      %1163 = vst.msk [vmem:[%s391 + $0x64] sm:$0xf] %vm881, %v1093
      %1164 = vst.msk [vmem:[%s391 + $0x68] sm:$0xf] %vm881, %v1095
      %1165 = vst.msk [vmem:[%s391 + $0x6c] sm:$0xf] %vm881, %v1097
      %1166 = vst.msk [vmem:[%s391 + $0x70] sm:$0xf] %vm881, %v1099
      %1167 = vst.msk [vmem:[%s391 + $0x74] sm:$0xf] %vm881, %v1101
      %1168 = vst.msk [vmem:[%s391 + $0x78] sm:$0xf] %vm881, %v1103
      %1169 = vst.msk [vmem:[%s391 + $0x7c] sm:$0xf] %vm881, %v1105
      %s1170 = smul.u32 32, %s24
      %p1171 = scmp.lt.s32.totalorder %s23, 1
      %s1172 = scalar_select %p1171, %s23, 1
      %p1173 = scmp.lt.s32.totalorder %s1170, 31
      %s1174 = scalar_select %p1173, %s1170, 31
      %s1175 = smul.addr %s1172, 32
      %s1176 = sadd.s32 %s1174, %s1175
      %s1177 = smul.addr %s1176, 4
      %s1178 = scalar_lea.vmem %s5, %s1177
      %s1179 = smul.u32 32, %s24
      %p1180 = scmp.lt.s32.totalorder %s23, 1
      %s1181 = scalar_select %p1180, %s23, 1
      %p1182 = scmp.lt.s32.totalorder %s1179, 31
      %s1183 = scalar_select %p1182, %s1179, 31
      %s1184 = smul.addr %s1181, 32
      %s1185 = sadd.s32 %s1183, %s1184
      %s1186 = smul.addr %s1185, 4
      %s1187 = scalar_lea.vmem %s6, %s1186
      %s1188 = smul.u32 32, %s24
      %p1189 = scmp.lt.s32.totalorder %s23, 1
      %s1190 = scalar_select %p1189, %s23, 1
      %p1191 = scmp.lt.s32.totalorder %s1188, 31
      %s1192 = scalar_select %p1191, %s1188, 31
      %s1193 = smul.addr %s1190, 32
      %s1194 = sadd.s32 %s1192, %s1193
      %s1195 = smul.addr %s1194, 4
      %s1196 = scalar_lea.vmem %s7, %s1195
      // Predicated region
      $region41: #{attn_block_forward.2} parent=39 // pred_check
        %p1197 = pneg %p173
      $region42: #{attn_block_forward.2} parent=39 // pred_check_branch
        %1199 = sbr.rel (%p1197) target = $region44
      $region43: #{attn_block_forward.2} parent=39 // pred_region
        %s1200 = smul.u32 32, %s24
      $region44: #{attn_block_forward.2} parent=39 // pred_fallthru
        _
      // Predicated region
      $region45: #{attn_block_forward.2} parent=39 // pred_check
        %p1201 = pneg %p201
      $region46: #{attn_block_forward.2} parent=39 // pred_check_branch
        %1203 = sbr.rel (%p1201) target = $region48
      $region47: #{attn_block_forward.2} parent=39 // pred_region
        %s1204 = smul.u32 32, %s24
      $region48: #{attn_block_forward.2} parent=39 // pred_fallthru
        _
      // Predicated region
      $region49: #{attn_block_forward.2} parent=39 // pred_check
        %p1205 = pneg %p229
      $region50: #{attn_block_forward.2} parent=39 // pred_check_branch
        %1207 = sbr.rel (%p1205) target = $region52
      $region51: #{attn_block_forward.2} parent=39 // pred_region
        %s1208 = smul.u32 32, %s24
      $region52: #{attn_block_forward.2} parent=39 // pred_fallthru
        _
    $region40: #{attn_block_forward.2} parent=5 // pred_fallthru
      _
    %p1209 = scmp.le.s32.totalorder 2, %s14
    // Predicated region
    $region53: #{attn_block_forward.2} parent=5 // pred_check
      %p1210 = pneg %p1209
    $region54: #{attn_block_forward.2} parent=5 // pred_check_branch
      %1212 = sbr.rel (%p1210) target = $region56
    $region55: #{attn_block_forward.2} parent=5 // pred_region
      %s1213 = ssub.s32 %s14, 2
      // Predicated region
      $region57: #{attn_block_forward.2} parent=55 // pred_check
        %p1214 = pneg %p179
      $region58: #{attn_block_forward.2} parent=55 // pred_check_branch
        %1216 = sbr.rel (%p1214) target = $region60
      $region59: #{attn_block_forward.2} parent=55 // pred_region
        %s1217 = smul.u32 32, %s26
        %p1218 = scmp.lt.s32.totalorder %s25, 1
        %s1219 = scalar_select %p1218, %s25, 1
        %p1220 = scmp.lt.s32.totalorder %s1217, 31
        %s1221 = scalar_select %p1220, %s1217, 31
        %s1222 = smul.addr %s1219, 32
        %s1223 = sadd.s32 %s1221, %s1222
        %s1224 = smul.addr %s1223, 4
        %s1225 = scalar_lea.vmem %s5, %s1224
      $region60: #{attn_block_forward.2} parent=55 // pred_fallthru
        _
      // Predicated region
      $region61: #{attn_block_forward.2} parent=55 // pred_check
        %p1226 = pneg %p207
      $region62: #{attn_block_forward.2} parent=55 // pred_check_branch
        %1228 = sbr.rel (%p1226) target = $region64
      $region63: #{attn_block_forward.2} parent=55 // pred_region
        %s1229 = smul.u32 32, %s26
        %p1230 = scmp.lt.s32.totalorder %s25, 1
        %s1231 = scalar_select %p1230, %s25, 1
        %p1232 = scmp.lt.s32.totalorder %s1229, 31
        %s1233 = scalar_select %p1232, %s1229, 31
        %s1234 = smul.addr %s1231, 32
        %s1235 = sadd.s32 %s1233, %s1234
        %s1236 = smul.addr %s1235, 4
        %s1237 = scalar_lea.vmem %s6, %s1236
      $region64: #{attn_block_forward.2} parent=55 // pred_fallthru
        _
      // Predicated region
      $region65: #{attn_block_forward.2} parent=55 // pred_check
        %p1238 = pneg %p235
      $region66: #{attn_block_forward.2} parent=55 // pred_check_branch
        %1240 = sbr.rel (%p1238) target = $region68
      $region67: #{attn_block_forward.2} parent=55 // pred_region
        %s1241 = smul.u32 32, %s26
        %p1242 = scmp.lt.s32.totalorder %s25, 1
        %s1243 = scalar_select %p1242, %s25, 1
        %p1244 = scmp.lt.s32.totalorder %s1241, 31
        %s1245 = scalar_select %p1244, %s1241, 31
        %s1246 = smul.addr %s1243, 32
        %s1247 = sadd.s32 %s1245, %s1246
        %s1248 = smul.addr %s1247, 4
        %s1249 = scalar_lea.vmem %s7, %s1248
      $region68: #{attn_block_forward.2} parent=55 // pred_fallthru
        _
    $region56: #{attn_block_forward.2} parent=5 // pred_fallthru
      _
  $region6: #{attn_block_forward.2} parent=0 // loop_footer
    %s18 = sadd.s32 1, %s14
  $region7: #{attn_block_forward.2} parent=0 // loop_footer_branch
    %13 = sbr.rel target = $region3
  $region8: #{attn_block_forward.2} parent=0 // loop_exit
    _

// kernel: attn_block_forward.3
$region0: #{attn_block_forward.3}
  #allocation0 [shape = 'u32[]', space=smem, size = 0x4, offset = 0x4, fixed_abs, tag = 'smem constant byte address 0x4 - core index']
  #allocation1 [shape = 'u32[144,128]{1,0:T(1,128)}', space=vmem, size = 0x12000, scoped, tag = 'internal scratch']
  #allocation2 [shape = 'f32[256,1]{1,0:T(8,128)}', space=vmem, size = 0x20000, scoped, tag = 'scratch operand']
  #allocation3 [shape = 'f32[256,1]{1,0:T(8,128)}', space=vmem, size = 0x20000, scoped, tag = 'scratch operand']
  #allocation4 [shape = 'f32[256,32]{1,0:T(8,128)}', space=vmem, size = 0x20000, scoped, tag = 'scratch operand']
  %s0 = inlined_call_operand.vmem [shape: bf16[2,256,32], index: 0, kind: input, shape index: {}]
  %s1 = inlined_call_operand.vmem [shape: bf16[2,256,32], index: 1, kind: input, shape index: {}]
  %s2 = inlined_call_operand.vmem [shape: bf16[2,256,32], index: 2, kind: input, shape index: {}]
  %s3 = inlined_call_operand.vmem [shape: f32[2,256,32], index: 3, kind: input, shape index: {}]
  %s4 = inlined_call_operand.vmem [shape: bf16[32,32], index: 4, kind: input, shape index: {}]
  %s5 = inlined_call_operand.vmem [shape: f32[1,32], index: 5, kind: input, shape index: {}]
  %s6 = inlined_call_operand.hbm [shape: f32[2,256,32], index: 6, kind: output, shape index: {}]
  %s7 = sld [smem:[#allocation0]]
  $region65: #{attn_block_forward.3} parent=0
    _
  %s9 = ssub.s32 1, %s7
  %s10 = scalar_select 0, %s9, %s7
  $region1: #{attn_block_forward.3} parent=0
    #allocation5 [shape = 'u8[262144]{0}', space=vmem, size = 0x40000, scoped, tag = 'output window, operand 0']
    #allocation6 [shape = 's32[2]{0}', space=sflag, size = 0x8, scoped, tag = 'scoped memory for attn_block_forward.3']
    %11 = vsyncpa [#allocation6], 0
    %s12 = scalar_lea.sflag [#allocation6], 1
    %13 = vsyncpa %s12, 0
    loop: start=0, step=1, limit=4
    $region2: #{attn_block_forward.3} parent=1 // loop_pre_header
      _
    $region3: #{attn_block_forward.3} parent=1 // loop_header
      %s15 = sphi 0, %s19
      %p16 = scmp.ge.s32.totalorder %s15, 4
      %s22 = sphi 0, %s41
      %s23 = sphi 0, %s37
      %s24 = sphi 0, %s33
      %s25 = sphi 0, %s22
      %s26 = sphi 0, %s23
      %s27 = sphi 0, %s24
      %s28 = sphi 0, %s25
      %s29 = sphi 0, %s26
      %s30 = sphi 0, %s27
      %s46 = sphi 0, %s48
      %s49 = sphi 0, %s46
      %s50 = sphi 0, %s49
      %s66 = sphi 0, %s50
      %s74 = sphi 0, %s76
      %s77 = sphi 0, %s74
      %s78 = sphi 0, %s77
      %s94 = sphi 0, %s78
      %s102 = sphi 0, %s104
      %s105 = sphi 0, %s102
      %s106 = sphi 0, %s105
      %s122 = sphi 0, %s106
      %s130 = sphi 0, %s132
      %s133 = sphi 0, %s130
      %s134 = sphi 0, %s133
      %s150 = sphi 0, %s134
      %s154 = sphi 0, %s154
      %s156 = sphi 0, %s154
      %s157 = sphi 0, %s156
      %s171 = sphi 0, %s157
      %s175 = sphi 0, %s175
      %s177 = sphi 0, %s175
      %s178 = sphi 0, %s177
      %s192 = sphi 0, %s178
      %s200 = sphi 0, %s202
      %s203 = sphi 0, %s200
      %s204 = sphi 0, %s203
      %s220 = sphi 0, %s204
    $region4: #{attn_block_forward.3} parent=1 // loop_header_branch
      %18 = sbr.rel (%p16) target = $region8
    $region5: #{attn_block_forward.3} parent=1 // loop_body
      %s20 = ssub.s32 %s15, 1
      %s21 = ssub.s32 %s15, 2
      %s31 = sadd.s32 1, %s24
      %p32 = scmp.ge.s32.totalorder %s31, 1
      %s33 = scalar_select %p32, 0, %s31
      %s34 = sadd.s32 1, %s23
      %s35 = scalar_select %p32, %s34, %s23
      %p36 = scmp.ge.s32.totalorder %s35, 1
      %s37 = scalar_select %p36, 0, %s35
      %s38 = sadd.s32 1, %s22
      %s39 = scalar_select %p36, %s38, %s22
      %p40 = scmp.ge.s32.totalorder %s39, 2
      %s41 = scalar_select %p40, 0, %s39
      %s42 = ssub.s32 %s22, %s41
      %s43 = ssub.s32 %s23, %s37
      %s44 = sor.u32 %s42, %s43
      %p45 = scmp.eq.s32.totalorder %s44, 0
      %s47 = sadd.s32 %s46, 1
      %s48 = scalar_select %p45, %s46, %s47
      %p51 = pneg %p45
      %p52 = scmp.eq.s32.totalorder %s15, 1
      %p53 = por %p51, %p52
      %p54 = scmp.ne.s32.totalorder %s46, %s49
      %p55 = scmp.eq.s32.totalorder %s15, 0
      %p56 = por %p54, %p55
      %p57 = scmp.ne.s32.totalorder %s46, %s49
      %p58 = scmp.eq.s32.totalorder %s20, 1
      %p59 = por %p57, %p58
      %p60 = scmp.ne.s32.totalorder %s49, %s50
      %p61 = scmp.eq.s32.totalorder %s20, 0
      %p62 = por %p60, %p61
      %p63 = scmp.ne.s32.totalorder %s49, %s50
      %p64 = scmp.eq.s32.totalorder %s21, 1
      %p65 = por %p63, %p64
      %p67 = scmp.ne.s32.totalorder %s50, %s66
      %p68 = scmp.eq.s32.totalorder %s21, 0
      %p69 = por %p67, %p68
      %s70 = ssub.s32 %s22, %s41
      %s71 = ssub.s32 %s24, %s33
      %s72 = sor.u32 %s70, %s71
      %p73 = scmp.eq.s32.totalorder %s72, 0
      %s75 = sadd.s32 %s74, 1
      %s76 = scalar_select %p73, %s74, %s75
      %p79 = pneg %p73
      %p80 = scmp.eq.s32.totalorder %s15, 1
      %p81 = por %p79, %p80
      %p82 = scmp.ne.s32.totalorder %s74, %s77
      %p83 = scmp.eq.s32.totalorder %s15, 0
      %p84 = por %p82, %p83
      %p85 = scmp.ne.s32.totalorder %s74, %s77
      %p86 = scmp.eq.s32.totalorder %s20, 1
      %p87 = por %p85, %p86
      %p88 = scmp.ne.s32.totalorder %s77, %s78
      %p89 = scmp.eq.s32.totalorder %s20, 0
      %p90 = por %p88, %p89
      %p91 = scmp.ne.s32.totalorder %s77, %s78
      %p92 = scmp.eq.s32.totalorder %s21, 1
      %p93 = por %p91, %p92
      %p95 = scmp.ne.s32.totalorder %s78, %s94
      %p96 = scmp.eq.s32.totalorder %s21, 0
      %p97 = por %p95, %p96
      %s98 = ssub.s32 %s22, %s41
      %s99 = ssub.s32 %s24, %s33
      %s100 = sor.u32 %s98, %s99
      %p101 = scmp.eq.s32.totalorder %s100, 0
      %s103 = sadd.s32 %s102, 1
      %s104 = scalar_select %p101, %s102, %s103
      %p107 = pneg %p101
      %p108 = scmp.eq.s32.totalorder %s15, 1
      %p109 = por %p107, %p108
      %p110 = scmp.ne.s32.totalorder %s102, %s105
      %p111 = scmp.eq.s32.totalorder %s15, 0
      %p112 = por %p110, %p111
      %p113 = scmp.ne.s32.totalorder %s102, %s105
      %p114 = scmp.eq.s32.totalorder %s20, 1
      %p115 = por %p113, %p114
      %p116 = scmp.ne.s32.totalorder %s105, %s106
      %p117 = scmp.eq.s32.totalorder %s20, 0
      %p118 = por %p116, %p117
      %p119 = scmp.ne.s32.totalorder %s105, %s106
      %p120 = scmp.eq.s32.totalorder %s21, 1
      %p121 = por %p119, %p120
      %p123 = scmp.ne.s32.totalorder %s106, %s122
      %p124 = scmp.eq.s32.totalorder %s21, 0
      %p125 = por %p123, %p124
      %s126 = ssub.s32 %s22, %s41
      %s127 = ssub.s32 %s23, %s37
      %s128 = sor.u32 %s126, %s127
      %p129 = scmp.eq.s32.totalorder %s128, 0
      %s131 = sadd.s32 %s130, 1
      %s132 = scalar_select %p129, %s130, %s131
      %p135 = pneg %p129
      %p136 = scmp.eq.s32.totalorder %s15, 1
      %p137 = por %p135, %p136
      %p138 = scmp.ne.s32.totalorder %s130, %s133
      %p139 = scmp.eq.s32.totalorder %s15, 0
      %p140 = por %p138, %p139
      %p141 = scmp.ne.s32.totalorder %s130, %s133
      %p142 = scmp.eq.s32.totalorder %s20, 1
      %p143 = por %p141, %p142
      %p144 = scmp.ne.s32.totalorder %s133, %s134
      %p145 = scmp.eq.s32.totalorder %s20, 0
      %p146 = por %p144, %p145
      %p147 = scmp.ne.s32.totalorder %s133, %s134
      %p148 = scmp.eq.s32.totalorder %s21, 1
      %p149 = por %p147, %p148
      %p151 = scmp.ne.s32.totalorder %s134, %s150
      %p152 = scmp.eq.s32.totalorder %s21, 0
      %p153 = por %p151, %p152
      %s155 = sadd.s32 %s154, 1
      %p158 = scmp.eq.s32.totalorder %s15, 1
      %p159 = scmp.ne.s32.totalorder %s154, %s156
      %p160 = scmp.eq.s32.totalorder %s15, 0
      %p161 = por %p159, %p160
      %p162 = scmp.ne.s32.totalorder %s154, %s156
      %p163 = scmp.eq.s32.totalorder %s20, 1
      %p164 = por %p162, %p163
      %p165 = scmp.ne.s32.totalorder %s156, %s157
      %p166 = scmp.eq.s32.totalorder %s20, 0
      %p167 = por %p165, %p166
      %p168 = scmp.ne.s32.totalorder %s156, %s157
      %p169 = scmp.eq.s32.totalorder %s21, 1
      %p170 = por %p168, %p169
      %p172 = scmp.ne.s32.totalorder %s157, %s171
      %p173 = scmp.eq.s32.totalorder %s21, 0
      %p174 = por %p172, %p173
      %s176 = sadd.s32 %s175, 1
      %p179 = scmp.eq.s32.totalorder %s15, 1
      %p180 = scmp.ne.s32.totalorder %s175, %s177
      %p181 = scmp.eq.s32.totalorder %s15, 0
      %p182 = por %p180, %p181
      %p183 = scmp.ne.s32.totalorder %s175, %s177
      %p184 = scmp.eq.s32.totalorder %s20, 1
      %p185 = por %p183, %p184
      %p186 = scmp.ne.s32.totalorder %s177, %s178
      %p187 = scmp.eq.s32.totalorder %s20, 0
      %p188 = por %p186, %p187
      %p189 = scmp.ne.s32.totalorder %s177, %s178
      %p190 = scmp.eq.s32.totalorder %s21, 1
      %p191 = por %p189, %p190
      %p193 = scmp.ne.s32.totalorder %s178, %s192
      %p194 = scmp.eq.s32.totalorder %s21, 0
      %p195 = por %p193, %p194
      %s196 = ssub.s32 %s22, %s41
      %s197 = ssub.s32 %s23, %s37
      %s198 = sor.u32 %s196, %s197
      %p199 = scmp.eq.s32.totalorder %s198, 0
      %s201 = sadd.s32 %s200, 1
      %s202 = scalar_select %p199, %s200, %s201
      %p205 = pneg %p199
      %p206 = scmp.eq.s32.totalorder %s15, 1
      %p207 = por %p205, %p206
      %p208 = scmp.ne.s32.totalorder %s200, %s203
      %p209 = scmp.eq.s32.totalorder %s15, 0
      %p210 = por %p208, %p209
      %p211 = scmp.ne.s32.totalorder %s200, %s203
      %p212 = scmp.eq.s32.totalorder %s20, 1
      %p213 = por %p211, %p212
      %p214 = scmp.ne.s32.totalorder %s203, %s204
      %p215 = scmp.eq.s32.totalorder %s20, 0
      %p216 = por %p214, %p215
      %p217 = scmp.ne.s32.totalorder %s203, %s204
      %p218 = scmp.eq.s32.totalorder %s21, 1
      %p219 = por %p217, %p218
      %p221 = scmp.ne.s32.totalorder %s204, %s220
      %p222 = scmp.eq.s32.totalorder %s21, 0
      %p223 = por %p221, %p222
      %p224 = scmp.le.s32.totalorder 1, %s15
      %p225 = scmp.lt.s32.totalorder %s15, 3
      %p226 = pnand %p224, %p225
      %p227 = pneg %p226
      // Predicated region
      $region9: #{attn_block_forward.3} parent=5 // pred_check
        _
      $region10: #{attn_block_forward.3} parent=5 // pred_check_branch
        %229 = sbr.rel (%p226) target = $region12
      $region11: #{attn_block_forward.3} parent=5 // pred_region
        %s230 = ssub.s32 %s15, 1
        // Predicated region
        $region13: #{attn_block_forward.3} parent=11 // pred_check
          %p231 = pneg %p167
        $region14: #{attn_block_forward.3} parent=11 // pred_check_branch
          %233 = sbr.rel (%p231) target = $region16
        $region15: #{attn_block_forward.3} parent=11 // pred_region
          _
        $region16: #{attn_block_forward.3} parent=11 // pred_fallthru
          _
        // Predicated region
        $region17: #{attn_block_forward.3} parent=11 // pred_check
          %p234 = pneg %p188
        $region18: #{attn_block_forward.3} parent=11 // pred_check_branch
          %236 = sbr.rel (%p234) target = $region20
        $region19: #{attn_block_forward.3} parent=11 // pred_region
          _
        $region20: #{attn_block_forward.3} parent=11 // pred_fallthru
          _
      $region12: #{attn_block_forward.3} parent=5 // pred_fallthru
        _
      %p237 = scmp.lt.s32.totalorder %s15, 2
      // Predicated region
      $region21: #{attn_block_forward.3} parent=5 // pred_check
        %p238 = pneg %p237
      $region22: #{attn_block_forward.3} parent=5 // pred_check_branch
        %240 = sbr.rel (%p238) target = $region24
      $region23: #{attn_block_forward.3} parent=5 // pred_region
        // Predicated region
        $region25: #{attn_block_forward.3} parent=23 // pred_check
          %p241 = pneg %p56
        $region26: #{attn_block_forward.3} parent=23 // pred_check_branch
          %243 = sbr.rel (%p241) target = $region28
        $region27: #{attn_block_forward.3} parent=23 // pred_region
          %s244 = smul.u32 32, %s23
          %p245 = scmp.lt.s32.totalorder %s22, 1
          %s246 = scalar_select %p245, %s22, 1
          %p247 = scmp.lt.s32.totalorder %s244, 31
          %s248 = scalar_select %p247, %s244, 31
          %s249 = smul.addr %s246, 32
          %s250 = sadd.s32 %s248, %s249
          %s251 = smul.addr %s250, 4
          %s252 = scalar_lea.vmem %s0, %s251
          %s253 = smul.u32 32, %s23
        $region28: #{attn_block_forward.3} parent=23 // pred_fallthru
          _
        // Predicated region
        $region29: #{attn_block_forward.3} parent=23 // pred_check
          %p254 = pneg %p84
        $region30: #{attn_block_forward.3} parent=23 // pred_check_branch
          %256 = sbr.rel (%p254) target = $region32
        $region31: #{attn_block_forward.3} parent=23 // pred_region
          %s257 = smul.u32 32, %s24
          %p258 = scmp.lt.s32.totalorder %s22, 1
          %s259 = scalar_select %p258, %s22, 1
          %p260 = scmp.lt.s32.totalorder %s257, 31
          %s261 = scalar_select %p260, %s257, 31
          %s262 = smul.addr %s259, 32
          %s263 = sadd.s32 %s261, %s262
          %s264 = smul.addr %s263, 4
          %s265 = scalar_lea.vmem %s1, %s264
          %s266 = smul.u32 32, %s24
        $region32: #{attn_block_forward.3} parent=23 // pred_fallthru
          _
        // Predicated region
        $region33: #{attn_block_forward.3} parent=23 // pred_check
          %p267 = pneg %p112
        $region34: #{attn_block_forward.3} parent=23 // pred_check_branch
          %269 = sbr.rel (%p267) target = $region36
        $region35: #{attn_block_forward.3} parent=23 // pred_region
          %s270 = smul.u32 32, %s24
          %p271 = scmp.lt.s32.totalorder %s22, 1
          %s272 = scalar_select %p271, %s22, 1
          %p273 = scmp.lt.s32.totalorder %s270, 31
          %s274 = scalar_select %p273, %s270, 31
          %s275 = smul.addr %s272, 32
          %s276 = sadd.s32 %s274, %s275
          %s277 = smul.addr %s276, 4
          %s278 = scalar_lea.vmem %s2, %s277
          %s279 = smul.u32 32, %s24
        $region36: #{attn_block_forward.3} parent=23 // pred_fallthru
          _
        // Predicated region
        $region37: #{attn_block_forward.3} parent=23 // pred_check
          %p280 = pneg %p140
        $region38: #{attn_block_forward.3} parent=23 // pred_check_branch
          %282 = sbr.rel (%p280) target = $region40
        $region39: #{attn_block_forward.3} parent=23 // pred_region
          %s283 = smul.u32 32, %s23
          %p284 = scmp.lt.s32.totalorder %s22, 1
          %s285 = scalar_select %p284, %s22, 1
          %p286 = scmp.lt.s32.totalorder %s283, 31
          %s287 = scalar_select %p286, %s283, 31
          %s288 = smul.addr %s285, 32
          %s289 = sadd.s32 %s287, %s288
          %s290 = smul.addr %s289, 8
          %s291 = scalar_lea.vmem %s3, %s290
          %s292 = smul.u32 32, %s23
        $region40: #{attn_block_forward.3} parent=23 // pred_fallthru
          _
      $region24: #{attn_block_forward.3} parent=5 // pred_fallthru
        _
      %p293 = scmp.le.s32.totalorder 1, %s15
      %p294 = scmp.lt.s32.totalorder %s15, 3
      %p295 = pnand %p293, %p294
      %p296 = pneg %p295
      // Predicated region
      $region41: #{attn_block_forward.3} parent=5 // pred_check
        _
      $region42: #{attn_block_forward.3} parent=5 // pred_check_branch
        %298 = sbr.rel (%p295) target = $region44
      $region43: #{attn_block_forward.3} parent=5 // pred_region
        %s299 = ssub.s32 %s15, 1
        %s300 = smul.u32 32, %s26
        %p301 = scmp.lt.s32.totalorder %s25, 1
        %s302 = scalar_select %p301, %s25, 1
        %p303 = scmp.lt.s32.totalorder %s300, 31
        %s304 = scalar_select %p303, %s300, 31
        %s305 = smul.addr %s302, 32
        %s306 = sadd.s32 %s304, %s305
        %s307 = smul.addr %s306, 4
        %s308 = scalar_lea.vmem %s0, %s307
        %p309 = pneg %p62
        %p310 = pneg %p59
        %s311 = smul.u32 32, %s27
        %p312 = scmp.lt.s32.totalorder %s25, 1
        %s313 = scalar_select %p312, %s25, 1
        %p314 = scmp.lt.s32.totalorder %s311, 31
        %s315 = scalar_select %p314, %s311, 31
        %s316 = smul.addr %s313, 32
        %s317 = sadd.s32 %s315, %s316
        %s318 = smul.addr %s317, 4
        %s319 = scalar_lea.vmem %s1, %s318
        %p320 = pneg %p90
        %p321 = pneg %p87
        %s322 = smul.u32 32, %s27
        %p323 = scmp.lt.s32.totalorder %s25, 1
        %s324 = scalar_select %p323, %s25, 1
        %p325 = scmp.lt.s32.totalorder %s322, 31
        %s326 = scalar_select %p325, %s322, 31
        %s327 = smul.addr %s324, 32
        %s328 = sadd.s32 %s326, %s327
        %s329 = smul.addr %s328, 4
        %s330 = scalar_lea.vmem %s2, %s329
        %p331 = pneg %p118
        %p332 = pneg %p115
        %s333 = smul.u32 32, %s26
        %p334 = scmp.lt.s32.totalorder %s25, 1
        %s335 = scalar_select %p334, %s25, 1
        %p336 = scmp.lt.s32.totalorder %s333, 31
        %s337 = scalar_select %p336, %s333, 31
        %s338 = smul.addr %s335, 32
        %s339 = sadd.s32 %s337, %s338
        %s340 = smul.addr %s339, 8
        %s341 = scalar_lea.vmem %s3, %s340
        %p342 = pneg %p146
        %p343 = pneg %p143
        %p344 = pneg %p167
        %p345 = pneg %p164
        %p346 = pneg %p188
        %p347 = pneg %p185
        %p348 = pneg %p216
        %p349 = pneg %p213
        %s350 = sand.u32 %s203, 1
        %s351 = scalar_lea.sflag [#allocation6], %s350
        %s352 = sand.u32 %s203, 1
        %s353 = smul.addr %s352, 256
        %s354 = scalar_lea.vmem [#allocation5], %s353
        %s355 = smul.u32 32, %s26
        %p356 = scmp.lt.s32.totalorder %s25, 1
        %s357 = scalar_select %p356, %s25, 1
        %p358 = scmp.lt.s32.totalorder %s355, 31
        %s359 = scalar_select %p358, %s355, 31
        %s360 = smul.addr %s357, 32
        %s361 = sadd.s32 %s359, %s360
        %s362 = smul.addr %s361, 4
        %s363 = scalar_lea.vmem %s0, %s362
        %s364 = smul.u32 32, %s26
        %s365 = smul.u32 32, %s27
        %p366 = scmp.lt.s32.totalorder %s25, 1
        %s367 = scalar_select %p366, %s25, 1
        %p368 = scmp.lt.s32.totalorder %s365, 31
        %s369 = scalar_select %p368, %s365, 31
        %s370 = smul.addr %s367, 32
        %s371 = sadd.s32 %s369, %s370
        %s372 = smul.addr %s371, 4
        %s373 = scalar_lea.vmem %s1, %s372
        %s374 = smul.u32 32, %s27
        %s375 = smul.u32 32, %s27
        %p376 = scmp.lt.s32.totalorder %s25, 1
        %s377 = scalar_select %p376, %s25, 1
        %p378 = scmp.lt.s32.totalorder %s375, 31
        %s379 = scalar_select %p378, %s375, 31
        %s380 = smul.addr %s377, 32
        %s381 = sadd.s32 %s379, %s380
        %s382 = smul.addr %s381, 4
        %s383 = scalar_lea.vmem %s2, %s382
        %s384 = smul.u32 32, %s27
        %s385 = smul.u32 32, %s26
        %p386 = scmp.lt.s32.totalorder %s25, 1
        %s387 = scalar_select %p386, %s25, 1
        %p388 = scmp.lt.s32.totalorder %s385, 31
        %s389 = scalar_select %p388, %s385, 31
        %s390 = smul.addr %s387, 32
        %s391 = sadd.s32 %s389, %s390
        %s392 = smul.addr %s391, 8
        %s393 = scalar_lea.vmem %s3, %s392
        %s394 = smul.u32 32, %s26
        %s395 = smul.u32 32, %s26
        %p397 = scmp.eq.s32.totalorder %s27, 0
        // Predicated region
        $region45: #{attn_block_forward.3} parent=43 // pred_check
          %p398 = pneg %p397
        $region46: #{attn_block_forward.3} parent=43 // pred_check_branch
          %400 = sbr.rel (%p398) target = $region48
        $region47: #{attn_block_forward.3} parent=43 // pred_region
          %vm401 = vcmask 7168
          %402 = vst.msk [vmem:[#allocation2] sm:$0xff] %vm401, -inf
          %403 = vst.msk [vmem:[#allocation2 + $0x8] sm:$0xff] %vm401, -inf
          %404 = vst.msk [vmem:[#allocation2 + $0x10] sm:$0xff] %vm401, -inf
          %405 = vst.msk [vmem:[#allocation2 + $0x18] sm:$0xff] %vm401, -inf
          %406 = vst.msk [vmem:[#allocation2 + $0x20] sm:$0xff] %vm401, -inf
          %407 = vst.msk [vmem:[#allocation2 + $0x28] sm:$0xff] %vm401, -inf
          %408 = vst.msk [vmem:[#allocation2 + $0x30] sm:$0xff] %vm401, -inf
          %409 = vst.msk [vmem:[#allocation2 + $0x38] sm:$0xff] %vm401, -inf
          %410 = vst.msk [vmem:[#allocation2 + $0x40] sm:$0xff] %vm401, -inf
          %411 = vst.msk [vmem:[#allocation2 + $0x48] sm:$0xff] %vm401, -inf
          %412 = vst.msk [vmem:[#allocation2 + $0x50] sm:$0xff] %vm401, -inf
          %413 = vst.msk [vmem:[#allocation2 + $0x58] sm:$0xff] %vm401, -inf
          %414 = vst.msk [vmem:[#allocation2 + $0x60] sm:$0xff] %vm401, -inf
          %415 = vst.msk [vmem:[#allocation2 + $0x68] sm:$0xff] %vm401, -inf
          %416 = vst.msk [vmem:[#allocation2 + $0x70] sm:$0xff] %vm401, -inf
          %417 = vst.msk [vmem:[#allocation2 + $0x78] sm:$0xff] %vm401, -inf
          %418 = vst.msk [vmem:[#allocation2 + $0x80] sm:$0xff] %vm401, -inf
          %419 = vst.msk [vmem:[#allocation2 + $0x88] sm:$0xff] %vm401, -inf
          %420 = vst.msk [vmem:[#allocation2 + $0x90] sm:$0xff] %vm401, -inf
          %421 = vst.msk [vmem:[#allocation2 + $0x98] sm:$0xff] %vm401, -inf
          %422 = vst.msk [vmem:[#allocation2 + $0xa0] sm:$0xff] %vm401, -inf
          %423 = vst.msk [vmem:[#allocation2 + $0xa8] sm:$0xff] %vm401, -inf
          %424 = vst.msk [vmem:[#allocation2 + $0xb0] sm:$0xff] %vm401, -inf
          %425 = vst.msk [vmem:[#allocation2 + $0xb8] sm:$0xff] %vm401, -inf
          %426 = vst.msk [vmem:[#allocation2 + $0xc0] sm:$0xff] %vm401, -inf
          %427 = vst.msk [vmem:[#allocation2 + $0xc8] sm:$0xff] %vm401, -inf
          %428 = vst.msk [vmem:[#allocation2 + $0xd0] sm:$0xff] %vm401, -inf
          %429 = vst.msk [vmem:[#allocation2 + $0xd8] sm:$0xff] %vm401, -inf
          %430 = vst.msk [vmem:[#allocation2 + $0xe0] sm:$0xff] %vm401, -inf
          %431 = vst.msk [vmem:[#allocation2 + $0xe8] sm:$0xff] %vm401, -inf
          %432 = vst.msk [vmem:[#allocation2 + $0xf0] sm:$0xff] %vm401, -inf
          %433 = vst.msk [vmem:[#allocation2 + $0xf8] sm:$0xff] %vm401, -inf
          %434 = vst.msk [vmem:[#allocation3] sm:$0xff] %vm401, 0.0
          %435 = vst.msk [vmem:[#allocation3 + $0x8] sm:$0xff] %vm401, 0.0
          %436 = vst.msk [vmem:[#allocation3 + $0x10] sm:$0xff] %vm401, 0.0
          %437 = vst.msk [vmem:[#allocation3 + $0x18] sm:$0xff] %vm401, 0.0
          %438 = vst.msk [vmem:[#allocation3 + $0x20] sm:$0xff] %vm401, 0.0
          %439 = vst.msk [vmem:[#allocation3 + $0x28] sm:$0xff] %vm401, 0.0
          %440 = vst.msk [vmem:[#allocation3 + $0x30] sm:$0xff] %vm401, 0.0
          %441 = vst.msk [vmem:[#allocation3 + $0x38] sm:$0xff] %vm401, 0.0
          %442 = vst.msk [vmem:[#allocation3 + $0x40] sm:$0xff] %vm401, 0.0
          %443 = vst.msk [vmem:[#allocation3 + $0x48] sm:$0xff] %vm401, 0.0
          %444 = vst.msk [vmem:[#allocation3 + $0x50] sm:$0xff] %vm401, 0.0
          %445 = vst.msk [vmem:[#allocation3 + $0x58] sm:$0xff] %vm401, 0.0
          %446 = vst.msk [vmem:[#allocation3 + $0x60] sm:$0xff] %vm401, 0.0
          %447 = vst.msk [vmem:[#allocation3 + $0x68] sm:$0xff] %vm401, 0.0
          %448 = vst.msk [vmem:[#allocation3 + $0x70] sm:$0xff] %vm401, 0.0
          %449 = vst.msk [vmem:[#allocation3 + $0x78] sm:$0xff] %vm401, 0.0
          %450 = vst.msk [vmem:[#allocation3 + $0x80] sm:$0xff] %vm401, 0.0
          %451 = vst.msk [vmem:[#allocation3 + $0x88] sm:$0xff] %vm401, 0.0
          %452 = vst.msk [vmem:[#allocation3 + $0x90] sm:$0xff] %vm401, 0.0
          %453 = vst.msk [vmem:[#allocation3 + $0x98] sm:$0xff] %vm401, 0.0
          %454 = vst.msk [vmem:[#allocation3 + $0xa0] sm:$0xff] %vm401, 0.0
          %455 = vst.msk [vmem:[#allocation3 + $0xa8] sm:$0xff] %vm401, 0.0
          %456 = vst.msk [vmem:[#allocation3 + $0xb0] sm:$0xff] %vm401, 0.0
          %457 = vst.msk [vmem:[#allocation3 + $0xb8] sm:$0xff] %vm401, 0.0
          %458 = vst.msk [vmem:[#allocation3 + $0xc0] sm:$0xff] %vm401, 0.0
          %459 = vst.msk [vmem:[#allocation3 + $0xc8] sm:$0xff] %vm401, 0.0
          %460 = vst.msk [vmem:[#allocation3 + $0xd0] sm:$0xff] %vm401, 0.0
          %461 = vst.msk [vmem:[#allocation3 + $0xd8] sm:$0xff] %vm401, 0.0
          %462 = vst.msk [vmem:[#allocation3 + $0xe0] sm:$0xff] %vm401, 0.0
          %463 = vst.msk [vmem:[#allocation3 + $0xe8] sm:$0xff] %vm401, 0.0
          %464 = vst.msk [vmem:[#allocation3 + $0xf0] sm:$0xff] %vm401, 0.0
          %465 = vst.msk [vmem:[#allocation3 + $0xf8] sm:$0xff] %vm401, 0.0
          %vm466 = vcmask 261120
          %467 = vst.msk [vmem:[#allocation4] sm:$0xff] %vm466, 0.0
          %468 = vst.msk [vmem:[#allocation4 + $0x8] sm:$0xff] %vm466, 0.0
          %469 = vst.msk [vmem:[#allocation4 + $0x10] sm:$0xff] %vm466, 0.0
          %470 = vst.msk [vmem:[#allocation4 + $0x18] sm:$0xff] %vm466, 0.0
          %471 = vst.msk [vmem:[#allocation4 + $0x20] sm:$0xff] %vm466, 0.0
          %472 = vst.msk [vmem:[#allocation4 + $0x28] sm:$0xff] %vm466, 0.0
          %473 = vst.msk [vmem:[#allocation4 + $0x30] sm:$0xff] %vm466, 0.0
          %474 = vst.msk [vmem:[#allocation4 + $0x38] sm:$0xff] %vm466, 0.0
          %475 = vst.msk [vmem:[#allocation4 + $0x40] sm:$0xff] %vm466, 0.0
          %476 = vst.msk [vmem:[#allocation4 + $0x48] sm:$0xff] %vm466, 0.0
          %477 = vst.msk [vmem:[#allocation4 + $0x50] sm:$0xff] %vm466, 0.0
          %478 = vst.msk [vmem:[#allocation4 + $0x58] sm:$0xff] %vm466, 0.0
          %479 = vst.msk [vmem:[#allocation4 + $0x60] sm:$0xff] %vm466, 0.0
          %480 = vst.msk [vmem:[#allocation4 + $0x68] sm:$0xff] %vm466, 0.0
          %481 = vst.msk [vmem:[#allocation4 + $0x70] sm:$0xff] %vm466, 0.0
          %482 = vst.msk [vmem:[#allocation4 + $0x78] sm:$0xff] %vm466, 0.0
          %483 = vst.msk [vmem:[#allocation4 + $0x80] sm:$0xff] %vm466, 0.0
          %484 = vst.msk [vmem:[#allocation4 + $0x88] sm:$0xff] %vm466, 0.0
          %485 = vst.msk [vmem:[#allocation4 + $0x90] sm:$0xff] %vm466, 0.0
          %486 = vst.msk [vmem:[#allocation4 + $0x98] sm:$0xff] %vm466, 0.0
          %487 = vst.msk [vmem:[#allocation4 + $0xa0] sm:$0xff] %vm466, 0.0
          %488 = vst.msk [vmem:[#allocation4 + $0xa8] sm:$0xff] %vm466, 0.0
          %489 = vst.msk [vmem:[#allocation4 + $0xb0] sm:$0xff] %vm466, 0.0
          %490 = vst.msk [vmem:[#allocation4 + $0xb8] sm:$0xff] %vm466, 0.0
          %491 = vst.msk [vmem:[#allocation4 + $0xc0] sm:$0xff] %vm466, 0.0
          %492 = vst.msk [vmem:[#allocation4 + $0xc8] sm:$0xff] %vm466, 0.0
          %493 = vst.msk [vmem:[#allocation4 + $0xd0] sm:$0xff] %vm466, 0.0
          %494 = vst.msk [vmem:[#allocation4 + $0xd8] sm:$0xff] %vm466, 0.0
          %495 = vst.msk [vmem:[#allocation4 + $0xe0] sm:$0xff] %vm466, 0.0
          %496 = vst.msk [vmem:[#allocation4 + $0xe8] sm:$0xff] %vm466, 0.0
          %497 = vst.msk [vmem:[#allocation4 + $0xf0] sm:$0xff] %vm466, 0.0
          %498 = vst.msk [vmem:[#allocation4 + $0xf8] sm:$0xff] %vm466, 0.0
        $region48: #{attn_block_forward.3} parent=43 // pred_fallthru
          _
        %v499 = vld [vmem:[%s363] sm:$0xf]
        %v500 = vld [vmem:[%s363 + $0x4] sm:$0xf]
        %v501 = vld [vmem:[%s363 + $0x8] sm:$0xf]
        %v502 = vld [vmem:[%s363 + $0xc] sm:$0xf]
        %v503 = vld [vmem:[%s363 + $0x10] sm:$0xf]
        %v504 = vld [vmem:[%s363 + $0x14] sm:$0xf]
        %v505 = vld [vmem:[%s363 + $0x18] sm:$0xf]
        %v506 = vld [vmem:[%s363 + $0x1c] sm:$0xf]
        %v507 = vld [vmem:[%s363 + $0x20] sm:$0xf]
        %v508 = vld [vmem:[%s363 + $0x24] sm:$0xf]
        %v509 = vld [vmem:[%s363 + $0x28] sm:$0xf]
        %v510 = vld [vmem:[%s363 + $0x2c] sm:$0xf]
        %v511 = vld [vmem:[%s363 + $0x30] sm:$0xf]
        %v512 = vld [vmem:[%s363 + $0x34] sm:$0xf]
        %v513 = vld [vmem:[%s363 + $0x38] sm:$0xf]
        %v514 = vld [vmem:[%s363 + $0x3c] sm:$0xf]
        %v515 = vld [vmem:[%s363 + $0x40] sm:$0xf]
        %v516 = vld [vmem:[%s363 + $0x44] sm:$0xf]
        %v517 = vld [vmem:[%s363 + $0x48] sm:$0xf]
        %v518 = vld [vmem:[%s363 + $0x4c] sm:$0xf]
        %v519 = vld [vmem:[%s363 + $0x50] sm:$0xf]
        %v520 = vld [vmem:[%s363 + $0x54] sm:$0xf]
        %v521 = vld [vmem:[%s363 + $0x58] sm:$0xf]
        %v522 = vld [vmem:[%s363 + $0x5c] sm:$0xf]
        %v523 = vld [vmem:[%s363 + $0x60] sm:$0xf]
        %v524 = vld [vmem:[%s363 + $0x64] sm:$0xf]
        %v525 = vld [vmem:[%s363 + $0x68] sm:$0xf]
        %v526 = vld [vmem:[%s363 + $0x6c] sm:$0xf]
        %v527 = vld [vmem:[%s363 + $0x70] sm:$0xf]
        %v528 = vld [vmem:[%s363 + $0x74] sm:$0xf]
        %v529 = vld [vmem:[%s363 + $0x78] sm:$0xf]
        %v530 = vld [vmem:[%s363 + $0x7c] sm:$0xf]
        %v531 = vld [vmem:[%s373] sm:$0xf]
        %v532 = vld [vmem:[%s373 + $0x4] sm:$0xf]
        %v533 = vld [vmem:[%s373 + $0x8] sm:$0xf]
        %v534 = vld [vmem:[%s373 + $0xc] sm:$0xf]
        %v535 = vld [vmem:[%s373 + $0x10] sm:$0xf]
        %v536 = vld [vmem:[%s373 + $0x14] sm:$0xf]
        %v537 = vld [vmem:[%s373 + $0x18] sm:$0xf]
        %v538 = vld [vmem:[%s373 + $0x1c] sm:$0xf]
        %v539 = vld [vmem:[%s373 + $0x20] sm:$0xf]
        %v540 = vld [vmem:[%s373 + $0x24] sm:$0xf]
        %v541 = vld [vmem:[%s373 + $0x28] sm:$0xf]
        %v542 = vld [vmem:[%s373 + $0x2c] sm:$0xf]
        %v543 = vld [vmem:[%s373 + $0x30] sm:$0xf]
        %v544 = vld [vmem:[%s373 + $0x34] sm:$0xf]
        %v545 = vld [vmem:[%s373 + $0x38] sm:$0xf]
        %v546 = vld [vmem:[%s373 + $0x3c] sm:$0xf]
        %v547 = vld [vmem:[%s373 + $0x40] sm:$0xf]
        %v548 = vld [vmem:[%s373 + $0x44] sm:$0xf]
        %v549 = vld [vmem:[%s373 + $0x48] sm:$0xf]
        %v550 = vld [vmem:[%s373 + $0x4c] sm:$0xf]
        %v551 = vld [vmem:[%s373 + $0x50] sm:$0xf]
        %v552 = vld [vmem:[%s373 + $0x54] sm:$0xf]
        %v553 = vld [vmem:[%s373 + $0x58] sm:$0xf]
        %v554 = vld [vmem:[%s373 + $0x5c] sm:$0xf]
        %v555 = vld [vmem:[%s373 + $0x60] sm:$0xf]
        %v556 = vld [vmem:[%s373 + $0x64] sm:$0xf]
        %v557 = vld [vmem:[%s373 + $0x68] sm:$0xf]
        %v558 = vld [vmem:[%s373 + $0x6c] sm:$0xf]
        %v559 = vld [vmem:[%s373 + $0x70] sm:$0xf]
        %v560 = vld [vmem:[%s373 + $0x74] sm:$0xf]
        %v561 = vld [vmem:[%s373 + $0x78] sm:$0xf]
        %v562 = vld [vmem:[%s373 + $0x7c] sm:$0xf]
        %v595 = vunpack.c.l.b16 %v499
        %v596 = vunpack.c.l.b16 %v500
        %v597 = vunpack.c.l.b16 %v501
        %v598 = vunpack.c.l.b16 %v502
        %v599 = vunpack.c.l.b16 %v503
        %v600 = vunpack.c.l.b16 %v504
        %v601 = vunpack.c.l.b16 %v505
        %v602 = vunpack.c.l.b16 %v506
        %v603 = vunpack.c.l.b16 %v507
        %v604 = vunpack.c.l.b16 %v508
        %v605 = vunpack.c.l.b16 %v509
        %v606 = vunpack.c.l.b16 %v510
        %v607 = vunpack.c.l.b16 %v511
        %v608 = vunpack.c.l.b16 %v512
        %v609 = vunpack.c.l.b16 %v513
        %v610 = vunpack.c.l.b16 %v514
        %v611 = vunpack.c.l.b16 %v515
        %v612 = vunpack.c.l.b16 %v516
        %v613 = vunpack.c.l.b16 %v517
        %v614 = vunpack.c.l.b16 %v518
        %v615 = vunpack.c.l.b16 %v519
        %v616 = vunpack.c.l.b16 %v520
        %v617 = vunpack.c.l.b16 %v521
        %v618 = vunpack.c.l.b16 %v522
        %v619 = vunpack.c.l.b16 %v523
        %v620 = vunpack.c.l.b16 %v524
        %v621 = vunpack.c.l.b16 %v525
        %v622 = vunpack.c.l.b16 %v526
        %v623 = vunpack.c.l.b16 %v527
        %v624 = vunpack.c.l.b16 %v528
        %v625 = vunpack.c.l.b16 %v529
        %v626 = vunpack.c.l.b16 %v530
        %v627 = vpack.c.b16 %v596, %v595
        %v628 = vpack.c.b16 %v598, %v597
        %v629 = vpack.c.b16 %v600, %v599
        %v630 = vpack.c.b16 %v602, %v601
        %v631 = vpack.c.b16 %v604, %v603
        %v632 = vpack.c.b16 %v606, %v605
        %v633 = vpack.c.b16 %v608, %v607
        %v634 = vpack.c.b16 %v610, %v609
        %v635 = vpack.c.b16 %v612, %v611
        %v636 = vpack.c.b16 %v614, %v613
        %v637 = vpack.c.b16 %v616, %v615
        %v638 = vpack.c.b16 %v618, %v617
        %v639 = vpack.c.b16 %v620, %v619
        %v640 = vpack.c.b16 %v622, %v621
        %v641 = vpack.c.b16 %v624, %v623
        %v642 = vpack.c.b16 %v626, %v625
        %v675 = vunpack.c.l.b16 %v531
        %v676 = vunpack.c.l.b16 %v532
        %v677 = vunpack.c.l.b16 %v533
        %v678 = vunpack.c.l.b16 %v534
        %v679 = vunpack.c.l.b16 %v535
        %v680 = vunpack.c.l.b16 %v536
        %v681 = vunpack.c.l.b16 %v537
        %v682 = vunpack.c.l.b16 %v538
        %v683 = vunpack.c.l.b16 %v539
        %v684 = vunpack.c.l.b16 %v540
        %v685 = vunpack.c.l.b16 %v541
        %v686 = vunpack.c.l.b16 %v542
        %v687 = vunpack.c.l.b16 %v543
        %v688 = vunpack.c.l.b16 %v544
        %v689 = vunpack.c.l.b16 %v545
        %v690 = vunpack.c.l.b16 %v546
        %v691 = vunpack.c.l.b16 %v547
        %v692 = vunpack.c.l.b16 %v548
        %v693 = vunpack.c.l.b16 %v549
        %v694 = vunpack.c.l.b16 %v550
        %v695 = vunpack.c.l.b16 %v551
        %v696 = vunpack.c.l.b16 %v552
        %v697 = vunpack.c.l.b16 %v553
        %v698 = vunpack.c.l.b16 %v554
        %v699 = vunpack.c.l.b16 %v555
        %v700 = vunpack.c.l.b16 %v556
        %v701 = vunpack.c.l.b16 %v557
        %v702 = vunpack.c.l.b16 %v558
        %v703 = vunpack.c.l.b16 %v559
        %v704 = vunpack.c.l.b16 %v560
        %v705 = vunpack.c.l.b16 %v561
        %v706 = vunpack.c.l.b16 %v562
        %v707 = vpack.c.b16 %v676, %v675
        %v708 = vpack.c.b16 %v678, %v677
        %v709 = vpack.c.b16 %v680, %v679
        %v710 = vpack.c.b16 %v682, %v681
        %v711 = vpack.c.b16 %v684, %v683
        %v712 = vpack.c.b16 %v686, %v685
        %v713 = vpack.c.b16 %v688, %v687
        %v714 = vpack.c.b16 %v690, %v689
        %v715 = vpack.c.b16 %v692, %v691
        %v716 = vpack.c.b16 %v694, %v693
        %v717 = vpack.c.b16 %v696, %v695
        %v718 = vpack.c.b16 %v698, %v697
        %v719 = vpack.c.b16 %v700, %v699
        %v720 = vpack.c.b16 %v702, %v701
        %v721 = vpack.c.b16 %v704, %v703
        %v722 = vpack.c.b16 %v706, %v705
        %vm723 = vcmask 261120
        %v725 = vsel %vm723, %v627, 0
        %v728 = vsel %vm723, %v628, 0
        %v731 = vsel %vm723, %v629, 0
        %v734 = vsel %vm723, %v630, 0
        %v737 = vsel %vm723, %v631, 0
        %v740 = vsel %vm723, %v632, 0
        %v743 = vsel %vm723, %v633, 0
        %v746 = vsel %vm723, %v634, 0
        %v749 = vsel %vm723, %v635, 0
        %v752 = vsel %vm723, %v636, 0
        %v755 = vsel %vm723, %v637, 0
        %v758 = vsel %vm723, %v638, 0
        %v761 = vsel %vm723, %v639, 0
        %v764 = vsel %vm723, %v640, 0
        %v767 = vsel %vm723, %v641, 0
        %v770 = vsel %vm723, %v642, 0
        %v773 = vsel %vm723, %v707, 0
        %v776 = vsel %vm723, %v708, 0
        %v779 = vsel %vm723, %v709, 0
        %v782 = vsel %vm723, %v710, 0
        %v785 = vsel %vm723, %v711, 0
        %v788 = vsel %vm723, %v712, 0
        %v791 = vsel %vm723, %v713, 0
        %v794 = vsel %vm723, %v714, 0
        %v797 = vsel %vm723, %v715, 0
        %v800 = vsel %vm723, %v716, 0
        %v803 = vsel %vm723, %v717, 0
        %v806 = vsel %vm723, %v718, 0
        %v809 = vsel %vm723, %v719, 0
        %v812 = vsel %vm723, %v720, 0
        %v815 = vsel %vm723, %v721, 0
        %v818 = vsel %vm723, %v722, 0
        %820 = vmatprep.subr.bf16.mxu0 0
        %821 = vmatpush1.bf16.xpose.msra.mxu0 %v773
        %822 = vmatprep.subr.bf16.mxu0 0
        %823 = vmatpush1.bf16.xpose.msra.mxu0 %v776
        %824 = vmatprep.subr.bf16.mxu0 0
        %825 = vmatpush1.bf16.xpose.msra.mxu0 %v779
        %826 = vmatprep.subr.bf16.mxu0 0
        %827 = vmatpush1.bf16.xpose.msra.mxu0 %v782
        %828 = vmatprep.subr.bf16.mxu0 0
        %829 = vmatpush1.bf16.xpose.msra.mxu0 %v785
        %830 = vmatprep.subr.bf16.mxu0 0
        %831 = vmatpush1.bf16.xpose.msra.mxu0 %v788
        %832 = vmatprep.subr.bf16.mxu0 0
        %833 = vmatpush1.bf16.xpose.msra.mxu0 %v791
        %834 = vmatprep.subr.bf16.mxu0 0
        %835 = vmatpush1.bf16.xpose.msra.mxu0 %v794
        %836 = vmatprep.subr.bf16.mxu0 0
        %837 = vmatpush1.bf16.xpose.msra.mxu0 %v797
        %838 = vmatprep.subr.bf16.mxu0 0
        %839 = vmatpush1.bf16.xpose.msra.mxu0 %v800
        %840 = vmatprep.subr.bf16.mxu0 0
        %841 = vmatpush1.bf16.xpose.msra.mxu0 %v803
        %842 = vmatprep.subr.bf16.mxu0 0
        %843 = vmatpush1.bf16.xpose.msra.mxu0 %v806
        %844 = vmatprep.subr.bf16.mxu0 0
        %845 = vmatpush1.bf16.xpose.msra.mxu0 %v809
        %846 = vmatprep.subr.bf16.mxu0 0
        %847 = vmatpush1.bf16.xpose.msra.mxu0 %v812
        %848 = vmatprep.subr.bf16.mxu0 0
        %849 = vmatpush1.bf16.xpose.msra.mxu0 %v815
        %850 = vmatprep.subr.bf16.mxu0 0
        %851 = vmatpush1.bf16.xpose.msra.mxu0 %v818
        %852 = vmatprep.mubr.bf16.mxu0 0
        %853 = vmatmul.mubr.bf16.gmra.mrb[0].mxu0 %v725
        %v854 = vpop.f32.mrb[0].mxu0
        %v855 = vadd.f32 0.0, %v854
        %v856 = vpop.f32.mrb[0].mxu0
        %v857 = vadd.f32 0.0, %v856
        %v858 = vpop.f32.mrb[0].mxu0
        %v859 = vadd.f32 0.0, %v858
        %v860 = vpop.f32.mrb[0].mxu0
        %v861 = vadd.f32 0.0, %v860
        %862 = vmatprep.mubr.bf16.mxu0 0
        %863 = vmatmul.mubr.bf16.gmra.mrb[0].mxu0 %v728
        %v864 = vpop.f32.mrb[0].mxu0
        %v865 = vadd.f32 0.0, %v864
        %v866 = vpop.f32.mrb[0].mxu0
        %v867 = vadd.f32 0.0, %v866
        %v868 = vpop.f32.mrb[0].mxu0
        %v869 = vadd.f32 0.0, %v868
        %v870 = vpop.f32.mrb[0].mxu0
        %v871 = vadd.f32 0.0, %v870
        %872 = vmatprep.mubr.bf16.mxu0 0
        %873 = vmatmul.mubr.bf16.gmra.mrb[0].mxu0 %v731
        %v874 = vpop.f32.mrb[0].mxu0
        %v875 = vadd.f32 0.0, %v874
        %v876 = vpop.f32.mrb[0].mxu0
        %v877 = vadd.f32 0.0, %v876
        %v878 = vpop.f32.mrb[0].mxu0
        %v879 = vadd.f32 0.0, %v878
        %v880 = vpop.f32.mrb[0].mxu0
        %v881 = vadd.f32 0.0, %v880
        %882 = vmatprep.mubr.bf16.mxu0 0
        %883 = vmatmul.mubr.bf16.gmra.mrb[0].mxu0 %v734
        %v884 = vpop.f32.mrb[0].mxu0
        %v885 = vadd.f32 0.0, %v884
        %v886 = vpop.f32.mrb[0].mxu0
        %v887 = vadd.f32 0.0, %v886
        %v888 = vpop.f32.mrb[0].mxu0
        %v889 = vadd.f32 0.0, %v888
        %v890 = vpop.f32.mrb[0].mxu0
        %v891 = vadd.f32 0.0, %v890
        %892 = vmatprep.mubr.bf16.mxu0 0
        %893 = vmatmul.mubr.bf16.gmra.mrb[0].mxu0 %v737
        %v894 = vpop.f32.mrb[0].mxu0
        %v895 = vadd.f32 0.0, %v894
        %v896 = vpop.f32.mrb[0].mxu0
        %v897 = vadd.f32 0.0, %v896
        %v898 = vpop.f32.mrb[0].mxu0
        %v899 = vadd.f32 0.0, %v898
        %v900 = vpop.f32.mrb[0].mxu0
        %v901 = vadd.f32 0.0, %v900
        %902 = vmatprep.mubr.bf16.mxu0 0
        %903 = vmatmul.mubr.bf16.gmra.mrb[0].mxu0 %v740
        %v904 = vpop.f32.mrb[0].mxu0
        %v905 = vadd.f32 0.0, %v904
        %v906 = vpop.f32.mrb[0].mxu0
        %v907 = vadd.f32 0.0, %v906
        %v908 = vpop.f32.mrb[0].mxu0
        %v909 = vadd.f32 0.0, %v908
        %v910 = vpop.f32.mrb[0].mxu0
        %v911 = vadd.f32 0.0, %v910
        %912 = vmatprep.mubr.bf16.mxu0 0
        %913 = vmatmul.mubr.bf16.gmra.mrb[0].mxu0 %v743
        %v914 = vpop.f32.mrb[0].mxu0
        %v915 = vadd.f32 0.0, %v914
        %v916 = vpop.f32.mrb[0].mxu0
        %v917 = vadd.f32 0.0, %v916
        %v918 = vpop.f32.mrb[0].mxu0
        %v919 = vadd.f32 0.0, %v918
        %v920 = vpop.f32.mrb[0].mxu0
        %v921 = vadd.f32 0.0, %v920
        %922 = vmatprep.mubr.bf16.mxu0 0
        %923 = vmatmul.mubr.bf16.gmra.mrb[0].mxu0 %v746
        %v924 = vpop.f32.mrb[0].mxu0
        %v925 = vadd.f32 0.0, %v924
        %v926 = vpop.f32.mrb[0].mxu0
        %v927 = vadd.f32 0.0, %v926
        %v928 = vpop.f32.mrb[0].mxu0
        %v929 = vadd.f32 0.0, %v928
        %v930 = vpop.f32.mrb[0].mxu0
        %v931 = vadd.f32 0.0, %v930
        %932 = vmatprep.mubr.bf16.mxu0 0
        %933 = vmatmul.mubr.bf16.gmra.mrb[0].mxu0 %v749
        %v934 = vpop.f32.mrb[0].mxu0
        %v935 = vadd.f32 0.0, %v934
        %v936 = vpop.f32.mrb[0].mxu0
        %v937 = vadd.f32 0.0, %v936
        %v938 = vpop.f32.mrb[0].mxu0
        %v939 = vadd.f32 0.0, %v938
        %v940 = vpop.f32.mrb[0].mxu0
        %v941 = vadd.f32 0.0, %v940
        %942 = vmatprep.mubr.bf16.mxu0 0
        %943 = vmatmul.mubr.bf16.gmra.mrb[0].mxu0 %v752
        %v944 = vpop.f32.mrb[0].mxu0
        %v945 = vadd.f32 0.0, %v944
        %v946 = vpop.f32.mrb[0].mxu0
        %v947 = vadd.f32 0.0, %v946
        %v948 = vpop.f32.mrb[0].mxu0
        %v949 = vadd.f32 0.0, %v948
        %v950 = vpop.f32.mrb[0].mxu0
        %v951 = vadd.f32 0.0, %v950
        %952 = vmatprep.mubr.bf16.mxu0 0
        %953 = vmatmul.mubr.bf16.gmra.mrb[0].mxu0 %v755
        %v954 = vpop.f32.mrb[0].mxu0
        %v955 = vadd.f32 0.0, %v954
        %v956 = vpop.f32.mrb[0].mxu0
        %v957 = vadd.f32 0.0, %v956
        %v958 = vpop.f32.mrb[0].mxu0
        %v959 = vadd.f32 0.0, %v958
        %v960 = vpop.f32.mrb[0].mxu0
        %v961 = vadd.f32 0.0, %v960
        %962 = vmatprep.mubr.bf16.mxu0 0
        %963 = vmatmul.mubr.bf16.gmra.mrb[0].mxu0 %v758
        %v964 = vpop.f32.mrb[0].mxu0
        %v965 = vadd.f32 0.0, %v964
        %v966 = vpop.f32.mrb[0].mxu0
        %v967 = vadd.f32 0.0, %v966
        %v968 = vpop.f32.mrb[0].mxu0
        %v969 = vadd.f32 0.0, %v968
        %v970 = vpop.f32.mrb[0].mxu0
        %v971 = vadd.f32 0.0, %v970
        %972 = vmatprep.mubr.bf16.mxu0 0
        %973 = vmatmul.mubr.bf16.gmra.mrb[0].mxu0 %v761
        %v974 = vpop.f32.mrb[0].mxu0
        %v975 = vadd.f32 0.0, %v974
        %v976 = vpop.f32.mrb[0].mxu0
        %v977 = vadd.f32 0.0, %v976
        %v978 = vpop.f32.mrb[0].mxu0
        %v979 = vadd.f32 0.0, %v978
        %v980 = vpop.f32.mrb[0].mxu0
        %v981 = vadd.f32 0.0, %v980
        %982 = vmatprep.mubr.bf16.mxu0 0
        %983 = vmatmul.mubr.bf16.gmra.mrb[0].mxu0 %v764
        %v984 = vpop.f32.mrb[0].mxu0
        %v985 = vadd.f32 0.0, %v984
        %v986 = vpop.f32.mrb[0].mxu0
        %v987 = vadd.f32 0.0, %v986
        %v988 = vpop.f32.mrb[0].mxu0
        %v989 = vadd.f32 0.0, %v988
        %v990 = vpop.f32.mrb[0].mxu0
        %v991 = vadd.f32 0.0, %v990
        %992 = vmatprep.mubr.bf16.mxu0 0
        %993 = vmatmul.mubr.bf16.gmra.mrb[0].mxu0 %v767
        %v994 = vpop.f32.mrb[0].mxu0
        %v995 = vadd.f32 0.0, %v994
        %v996 = vpop.f32.mrb[0].mxu0
        %v997 = vadd.f32 0.0, %v996
        %v998 = vpop.f32.mrb[0].mxu0
        %v999 = vadd.f32 0.0, %v998
        %v1000 = vpop.f32.mrb[0].mxu0
        %v1001 = vadd.f32 0.0, %v1000
        %1002 = vmatprep.mubr.bf16.mxu0 0
        %1003 = vmatmul.mubr.bf16.gmra.mrb[0].mxu0 %v770
        %v1004 = vpop.f32.mrb[0].mxu0
        %v1005 = vadd.f32 0.0, %v1004
        %v1006 = vpop.f32.mrb[0].mxu0
        %v1007 = vadd.f32 0.0, %v1006
        %v1008 = vpop.f32.mrb[0].mxu0
        %v1009 = vadd.f32 0.0, %v1008
        %v1010 = vpop.f32.mrb[0].mxu0
        %v1011 = vadd.f32 0.0, %v1010
        %1012 = vdwg.mxu0
        %v1013 = vld [vmem:[#allocation2] sm:$0xff]
        %v1014 = vld [vmem:[#allocation2 + $0x8] sm:$0xff]
        %v1015 = vld [vmem:[#allocation2 + $0x10] sm:$0xff]
        %v1016 = vld [vmem:[#allocation2 + $0x18] sm:$0xff]
        %v1017 = vld [vmem:[#allocation2 + $0x20] sm:$0xff]
        %v1018 = vld [vmem:[#allocation2 + $0x28] sm:$0xff]
        %v1019 = vld [vmem:[#allocation2 + $0x30] sm:$0xff]
        %v1020 = vld [vmem:[#allocation2 + $0x38] sm:$0xff]
        %v1021 = vld [vmem:[#allocation2 + $0x40] sm:$0xff]
        %v1022 = vld [vmem:[#allocation2 + $0x48] sm:$0xff]
        %v1023 = vld [vmem:[#allocation2 + $0x50] sm:$0xff]
        %v1024 = vld [vmem:[#allocation2 + $0x58] sm:$0xff]
        %v1025 = vld [vmem:[#allocation2 + $0x60] sm:$0xff]
        %v1026 = vld [vmem:[#allocation2 + $0x68] sm:$0xff]
        %v1027 = vld [vmem:[#allocation2 + $0x70] sm:$0xff]
        %v1028 = vld [vmem:[#allocation2 + $0x78] sm:$0xff]
        %v1029 = vld [vmem:[#allocation2 + $0x80] sm:$0xff]
        %v1030 = vld [vmem:[#allocation2 + $0x88] sm:$0xff]
        %v1031 = vld [vmem:[#allocation2 + $0x90] sm:$0xff]
        %v1032 = vld [vmem:[#allocation2 + $0x98] sm:$0xff]
        %v1033 = vld [vmem:[#allocation2 + $0xa0] sm:$0xff]
        %v1034 = vld [vmem:[#allocation2 + $0xa8] sm:$0xff]
        %v1035 = vld [vmem:[#allocation2 + $0xb0] sm:$0xff]
        %v1036 = vld [vmem:[#allocation2 + $0xb8] sm:$0xff]
        %v1037 = vld [vmem:[#allocation2 + $0xc0] sm:$0xff]
        %v1038 = vld [vmem:[#allocation2 + $0xc8] sm:$0xff]
        %v1039 = vld [vmem:[#allocation2 + $0xd0] sm:$0xff]
        %v1040 = vld [vmem:[#allocation2 + $0xd8] sm:$0xff]
        %v1041 = vld [vmem:[#allocation2 + $0xe0] sm:$0xff]
        %v1042 = vld [vmem:[#allocation2 + $0xe8] sm:$0xff]
        %v1043 = vld [vmem:[#allocation2 + $0xf0] sm:$0xff]
        %v1044 = vld [vmem:[#allocation2 + $0xf8] sm:$0xff]
        %v1045 = vmax.f32 %v855, %v857
        %1046 = vmax.xlane.f32.xlu0 %v1045
        %v1047 = vpop.xlane.xlu0 %1046
        %v1048 = vmax.f32 %v859, %v861
        %1049 = vmax.xlane.f32.xlu0 %v1048
        %v1050 = vpop.xlane.xlu0 %1049
        %v1051 = vmax.f32 %v865, %v867
        %1052 = vmax.xlane.f32.xlu0 %v1051
        %v1053 = vpop.xlane.xlu0 %1052
        %v1054 = vmax.f32 %v869, %v871
        %1055 = vmax.xlane.f32.xlu0 %v1054
        %v1056 = vpop.xlane.xlu0 %1055
        %v1057 = vmax.f32 %v875, %v877
        %1058 = vmax.xlane.f32.xlu0 %v1057
        %v1059 = vpop.xlane.xlu0 %1058
        %v1060 = vmax.f32 %v879, %v881
        %1061 = vmax.xlane.f32.xlu0 %v1060
        %v1062 = vpop.xlane.xlu0 %1061
        %v1063 = vmax.f32 %v885, %v887
        %1064 = vmax.xlane.f32.xlu0 %v1063
        %v1065 = vpop.xlane.xlu0 %1064
        %v1066 = vmax.f32 %v889, %v891
        %1067 = vmax.xlane.f32.xlu0 %v1066
        %v1068 = vpop.xlane.xlu0 %1067
        %v1069 = vmax.f32 %v895, %v897
        %1070 = vmax.xlane.f32.xlu0 %v1069
        %v1071 = vpop.xlane.xlu0 %1070
        %v1072 = vmax.f32 %v899, %v901
        %1073 = vmax.xlane.f32.xlu0 %v1072
        %v1074 = vpop.xlane.xlu0 %1073
        %v1075 = vmax.f32 %v905, %v907
        %1076 = vmax.xlane.f32.xlu0 %v1075
        %v1077 = vpop.xlane.xlu0 %1076
        %v1078 = vmax.f32 %v909, %v911
        %1079 = vmax.xlane.f32.xlu0 %v1078
        %v1080 = vpop.xlane.xlu0 %1079
        %v1081 = vmax.f32 %v915, %v917
        %1082 = vmax.xlane.f32.xlu0 %v1081
        %v1083 = vpop.xlane.xlu0 %1082
        %v1084 = vmax.f32 %v919, %v921
        %1085 = vmax.xlane.f32.xlu0 %v1084
        %v1086 = vpop.xlane.xlu0 %1085
        %v1087 = vmax.f32 %v925, %v927
        %1088 = vmax.xlane.f32.xlu0 %v1087
        %v1089 = vpop.xlane.xlu0 %1088
        %v1090 = vmax.f32 %v929, %v931
        %1091 = vmax.xlane.f32.xlu0 %v1090
        %v1092 = vpop.xlane.xlu0 %1091
        %v1093 = vmax.f32 %v935, %v937
        %1094 = vmax.xlane.f32.xlu0 %v1093
        %v1095 = vpop.xlane.xlu0 %1094
        %v1096 = vmax.f32 %v939, %v941
        %1097 = vmax.xlane.f32.xlu0 %v1096
        %v1098 = vpop.xlane.xlu0 %1097
        %v1099 = vmax.f32 %v945, %v947
        %1100 = vmax.xlane.f32.xlu0 %v1099
        %v1101 = vpop.xlane.xlu0 %1100
        %v1102 = vmax.f32 %v949, %v951
        %1103 = vmax.xlane.f32.xlu0 %v1102
        %v1104 = vpop.xlane.xlu0 %1103
        %v1105 = vmax.f32 %v955, %v957
        %1106 = vmax.xlane.f32.xlu0 %v1105
        %v1107 = vpop.xlane.xlu0 %1106
        %v1108 = vmax.f32 %v959, %v961
        %1109 = vmax.xlane.f32.xlu0 %v1108
        %v1110 = vpop.xlane.xlu0 %1109
        %v1111 = vmax.f32 %v965, %v967
        %1112 = vmax.xlane.f32.xlu0 %v1111
        %v1113 = vpop.xlane.xlu0 %1112
        %v1114 = vmax.f32 %v969, %v971
        %1115 = vmax.xlane.f32.xlu0 %v1114
        %v1116 = vpop.xlane.xlu0 %1115
        %v1117 = vmax.f32 %v975, %v977
        %1118 = vmax.xlane.f32.xlu0 %v1117
        %v1119 = vpop.xlane.xlu0 %1118
        %v1120 = vmax.f32 %v979, %v981
        %1121 = vmax.xlane.f32.xlu0 %v1120
        %v1122 = vpop.xlane.xlu0 %1121
        %v1123 = vmax.f32 %v985, %v987
        %1124 = vmax.xlane.f32.xlu0 %v1123
        %v1125 = vpop.xlane.xlu0 %1124
        %v1126 = vmax.f32 %v989, %v991
        %1127 = vmax.xlane.f32.xlu0 %v1126
        %v1128 = vpop.xlane.xlu0 %1127
        %v1129 = vmax.f32 %v995, %v997
        %1130 = vmax.xlane.f32.xlu0 %v1129
        %v1131 = vpop.xlane.xlu0 %1130
        %v1132 = vmax.f32 %v999, %v1001
        %1133 = vmax.xlane.f32.xlu0 %v1132
        %v1134 = vpop.xlane.xlu0 %1133
        %v1135 = vmax.f32 %v1005, %v1007
        %1136 = vmax.xlane.f32.xlu0 %v1135
        %v1137 = vpop.xlane.xlu0 %1136
        %v1138 = vmax.f32 %v1009, %v1011
        %1139 = vmax.xlane.f32.xlu0 %v1138
        %v1140 = vpop.xlane.xlu0 %1139
        %v1141 = vmax.f32 %v1013, %v1047
        %v1142 = vmax.f32 %v1014, %v1050
        %v1143 = vmax.f32 %v1015, %v1053
        %v1144 = vmax.f32 %v1016, %v1056
        %v1145 = vmax.f32 %v1017, %v1059
        %v1146 = vmax.f32 %v1018, %v1062
        %v1147 = vmax.f32 %v1019, %v1065
        %v1148 = vmax.f32 %v1020, %v1068
        %v1149 = vmax.f32 %v1021, %v1071
        %v1150 = vmax.f32 %v1022, %v1074
        %v1151 = vmax.f32 %v1023, %v1077
        %v1152 = vmax.f32 %v1024, %v1080
        %v1153 = vmax.f32 %v1025, %v1083
        %v1154 = vmax.f32 %v1026, %v1086
        %v1155 = vmax.f32 %v1027, %v1089
        %v1156 = vmax.f32 %v1028, %v1092
        %v1157 = vmax.f32 %v1029, %v1095
        %v1158 = vmax.f32 %v1030, %v1098
        %v1159 = vmax.f32 %v1031, %v1101
        %v1160 = vmax.f32 %v1032, %v1104
        %v1161 = vmax.f32 %v1033, %v1107
        %v1162 = vmax.f32 %v1034, %v1110
        %v1163 = vmax.f32 %v1035, %v1113
        %v1164 = vmax.f32 %v1036, %v1116
        %v1165 = vmax.f32 %v1037, %v1119
        %v1166 = vmax.f32 %v1038, %v1122
        %v1167 = vmax.f32 %v1039, %v1125
        %v1168 = vmax.f32 %v1040, %v1128
        %v1169 = vmax.f32 %v1041, %v1131
        %v1170 = vmax.f32 %v1042, %v1134
        %v1171 = vmax.f32 %v1043, %v1137
        %v1172 = vmax.f32 %v1044, %v1140
        %v1173 = vsub.f32 %v1013, %v1141
        %v1174 = vsub.f32 %v1014, %v1142
        %v1175 = vsub.f32 %v1015, %v1143
        %v1176 = vsub.f32 %v1016, %v1144
        %v1177 = vsub.f32 %v1017, %v1145
        %v1178 = vsub.f32 %v1018, %v1146
        %v1179 = vsub.f32 %v1019, %v1147
        %v1180 = vsub.f32 %v1020, %v1148
        %v1181 = vsub.f32 %v1021, %v1149
        %v1182 = vsub.f32 %v1022, %v1150
        %v1183 = vsub.f32 %v1023, %v1151
        %v1184 = vsub.f32 %v1024, %v1152
        %v1185 = vsub.f32 %v1025, %v1153
        %v1186 = vsub.f32 %v1026, %v1154
        %v1187 = vsub.f32 %v1027, %v1155
        %v1188 = vsub.f32 %v1028, %v1156
        %v1189 = vsub.f32 %v1029, %v1157
        %v1190 = vsub.f32 %v1030, %v1158
        %v1191 = vsub.f32 %v1031, %v1159
        %v1192 = vsub.f32 %v1032, %v1160
        %v1193 = vsub.f32 %v1033, %v1161
        %v1194 = vsub.f32 %v1034, %v1162
        %v1195 = vsub.f32 %v1035, %v1163
        %v1196 = vsub.f32 %v1036, %v1164
        %v1197 = vsub.f32 %v1037, %v1165
        %v1198 = vsub.f32 %v1038, %v1166
        %v1199 = vsub.f32 %v1039, %v1167
        %v1200 = vsub.f32 %v1040, %v1168
        %v1201 = vsub.f32 %v1041, %v1169
        %v1202 = vsub.f32 %v1042, %v1170
        %v1203 = vsub.f32 %v1043, %v1171
        %v1204 = vsub.f32 %v1044, %v1172
        %v1205 = vmul.f32 %v1173, 1.442695
        %v1206 = vpow.pop %v1205
        %v1207 = vmul.f32 %v1174, 1.442695
        %v1208 = vpow.pop %v1207
        %v1209 = vmul.f32 %v1175, 1.442695
        %v1210 = vpow.pop %v1209
        %v1211 = vmul.f32 %v1176, 1.442695
        %v1212 = vpow.pop %v1211
        %v1213 = vmul.f32 %v1177, 1.442695
        %v1214 = vpow.pop %v1213
        %v1215 = vmul.f32 %v1178, 1.442695
        %v1216 = vpow.pop %v1215
        %v1217 = vmul.f32 %v1179, 1.442695
        %v1218 = vpow.pop %v1217
        %v1219 = vmul.f32 %v1180, 1.442695
        %v1220 = vpow.pop %v1219
        %v1221 = vmul.f32 %v1181, 1.442695
        %v1222 = vpow.pop %v1221
        %v1223 = vmul.f32 %v1182, 1.442695
        %v1224 = vpow.pop %v1223
        %v1225 = vmul.f32 %v1183, 1.442695
        %v1226 = vpow.pop %v1225
        %v1227 = vmul.f32 %v1184, 1.442695
        %v1228 = vpow.pop %v1227
        %v1229 = vmul.f32 %v1185, 1.442695
        %v1230 = vpow.pop %v1229
        %v1231 = vmul.f32 %v1186, 1.442695
        %v1232 = vpow.pop %v1231
        %v1233 = vmul.f32 %v1187, 1.442695
        %v1234 = vpow.pop %v1233
        %v1235 = vmul.f32 %v1188, 1.442695
        %v1236 = vpow.pop %v1235
        %v1237 = vmul.f32 %v1189, 1.442695
        %v1238 = vpow.pop %v1237
        %v1239 = vmul.f32 %v1190, 1.442695
        %v1240 = vpow.pop %v1239
        %v1241 = vmul.f32 %v1191, 1.442695
        %v1242 = vpow.pop %v1241
        %v1243 = vmul.f32 %v1192, 1.442695
        %v1244 = vpow.pop %v1243
        %v1245 = vmul.f32 %v1193, 1.442695
        %v1246 = vpow.pop %v1245
        %v1247 = vmul.f32 %v1194, 1.442695
        %v1248 = vpow.pop %v1247
        %v1249 = vmul.f32 %v1195, 1.442695
        %v1250 = vpow.pop %v1249
        %v1251 = vmul.f32 %v1196, 1.442695
        %v1252 = vpow.pop %v1251
        %v1253 = vmul.f32 %v1197, 1.442695
        %v1254 = vpow.pop %v1253
        %v1255 = vmul.f32 %v1198, 1.442695
        %v1256 = vpow.pop %v1255
        %v1257 = vmul.f32 %v1199, 1.442695
        %v1258 = vpow.pop %v1257
        %v1259 = vmul.f32 %v1200, 1.442695
        %v1260 = vpow.pop %v1259
        %v1261 = vmul.f32 %v1201, 1.442695
        %v1262 = vpow.pop %v1261
        %v1263 = vmul.f32 %v1202, 1.442695
        %v1264 = vpow.pop %v1263
        %v1265 = vmul.f32 %v1203, 1.442695
        %v1266 = vpow.pop %v1265
        %v1267 = vmul.f32 %v1204, 1.442695
        %v1268 = vpow.pop %v1267
        %1270 = vset.pattern.permute.xlu0 0
        %1271 = vperm.xlu0 %1270, %v1141
        %v1272 = vpop.permute.xlu0 %1271
        %1275 = vset.pattern.permute.xlu0 0
        %1276 = vperm.xlu0 %1275, %v1142
        %v1277 = vpop.permute.xlu0 %1276
        %1280 = vset.pattern.permute.xlu0 0
        %1281 = vperm.xlu0 %1280, %v1143
        %v1282 = vpop.permute.xlu0 %1281
        %1285 = vset.pattern.permute.xlu0 0
        %1286 = vperm.xlu0 %1285, %v1144
        %v1287 = vpop.permute.xlu0 %1286
        %1290 = vset.pattern.permute.xlu0 0
        %1291 = vperm.xlu0 %1290, %v1145
        %v1292 = vpop.permute.xlu0 %1291
        %1295 = vset.pattern.permute.xlu0 0
        %1296 = vperm.xlu0 %1295, %v1146
        %v1297 = vpop.permute.xlu0 %1296
        %1300 = vset.pattern.permute.xlu0 0
        %1301 = vperm.xlu0 %1300, %v1147
        %v1302 = vpop.permute.xlu0 %1301
        %1305 = vset.pattern.permute.xlu0 0
        %1306 = vperm.xlu0 %1305, %v1148
        %v1307 = vpop.permute.xlu0 %1306
        %1310 = vset.pattern.permute.xlu0 0
        %1311 = vperm.xlu0 %1310, %v1149
        %v1312 = vpop.permute.xlu0 %1311
        %1315 = vset.pattern.permute.xlu0 0
        %1316 = vperm.xlu0 %1315, %v1150
        %v1317 = vpop.permute.xlu0 %1316
        %1320 = vset.pattern.permute.xlu0 0
        %1321 = vperm.xlu0 %1320, %v1151
        %v1322 = vpop.permute.xlu0 %1321
        %1325 = vset.pattern.permute.xlu0 0
        %1326 = vperm.xlu0 %1325, %v1152
        %v1327 = vpop.permute.xlu0 %1326
        %1330 = vset.pattern.permute.xlu0 0
        %1331 = vperm.xlu0 %1330, %v1153
        %v1332 = vpop.permute.xlu0 %1331
        %1335 = vset.pattern.permute.xlu0 0
        %1336 = vperm.xlu0 %1335, %v1154
        %v1337 = vpop.permute.xlu0 %1336
        %1340 = vset.pattern.permute.xlu0 0
        %1341 = vperm.xlu0 %1340, %v1155
        %v1342 = vpop.permute.xlu0 %1341
        %1345 = vset.pattern.permute.xlu0 0
        %1346 = vperm.xlu0 %1345, %v1156
        %v1347 = vpop.permute.xlu0 %1346
        %1350 = vset.pattern.permute.xlu0 0
        %1351 = vperm.xlu0 %1350, %v1157
        %v1352 = vpop.permute.xlu0 %1351
        %1355 = vset.pattern.permute.xlu0 0
        %1356 = vperm.xlu0 %1355, %v1158
        %v1357 = vpop.permute.xlu0 %1356
        %1360 = vset.pattern.permute.xlu0 0
        %1361 = vperm.xlu0 %1360, %v1159
        %v1362 = vpop.permute.xlu0 %1361
        %1365 = vset.pattern.permute.xlu0 0
        %1366 = vperm.xlu0 %1365, %v1160
        %v1367 = vpop.permute.xlu0 %1366
        %1370 = vset.pattern.permute.xlu0 0
        %1371 = vperm.xlu0 %1370, %v1161
        %v1372 = vpop.permute.xlu0 %1371
        %1375 = vset.pattern.permute.xlu0 0
        %1376 = vperm.xlu0 %1375, %v1162
        %v1377 = vpop.permute.xlu0 %1376
        %1380 = vset.pattern.permute.xlu0 0
        %1381 = vperm.xlu0 %1380, %v1163
        %v1382 = vpop.permute.xlu0 %1381
        %1385 = vset.pattern.permute.xlu0 0
        %1386 = vperm.xlu0 %1385, %v1164
        %v1387 = vpop.permute.xlu0 %1386
        %1390 = vset.pattern.permute.xlu0 0
        %1391 = vperm.xlu0 %1390, %v1165
        %v1392 = vpop.permute.xlu0 %1391
        %1395 = vset.pattern.permute.xlu0 0
        %1396 = vperm.xlu0 %1395, %v1166
        %v1397 = vpop.permute.xlu0 %1396
        %1400 = vset.pattern.permute.xlu0 0
        %1401 = vperm.xlu0 %1400, %v1167
        %v1402 = vpop.permute.xlu0 %1401
        %1405 = vset.pattern.permute.xlu0 0
        %1406 = vperm.xlu0 %1405, %v1168
        %v1407 = vpop.permute.xlu0 %1406
        %1410 = vset.pattern.permute.xlu0 0
        %1411 = vperm.xlu0 %1410, %v1169
        %v1412 = vpop.permute.xlu0 %1411
        %1415 = vset.pattern.permute.xlu0 0
        %1416 = vperm.xlu0 %1415, %v1170
        %v1417 = vpop.permute.xlu0 %1416
        %1420 = vset.pattern.permute.xlu0 0
        %1421 = vperm.xlu0 %1420, %v1171
        %v1422 = vpop.permute.xlu0 %1421
        %1425 = vset.pattern.permute.xlu0 0
        %1426 = vperm.xlu0 %1425, %v1172
        %v1427 = vpop.permute.xlu0 %1426
        %v1429 = vsub.f32 %v855, %v1272
        %v1430 = vsub.f32 %v857, %v1272
        %v1431 = vsub.f32 %v859, %v1277
        %v1432 = vsub.f32 %v861, %v1277
        %v1433 = vsub.f32 %v865, %v1282
        %v1434 = vsub.f32 %v867, %v1282
        %v1435 = vsub.f32 %v869, %v1287
        %v1436 = vsub.f32 %v871, %v1287
        %v1437 = vsub.f32 %v875, %v1292
        %v1438 = vsub.f32 %v877, %v1292
        %v1439 = vsub.f32 %v879, %v1297
        %v1440 = vsub.f32 %v881, %v1297
        %v1441 = vsub.f32 %v885, %v1302
        %v1442 = vsub.f32 %v887, %v1302
        %v1443 = vsub.f32 %v889, %v1307
        %v1444 = vsub.f32 %v891, %v1307
        %v1445 = vsub.f32 %v895, %v1312
        %v1446 = vsub.f32 %v897, %v1312
        %v1447 = vsub.f32 %v899, %v1317
        %v1448 = vsub.f32 %v901, %v1317
        %v1449 = vsub.f32 %v905, %v1322
        %v1450 = vsub.f32 %v907, %v1322
        %v1451 = vsub.f32 %v909, %v1327
        %v1452 = vsub.f32 %v911, %v1327
        %v1453 = vsub.f32 %v915, %v1332
        %v1454 = vsub.f32 %v917, %v1332
        %v1455 = vsub.f32 %v919, %v1337
        %v1456 = vsub.f32 %v921, %v1337
        %v1457 = vsub.f32 %v925, %v1342
        %v1458 = vsub.f32 %v927, %v1342
        %v1459 = vsub.f32 %v929, %v1347
        %v1460 = vsub.f32 %v931, %v1347
        %v1461 = vsub.f32 %v935, %v1352
        %v1462 = vsub.f32 %v937, %v1352
        %v1463 = vsub.f32 %v939, %v1357
        %v1464 = vsub.f32 %v941, %v1357
        %v1465 = vsub.f32 %v945, %v1362
        %v1466 = vsub.f32 %v947, %v1362
        %v1467 = vsub.f32 %v949, %v1367
        %v1468 = vsub.f32 %v951, %v1367
        %v1469 = vsub.f32 %v955, %v1372
        %v1470 = vsub.f32 %v957, %v1372
        %v1471 = vsub.f32 %v959, %v1377
        %v1472 = vsub.f32 %v961, %v1377
        %v1473 = vsub.f32 %v965, %v1382
        %v1474 = vsub.f32 %v967, %v1382
        %v1475 = vsub.f32 %v969, %v1387
        %v1476 = vsub.f32 %v971, %v1387
        %v1477 = vsub.f32 %v975, %v1392
        %v1478 = vsub.f32 %v977, %v1392
        %v1479 = vsub.f32 %v979, %v1397
        %v1480 = vsub.f32 %v981, %v1397
        %v1481 = vsub.f32 %v985, %v1402
        %v1482 = vsub.f32 %v987, %v1402
        %v1483 = vsub.f32 %v989, %v1407
        %v1484 = vsub.f32 %v991, %v1407
        %v1485 = vsub.f32 %v995, %v1412
        %v1486 = vsub.f32 %v997, %v1412
        %v1487 = vsub.f32 %v999, %v1417
        %v1488 = vsub.f32 %v1001, %v1417
        %v1489 = vsub.f32 %v1005, %v1422
        %v1490 = vsub.f32 %v1007, %v1422
        %v1491 = vsub.f32 %v1009, %v1427
        %v1492 = vsub.f32 %v1011, %v1427
        %v1493 = vmul.f32 %v1429, 1.442695
        %v1494 = vpow.pop %v1493
        %v1495 = vmul.f32 %v1430, 1.442695
        %v1496 = vpow.pop %v1495
        %v1497 = vmul.f32 %v1431, 1.442695
        %v1498 = vpow.pop %v1497
        %v1499 = vmul.f32 %v1432, 1.442695
        %v1500 = vpow.pop %v1499
        %v1501 = vmul.f32 %v1433, 1.442695
        %v1502 = vpow.pop %v1501
        %v1503 = vmul.f32 %v1434, 1.442695
        %v1504 = vpow.pop %v1503
        %v1505 = vmul.f32 %v1435, 1.442695
        %v1506 = vpow.pop %v1505
        %v1507 = vmul.f32 %v1436, 1.442695
        %v1508 = vpow.pop %v1507
        %v1509 = vmul.f32 %v1437, 1.442695
        %v1510 = vpow.pop %v1509
        %v1511 = vmul.f32 %v1438, 1.442695
        %v1512 = vpow.pop %v1511
        %v1513 = vmul.f32 %v1439, 1.442695
        %v1514 = vpow.pop %v1513
        %v1515 = vmul.f32 %v1440, 1.442695
        %v1516 = vpow.pop %v1515
        %v1517 = vmul.f32 %v1441, 1.442695
        %v1518 = vpow.pop %v1517
        %v1519 = vmul.f32 %v1442, 1.442695
        %v1520 = vpow.pop %v1519
        %v1521 = vmul.f32 %v1443, 1.442695
        %v1522 = vpow.pop %v1521
        %v1523 = vmul.f32 %v1444, 1.442695
        %v1524 = vpow.pop %v1523
        %v1525 = vmul.f32 %v1445, 1.442695
        %v1526 = vpow.pop %v1525
        %v1527 = vmul.f32 %v1446, 1.442695
        %v1528 = vpow.pop %v1527
        %v1529 = vmul.f32 %v1447, 1.442695
        %v1530 = vpow.pop %v1529
        %v1531 = vmul.f32 %v1448, 1.442695
        %v1532 = vpow.pop %v1531
        %v1533 = vmul.f32 %v1449, 1.442695
        %v1534 = vpow.pop %v1533
        %v1535 = vmul.f32 %v1450, 1.442695
        %v1536 = vpow.pop %v1535
        %v1537 = vmul.f32 %v1451, 1.442695
        %v1538 = vpow.pop %v1537
        %v1539 = vmul.f32 %v1452, 1.442695
        %v1540 = vpow.pop %v1539
        %v1541 = vmul.f32 %v1453, 1.442695
        %v1542 = vpow.pop %v1541
        %v1543 = vmul.f32 %v1454, 1.442695
        %v1544 = vpow.pop %v1543
        %v1545 = vmul.f32 %v1455, 1.442695
        %v1546 = vpow.pop %v1545
        %v1547 = vmul.f32 %v1456, 1.442695
        %v1548 = vpow.pop %v1547
        %v1549 = vmul.f32 %v1457, 1.442695
        %v1550 = vpow.pop %v1549
        %v1551 = vmul.f32 %v1458, 1.442695
        %v1552 = vpow.pop %v1551
        %v1553 = vmul.f32 %v1459, 1.442695
        %v1554 = vpow.pop %v1553
        %v1555 = vmul.f32 %v1460, 1.442695
        %v1556 = vpow.pop %v1555
        %v1557 = vmul.f32 %v1461, 1.442695
        %v1558 = vpow.pop %v1557
        %v1559 = vmul.f32 %v1462, 1.442695
        %v1560 = vpow.pop %v1559
        %v1561 = vmul.f32 %v1463, 1.442695
        %v1562 = vpow.pop %v1561
        %v1563 = vmul.f32 %v1464, 1.442695
        %v1564 = vpow.pop %v1563
        %v1565 = vmul.f32 %v1465, 1.442695
        %v1566 = vpow.pop %v1565
        %v1567 = vmul.f32 %v1466, 1.442695
        %v1568 = vpow.pop %v1567
        %v1569 = vmul.f32 %v1467, 1.442695
        %v1570 = vpow.pop %v1569
        %v1571 = vmul.f32 %v1468, 1.442695
        %v1572 = vpow.pop %v1571
        %v1573 = vmul.f32 %v1469, 1.442695
        %v1574 = vpow.pop %v1573
        %v1575 = vmul.f32 %v1470, 1.442695
        %v1576 = vpow.pop %v1575
        %v1577 = vmul.f32 %v1471, 1.442695
        %v1578 = vpow.pop %v1577
        %v1579 = vmul.f32 %v1472, 1.442695
        %v1580 = vpow.pop %v1579
        %v1581 = vmul.f32 %v1473, 1.442695
        %v1582 = vpow.pop %v1581
        %v1583 = vmul.f32 %v1474, 1.442695
        %v1584 = vpow.pop %v1583
        %v1585 = vmul.f32 %v1475, 1.442695
        %v1586 = vpow.pop %v1585
        %v1587 = vmul.f32 %v1476, 1.442695
        %v1588 = vpow.pop %v1587
        %v1589 = vmul.f32 %v1477, 1.442695
        %v1590 = vpow.pop %v1589
        %v1591 = vmul.f32 %v1478, 1.442695
        %v1592 = vpow.pop %v1591
        %v1593 = vmul.f32 %v1479, 1.442695
        %v1594 = vpow.pop %v1593
        %v1595 = vmul.f32 %v1480, 1.442695
        %v1596 = vpow.pop %v1595
        %v1597 = vmul.f32 %v1481, 1.442695
        %v1598 = vpow.pop %v1597
        %v1599 = vmul.f32 %v1482, 1.442695
        %v1600 = vpow.pop %v1599
        %v1601 = vmul.f32 %v1483, 1.442695
        %v1602 = vpow.pop %v1601
        %v1603 = vmul.f32 %v1484, 1.442695
        %v1604 = vpow.pop %v1603
        %v1605 = vmul.f32 %v1485, 1.442695
        %v1606 = vpow.pop %v1605
        %v1607 = vmul.f32 %v1486, 1.442695
        %v1608 = vpow.pop %v1607
        %v1609 = vmul.f32 %v1487, 1.442695
        %v1610 = vpow.pop %v1609
        %v1611 = vmul.f32 %v1488, 1.442695
        %v1612 = vpow.pop %v1611
        %v1613 = vmul.f32 %v1489, 1.442695
        %v1614 = vpow.pop %v1613
        %v1615 = vmul.f32 %v1490, 1.442695
        %v1616 = vpow.pop %v1615
        %v1617 = vmul.f32 %v1491, 1.442695
        %v1618 = vpow.pop %v1617
        %v1619 = vmul.f32 %v1492, 1.442695
        %v1620 = vpow.pop %v1619
        %v1621 = vld [vmem:[#allocation3] sm:$0xff]
        %v1622 = vld [vmem:[#allocation3 + $0x8] sm:$0xff]
        %v1623 = vld [vmem:[#allocation3 + $0x10] sm:$0xff]
        %v1624 = vld [vmem:[#allocation3 + $0x18] sm:$0xff]
        %v1625 = vld [vmem:[#allocation3 + $0x20] sm:$0xff]
        %v1626 = vld [vmem:[#allocation3 + $0x28] sm:$0xff]
        %v1627 = vld [vmem:[#allocation3 + $0x30] sm:$0xff]
        %v1628 = vld [vmem:[#allocation3 + $0x38] sm:$0xff]
        %v1629 = vld [vmem:[#allocation3 + $0x40] sm:$0xff]
        %v1630 = vld [vmem:[#allocation3 + $0x48] sm:$0xff]
        %v1631 = vld [vmem:[#allocation3 + $0x50] sm:$0xff]
        %v1632 = vld [vmem:[#allocation3 + $0x58] sm:$0xff]
        %v1633 = vld [vmem:[#allocation3 + $0x60] sm:$0xff]
        %v1634 = vld [vmem:[#allocation3 + $0x68] sm:$0xff]
        %v1635 = vld [vmem:[#allocation3 + $0x70] sm:$0xff]
        %v1636 = vld [vmem:[#allocation3 + $0x78] sm:$0xff]
        %v1637 = vld [vmem:[#allocation3 + $0x80] sm:$0xff]
        %v1638 = vld [vmem:[#allocation3 + $0x88] sm:$0xff]
        %v1639 = vld [vmem:[#allocation3 + $0x90] sm:$0xff]
        %v1640 = vld [vmem:[#allocation3 + $0x98] sm:$0xff]
        %v1641 = vld [vmem:[#allocation3 + $0xa0] sm:$0xff]
        %v1642 = vld [vmem:[#allocation3 + $0xa8] sm:$0xff]
        %v1643 = vld [vmem:[#allocation3 + $0xb0] sm:$0xff]
        %v1644 = vld [vmem:[#allocation3 + $0xb8] sm:$0xff]
        %v1645 = vld [vmem:[#allocation3 + $0xc0] sm:$0xff]
        %v1646 = vld [vmem:[#allocation3 + $0xc8] sm:$0xff]
        %v1647 = vld [vmem:[#allocation3 + $0xd0] sm:$0xff]
        %v1648 = vld [vmem:[#allocation3 + $0xd8] sm:$0xff]
        %v1649 = vld [vmem:[#allocation3 + $0xe0] sm:$0xff]
        %v1650 = vld [vmem:[#allocation3 + $0xe8] sm:$0xff]
        %v1651 = vld [vmem:[#allocation3 + $0xf0] sm:$0xff]
        %v1652 = vld [vmem:[#allocation3 + $0xf8] sm:$0xff]
        %v1653 = vmul.f32 %v1206, %v1621
        %v1654 = vmul.f32 %v1208, %v1622
        %v1655 = vmul.f32 %v1210, %v1623
        %v1656 = vmul.f32 %v1212, %v1624
        %v1657 = vmul.f32 %v1214, %v1625
        %v1658 = vmul.f32 %v1216, %v1626
        %v1659 = vmul.f32 %v1218, %v1627
        %v1660 = vmul.f32 %v1220, %v1628
        %v1661 = vmul.f32 %v1222, %v1629
        %v1662 = vmul.f32 %v1224, %v1630
        %v1663 = vmul.f32 %v1226, %v1631
        %v1664 = vmul.f32 %v1228, %v1632
        %v1665 = vmul.f32 %v1230, %v1633
        %v1666 = vmul.f32 %v1232, %v1634
        %v1667 = vmul.f32 %v1234, %v1635
        %v1668 = vmul.f32 %v1236, %v1636
        %v1669 = vmul.f32 %v1238, %v1637
        %v1670 = vmul.f32 %v1240, %v1638
        %v1671 = vmul.f32 %v1242, %v1639
        %v1672 = vmul.f32 %v1244, %v1640
        %v1673 = vmul.f32 %v1246, %v1641
        %v1674 = vmul.f32 %v1248, %v1642
        %v1675 = vmul.f32 %v1250, %v1643
        %v1676 = vmul.f32 %v1252, %v1644
        %v1677 = vmul.f32 %v1254, %v1645
        %v1678 = vmul.f32 %v1256, %v1646
        %v1679 = vmul.f32 %v1258, %v1647
        %v1680 = vmul.f32 %v1260, %v1648
        %v1681 = vmul.f32 %v1262, %v1649
        %v1682 = vmul.f32 %v1264, %v1650
        %v1683 = vmul.f32 %v1266, %v1651
        %v1684 = vmul.f32 %v1268, %v1652
        %v1685 = vadd.f32 %v1494, %v1496
        %1686 = vadd.xlane.f32.xlu0 %v1685
        %v1687 = vpop.xlane.xlu0 %1686
        %v1688 = vadd.f32 %v1498, %v1500
        %1689 = vadd.xlane.f32.xlu0 %v1688
        %v1690 = vpop.xlane.xlu0 %1689
        %v1691 = vadd.f32 %v1502, %v1504
        %1692 = vadd.xlane.f32.xlu0 %v1691
        %v1693 = vpop.xlane.xlu0 %1692
        %v1694 = vadd.f32 %v1506, %v1508
        %1695 = vadd.xlane.f32.xlu0 %v1694
        %v1696 = vpop.xlane.xlu0 %1695
        %v1697 = vadd.f32 %v1510, %v1512
        %1698 = vadd.xlane.f32.xlu0 %v1697
        %v1699 = vpop.xlane.xlu0 %1698
        %v1700 = vadd.f32 %v1514, %v1516
        %1701 = vadd.xlane.f32.xlu0 %v1700
        %v1702 = vpop.xlane.xlu0 %1701
        %v1703 = vadd.f32 %v1518, %v1520
        %1704 = vadd.xlane.f32.xlu0 %v1703
        %v1705 = vpop.xlane.xlu0 %1704
        %v1706 = vadd.f32 %v1522, %v1524
        %1707 = vadd.xlane.f32.xlu0 %v1706
        %v1708 = vpop.xlane.xlu0 %1707
        %v1709 = vadd.f32 %v1526, %v1528
        %1710 = vadd.xlane.f32.xlu0 %v1709
        %v1711 = vpop.xlane.xlu0 %1710
        %v1712 = vadd.f32 %v1530, %v1532
        %1713 = vadd.xlane.f32.xlu0 %v1712
        %v1714 = vpop.xlane.xlu0 %1713
        %v1715 = vadd.f32 %v1534, %v1536
        %1716 = vadd.xlane.f32.xlu0 %v1715
        %v1717 = vpop.xlane.xlu0 %1716
        %v1718 = vadd.f32 %v1538, %v1540
        %1719 = vadd.xlane.f32.xlu0 %v1718
        %v1720 = vpop.xlane.xlu0 %1719
        %v1721 = vadd.f32 %v1542, %v1544
        %1722 = vadd.xlane.f32.xlu0 %v1721
        %v1723 = vpop.xlane.xlu0 %1722
        %v1724 = vadd.f32 %v1546, %v1548
        %1725 = vadd.xlane.f32.xlu0 %v1724
        %v1726 = vpop.xlane.xlu0 %1725
        %v1727 = vadd.f32 %v1550, %v1552
        %1728 = vadd.xlane.f32.xlu0 %v1727
        %v1729 = vpop.xlane.xlu0 %1728
        %v1730 = vadd.f32 %v1554, %v1556
        %1731 = vadd.xlane.f32.xlu0 %v1730
        %v1732 = vpop.xlane.xlu0 %1731
        %v1733 = vadd.f32 %v1558, %v1560
        %1734 = vadd.xlane.f32.xlu0 %v1733
        %v1735 = vpop.xlane.xlu0 %1734
        %v1736 = vadd.f32 %v1562, %v1564
        %1737 = vadd.xlane.f32.xlu0 %v1736
        %v1738 = vpop.xlane.xlu0 %1737
        %v1739 = vadd.f32 %v1566, %v1568
        %1740 = vadd.xlane.f32.xlu0 %v1739
        %v1741 = vpop.xlane.xlu0 %1740
        %v1742 = vadd.f32 %v1570, %v1572
        %1743 = vadd.xlane.f32.xlu0 %v1742
        %v1744 = vpop.xlane.xlu0 %1743
        %v1745 = vadd.f32 %v1574, %v1576
        %1746 = vadd.xlane.f32.xlu0 %v1745
        %v1747 = vpop.xlane.xlu0 %1746
        %v1748 = vadd.f32 %v1578, %v1580
        %1749 = vadd.xlane.f32.xlu0 %v1748
        %v1750 = vpop.xlane.xlu0 %1749
        %v1751 = vadd.f32 %v1582, %v1584
        %1752 = vadd.xlane.f32.xlu0 %v1751
        %v1753 = vpop.xlane.xlu0 %1752
        %v1754 = vadd.f32 %v1586, %v1588
        %1755 = vadd.xlane.f32.xlu0 %v1754
        %v1756 = vpop.xlane.xlu0 %1755
        %v1757 = vadd.f32 %v1590, %v1592
        %1758 = vadd.xlane.f32.xlu0 %v1757
        %v1759 = vpop.xlane.xlu0 %1758
        %v1760 = vadd.f32 %v1594, %v1596
        %1761 = vadd.xlane.f32.xlu0 %v1760
        %v1762 = vpop.xlane.xlu0 %1761
        %v1763 = vadd.f32 %v1598, %v1600
        %1764 = vadd.xlane.f32.xlu0 %v1763
        %v1765 = vpop.xlane.xlu0 %1764
        %v1766 = vadd.f32 %v1602, %v1604
        %1767 = vadd.xlane.f32.xlu0 %v1766
        %v1768 = vpop.xlane.xlu0 %1767
        %v1769 = vadd.f32 %v1606, %v1608
        %1770 = vadd.xlane.f32.xlu0 %v1769
        %v1771 = vpop.xlane.xlu0 %1770
        %v1772 = vadd.f32 %v1610, %v1612
        %1773 = vadd.xlane.f32.xlu0 %v1772
        %v1774 = vpop.xlane.xlu0 %1773
        %v1775 = vadd.f32 %v1614, %v1616
        %1776 = vadd.xlane.f32.xlu0 %v1775
        %v1777 = vpop.xlane.xlu0 %1776
        %v1778 = vadd.f32 %v1618, %v1620
        %1779 = vadd.xlane.f32.xlu0 %v1778
        %v1780 = vpop.xlane.xlu0 %1779
        %v1781 = vadd.f32 %v1653, %v1687
        %v1782 = vadd.f32 %v1654, %v1690
        %v1783 = vadd.f32 %v1655, %v1693
        %v1784 = vadd.f32 %v1656, %v1696
        %v1785 = vadd.f32 %v1657, %v1699
        %v1786 = vadd.f32 %v1658, %v1702
        %v1787 = vadd.f32 %v1659, %v1705
        %v1788 = vadd.f32 %v1660, %v1708
        %v1789 = vadd.f32 %v1661, %v1711
        %v1790 = vadd.f32 %v1662, %v1714
        %v1791 = vadd.f32 %v1663, %v1717
        %v1792 = vadd.f32 %v1664, %v1720
        %v1793 = vadd.f32 %v1665, %v1723
        %v1794 = vadd.f32 %v1666, %v1726
        %v1795 = vadd.f32 %v1667, %v1729
        %v1796 = vadd.f32 %v1668, %v1732
        %v1797 = vadd.f32 %v1669, %v1735
        %v1798 = vadd.f32 %v1670, %v1738
        %v1799 = vadd.f32 %v1671, %v1741
        %v1800 = vadd.f32 %v1672, %v1744
        %v1801 = vadd.f32 %v1673, %v1747
        %v1802 = vadd.f32 %v1674, %v1750
        %v1803 = vadd.f32 %v1675, %v1753
        %v1804 = vadd.f32 %v1676, %v1756
        %v1805 = vadd.f32 %v1677, %v1759
        %v1806 = vadd.f32 %v1678, %v1762
        %v1807 = vadd.f32 %v1679, %v1765
        %v1808 = vadd.f32 %v1680, %v1768
        %v1809 = vadd.f32 %v1681, %v1771
        %v1810 = vadd.f32 %v1682, %v1774
        %v1811 = vadd.f32 %v1683, %v1777
        %v1812 = vadd.f32 %v1684, %v1780
        %vm1813 = vcmask 7168
        %1814 = vst.msk [vmem:[#allocation3] sm:$0xff] %vm1813, %v1781
        %1815 = vst.msk [vmem:[#allocation3 + $0x8] sm:$0xff] %vm1813, %v1782
        %1816 = vst.msk [vmem:[#allocation3 + $0x10] sm:$0xff] %vm1813, %v1783
        %1817 = vst.msk [vmem:[#allocation3 + $0x18] sm:$0xff] %vm1813, %v1784
        %1818 = vst.msk [vmem:[#allocation3 + $0x20] sm:$0xff] %vm1813, %v1785
        %1819 = vst.msk [vmem:[#allocation3 + $0x28] sm:$0xff] %vm1813, %v1786
        %1820 = vst.msk [vmem:[#allocation3 + $0x30] sm:$0xff] %vm1813, %v1787
        %1821 = vst.msk [vmem:[#allocation3 + $0x38] sm:$0xff] %vm1813, %v1788
        %1822 = vst.msk [vmem:[#allocation3 + $0x40] sm:$0xff] %vm1813, %v1789
        %1823 = vst.msk [vmem:[#allocation3 + $0x48] sm:$0xff] %vm1813, %v1790
        %1824 = vst.msk [vmem:[#allocation3 + $0x50] sm:$0xff] %vm1813, %v1791
        %1825 = vst.msk [vmem:[#allocation3 + $0x58] sm:$0xff] %vm1813, %v1792
        %1826 = vst.msk [vmem:[#allocation3 + $0x60] sm:$0xff] %vm1813, %v1793
        %1827 = vst.msk [vmem:[#allocation3 + $0x68] sm:$0xff] %vm1813, %v1794
        %1828 = vst.msk [vmem:[#allocation3 + $0x70] sm:$0xff] %vm1813, %v1795
        %1829 = vst.msk [vmem:[#allocation3 + $0x78] sm:$0xff] %vm1813, %v1796
        %1830 = vst.msk [vmem:[#allocation3 + $0x80] sm:$0xff] %vm1813, %v1797
        %1831 = vst.msk [vmem:[#allocation3 + $0x88] sm:$0xff] %vm1813, %v1798
        %1832 = vst.msk [vmem:[#allocation3 + $0x90] sm:$0xff] %vm1813, %v1799
        %1833 = vst.msk [vmem:[#allocation3 + $0x98] sm:$0xff] %vm1813, %v1800
        %1834 = vst.msk [vmem:[#allocation3 + $0xa0] sm:$0xff] %vm1813, %v1801
        %1835 = vst.msk [vmem:[#allocation3 + $0xa8] sm:$0xff] %vm1813, %v1802
        %1836 = vst.msk [vmem:[#allocation3 + $0xb0] sm:$0xff] %vm1813, %v1803
        %1837 = vst.msk [vmem:[#allocation3 + $0xb8] sm:$0xff] %vm1813, %v1804
        %1838 = vst.msk [vmem:[#allocation3 + $0xc0] sm:$0xff] %vm1813, %v1805
        %1839 = vst.msk [vmem:[#allocation3 + $0xc8] sm:$0xff] %vm1813, %v1806
        %1840 = vst.msk [vmem:[#allocation3 + $0xd0] sm:$0xff] %vm1813, %v1807
        %1841 = vst.msk [vmem:[#allocation3 + $0xd8] sm:$0xff] %vm1813, %v1808
        %1842 = vst.msk [vmem:[#allocation3 + $0xe0] sm:$0xff] %vm1813, %v1809
        %1843 = vst.msk [vmem:[#allocation3 + $0xe8] sm:$0xff] %vm1813, %v1810
        %1844 = vst.msk [vmem:[#allocation3 + $0xf0] sm:$0xff] %vm1813, %v1811
        %1845 = vst.msk [vmem:[#allocation3 + $0xf8] sm:$0xff] %vm1813, %v1812
        %v1846 = vld [vmem:[#allocation4] sm:$0xff]
        %v1847 = vld [vmem:[#allocation4 + $0x8] sm:$0xff]
        %v1848 = vld [vmem:[#allocation4 + $0x10] sm:$0xff]
        %v1849 = vld [vmem:[#allocation4 + $0x18] sm:$0xff]
        %v1850 = vld [vmem:[#allocation4 + $0x20] sm:$0xff]
        %v1851 = vld [vmem:[#allocation4 + $0x28] sm:$0xff]
        %v1852 = vld [vmem:[#allocation4 + $0x30] sm:$0xff]
        %v1853 = vld [vmem:[#allocation4 + $0x38] sm:$0xff]
        %v1854 = vld [vmem:[#allocation4 + $0x40] sm:$0xff]
        %v1855 = vld [vmem:[#allocation4 + $0x48] sm:$0xff]
        %v1856 = vld [vmem:[#allocation4 + $0x50] sm:$0xff]
        %v1857 = vld [vmem:[#allocation4 + $0x58] sm:$0xff]
        %v1858 = vld [vmem:[#allocation4 + $0x60] sm:$0xff]
        %v1859 = vld [vmem:[#allocation4 + $0x68] sm:$0xff]
        %v1860 = vld [vmem:[#allocation4 + $0x70] sm:$0xff]
        %v1861 = vld [vmem:[#allocation4 + $0x78] sm:$0xff]
        %v1862 = vld [vmem:[#allocation4 + $0x80] sm:$0xff]
        %v1863 = vld [vmem:[#allocation4 + $0x88] sm:$0xff]
        %v1864 = vld [vmem:[#allocation4 + $0x90] sm:$0xff]
        %v1865 = vld [vmem:[#allocation4 + $0x98] sm:$0xff]
        %v1866 = vld [vmem:[#allocation4 + $0xa0] sm:$0xff]
        %v1867 = vld [vmem:[#allocation4 + $0xa8] sm:$0xff]
        %v1868 = vld [vmem:[#allocation4 + $0xb0] sm:$0xff]
        %v1869 = vld [vmem:[#allocation4 + $0xb8] sm:$0xff]
        %v1870 = vld [vmem:[#allocation4 + $0xc0] sm:$0xff]
        %v1871 = vld [vmem:[#allocation4 + $0xc8] sm:$0xff]
        %v1872 = vld [vmem:[#allocation4 + $0xd0] sm:$0xff]
        %v1873 = vld [vmem:[#allocation4 + $0xd8] sm:$0xff]
        %v1874 = vld [vmem:[#allocation4 + $0xe0] sm:$0xff]
        %v1875 = vld [vmem:[#allocation4 + $0xe8] sm:$0xff]
        %v1876 = vld [vmem:[#allocation4 + $0xf0] sm:$0xff]
        %v1877 = vld [vmem:[#allocation4 + $0xf8] sm:$0xff]
        %1879 = vset.pattern.permute.xlu0 0
        %1880 = vperm.xlu0 %1879, %v1206
        %v1881 = vpop.permute.xlu0 %1880
        %1884 = vset.pattern.permute.xlu0 0
        %1885 = vperm.xlu0 %1884, %v1208
        %v1886 = vpop.permute.xlu0 %1885
        %1889 = vset.pattern.permute.xlu0 0
        %1890 = vperm.xlu0 %1889, %v1210
        %v1891 = vpop.permute.xlu0 %1890
        %1894 = vset.pattern.permute.xlu0 0
        %1895 = vperm.xlu0 %1894, %v1212
        %v1896 = vpop.permute.xlu0 %1895
        %1899 = vset.pattern.permute.xlu0 0
        %1900 = vperm.xlu0 %1899, %v1214
        %v1901 = vpop.permute.xlu0 %1900
        %1904 = vset.pattern.permute.xlu0 0
        %1905 = vperm.xlu0 %1904, %v1216
        %v1906 = vpop.permute.xlu0 %1905
        %1909 = vset.pattern.permute.xlu0 0
        %1910 = vperm.xlu0 %1909, %v1218
        %v1911 = vpop.permute.xlu0 %1910
        %1914 = vset.pattern.permute.xlu0 0
        %1915 = vperm.xlu0 %1914, %v1220
        %v1916 = vpop.permute.xlu0 %1915
        %1919 = vset.pattern.permute.xlu0 0
        %1920 = vperm.xlu0 %1919, %v1222
        %v1921 = vpop.permute.xlu0 %1920
        %1924 = vset.pattern.permute.xlu0 0
        %1925 = vperm.xlu0 %1924, %v1224
        %v1926 = vpop.permute.xlu0 %1925
        %1929 = vset.pattern.permute.xlu0 0
        %1930 = vperm.xlu0 %1929, %v1226
        %v1931 = vpop.permute.xlu0 %1930
        %1934 = vset.pattern.permute.xlu0 0
        %1935 = vperm.xlu0 %1934, %v1228
        %v1936 = vpop.permute.xlu0 %1935
        %1939 = vset.pattern.permute.xlu0 0
        %1940 = vperm.xlu0 %1939, %v1230
        %v1941 = vpop.permute.xlu0 %1940
        %1944 = vset.pattern.permute.xlu0 0
        %1945 = vperm.xlu0 %1944, %v1232
        %v1946 = vpop.permute.xlu0 %1945
        %1949 = vset.pattern.permute.xlu0 0
        %1950 = vperm.xlu0 %1949, %v1234
        %v1951 = vpop.permute.xlu0 %1950
        %1954 = vset.pattern.permute.xlu0 0
        %1955 = vperm.xlu0 %1954, %v1236
        %v1956 = vpop.permute.xlu0 %1955
        %1959 = vset.pattern.permute.xlu0 0
        %1960 = vperm.xlu0 %1959, %v1238
        %v1961 = vpop.permute.xlu0 %1960
        %1964 = vset.pattern.permute.xlu0 0
        %1965 = vperm.xlu0 %1964, %v1240
        %v1966 = vpop.permute.xlu0 %1965
        %1969 = vset.pattern.permute.xlu0 0
        %1970 = vperm.xlu0 %1969, %v1242
        %v1971 = vpop.permute.xlu0 %1970
        %1974 = vset.pattern.permute.xlu0 0
        %1975 = vperm.xlu0 %1974, %v1244
        %v1976 = vpop.permute.xlu0 %1975
        %1979 = vset.pattern.permute.xlu0 0
        %1980 = vperm.xlu0 %1979, %v1246
        %v1981 = vpop.permute.xlu0 %1980
        %1984 = vset.pattern.permute.xlu0 0
        %1985 = vperm.xlu0 %1984, %v1248
        %v1986 = vpop.permute.xlu0 %1985
        %1989 = vset.pattern.permute.xlu0 0
        %1990 = vperm.xlu0 %1989, %v1250
        %v1991 = vpop.permute.xlu0 %1990
        %1994 = vset.pattern.permute.xlu0 0
        %1995 = vperm.xlu0 %1994, %v1252
        %v1996 = vpop.permute.xlu0 %1995
        %1999 = vset.pattern.permute.xlu0 0
        %2000 = vperm.xlu0 %1999, %v1254
        %v2001 = vpop.permute.xlu0 %2000
        %2004 = vset.pattern.permute.xlu0 0
        %2005 = vperm.xlu0 %2004, %v1256
        %v2006 = vpop.permute.xlu0 %2005
        %2009 = vset.pattern.permute.xlu0 0
        %2010 = vperm.xlu0 %2009, %v1258
        %v2011 = vpop.permute.xlu0 %2010
        %2014 = vset.pattern.permute.xlu0 0
        %2015 = vperm.xlu0 %2014, %v1260
        %v2016 = vpop.permute.xlu0 %2015
        %2019 = vset.pattern.permute.xlu0 0
        %2020 = vperm.xlu0 %2019, %v1262
        %v2021 = vpop.permute.xlu0 %2020
        %2024 = vset.pattern.permute.xlu0 0
        %2025 = vperm.xlu0 %2024, %v1264
        %v2026 = vpop.permute.xlu0 %2025
        %2029 = vset.pattern.permute.xlu0 0
        %2030 = vperm.xlu0 %2029, %v1266
        %v2031 = vpop.permute.xlu0 %2030
        %2034 = vset.pattern.permute.xlu0 0
        %2035 = vperm.xlu0 %2034, %v1268
        %v2036 = vpop.permute.xlu0 %2035
        %v2038 = vmul.f32 %v1881, %v1846
        %v2039 = vmul.f32 %v1886, %v1847
        %v2040 = vmul.f32 %v1891, %v1848
        %v2041 = vmul.f32 %v1896, %v1849
        %v2042 = vmul.f32 %v1901, %v1850
        %v2043 = vmul.f32 %v1906, %v1851
        %v2044 = vmul.f32 %v1911, %v1852
        %v2045 = vmul.f32 %v1916, %v1853
        %v2046 = vmul.f32 %v1921, %v1854
        %v2047 = vmul.f32 %v1926, %v1855
        %v2048 = vmul.f32 %v1931, %v1856
        %v2049 = vmul.f32 %v1936, %v1857
        %v2050 = vmul.f32 %v1941, %v1858
        %v2051 = vmul.f32 %v1946, %v1859
        %v2052 = vmul.f32 %v1951, %v1860
        %v2053 = vmul.f32 %v1956, %v1861
        %v2054 = vmul.f32 %v1961, %v1862
        %v2055 = vmul.f32 %v1966, %v1863
        %v2056 = vmul.f32 %v1971, %v1864
        %v2057 = vmul.f32 %v1976, %v1865
        %v2058 = vmul.f32 %v1981, %v1866
        %v2059 = vmul.f32 %v1986, %v1867
        %v2060 = vmul.f32 %v1991, %v1868
        %v2061 = vmul.f32 %v1996, %v1869
        %v2062 = vmul.f32 %v2001, %v1870
        %v2063 = vmul.f32 %v2006, %v1871
        %v2064 = vmul.f32 %v2011, %v1872
        %v2065 = vmul.f32 %v2016, %v1873
        %v2066 = vmul.f32 %v2021, %v1874
        %v2067 = vmul.f32 %v2026, %v1875
        %v2068 = vmul.f32 %v2031, %v1876
        %v2069 = vmul.f32 %v2036, %v1877
        %v2070 = vpack.c.bf16 %v1498, %v1494
        %v2071 = vpack.c.bf16 %v1500, %v1496
        %v2072 = vpack.c.bf16 %v1506, %v1502
        %v2073 = vpack.c.bf16 %v1508, %v1504
        %v2074 = vpack.c.bf16 %v1514, %v1510
        %v2075 = vpack.c.bf16 %v1516, %v1512
        %v2076 = vpack.c.bf16 %v1522, %v1518
        %v2077 = vpack.c.bf16 %v1524, %v1520
        %v2078 = vpack.c.bf16 %v1530, %v1526
        %v2079 = vpack.c.bf16 %v1532, %v1528
        %v2080 = vpack.c.bf16 %v1538, %v1534
        %v2081 = vpack.c.bf16 %v1540, %v1536
        %v2082 = vpack.c.bf16 %v1546, %v1542
        %v2083 = vpack.c.bf16 %v1548, %v1544
        %v2084 = vpack.c.bf16 %v1554, %v1550
        %v2085 = vpack.c.bf16 %v1556, %v1552
        %v2086 = vpack.c.bf16 %v1562, %v1558
        %v2087 = vpack.c.bf16 %v1564, %v1560
        %v2088 = vpack.c.bf16 %v1570, %v1566
        %v2089 = vpack.c.bf16 %v1572, %v1568
        %v2090 = vpack.c.bf16 %v1578, %v1574
        %v2091 = vpack.c.bf16 %v1580, %v1576
        %v2092 = vpack.c.bf16 %v1586, %v1582
        %v2093 = vpack.c.bf16 %v1588, %v1584
        %v2094 = vpack.c.bf16 %v1594, %v1590
        %v2095 = vpack.c.bf16 %v1596, %v1592
        %v2096 = vpack.c.bf16 %v1602, %v1598
        %v2097 = vpack.c.bf16 %v1604, %v1600
        %v2098 = vpack.c.bf16 %v1610, %v1606
        %v2099 = vpack.c.bf16 %v1612, %v1608
        %v2100 = vpack.c.bf16 %v1618, %v1614
        %v2101 = vpack.c.bf16 %v1620, %v1616
        %v2102 = vld [vmem:[%s383] sm:$0xf]
        %v2103 = vld [vmem:[%s383 + $0x4] sm:$0xf]
        %v2104 = vld [vmem:[%s383 + $0x8] sm:$0xf]
        %v2105 = vld [vmem:[%s383 + $0xc] sm:$0xf]
        %v2106 = vld [vmem:[%s383 + $0x10] sm:$0xf]
        %v2107 = vld [vmem:[%s383 + $0x14] sm:$0xf]
        %v2108 = vld [vmem:[%s383 + $0x18] sm:$0xf]
        %v2109 = vld [vmem:[%s383 + $0x1c] sm:$0xf]
        %v2110 = vld [vmem:[%s383 + $0x20] sm:$0xf]
        %v2111 = vld [vmem:[%s383 + $0x24] sm:$0xf]
        %v2112 = vld [vmem:[%s383 + $0x28] sm:$0xf]
        %v2113 = vld [vmem:[%s383 + $0x2c] sm:$0xf]
        %v2114 = vld [vmem:[%s383 + $0x30] sm:$0xf]
        %v2115 = vld [vmem:[%s383 + $0x34] sm:$0xf]
        %v2116 = vld [vmem:[%s383 + $0x38] sm:$0xf]
        %v2117 = vld [vmem:[%s383 + $0x3c] sm:$0xf]
        %v2118 = vld [vmem:[%s383 + $0x40] sm:$0xf]
        %v2119 = vld [vmem:[%s383 + $0x44] sm:$0xf]
        %v2120 = vld [vmem:[%s383 + $0x48] sm:$0xf]
        %v2121 = vld [vmem:[%s383 + $0x4c] sm:$0xf]
        %v2122 = vld [vmem:[%s383 + $0x50] sm:$0xf]
        %v2123 = vld [vmem:[%s383 + $0x54] sm:$0xf]
        %v2124 = vld [vmem:[%s383 + $0x58] sm:$0xf]
        %v2125 = vld [vmem:[%s383 + $0x5c] sm:$0xf]
        %v2126 = vld [vmem:[%s383 + $0x60] sm:$0xf]
        %v2127 = vld [vmem:[%s383 + $0x64] sm:$0xf]
        %v2128 = vld [vmem:[%s383 + $0x68] sm:$0xf]
        %v2129 = vld [vmem:[%s383 + $0x6c] sm:$0xf]
        %v2130 = vld [vmem:[%s383 + $0x70] sm:$0xf]
        %v2131 = vld [vmem:[%s383 + $0x74] sm:$0xf]
        %v2132 = vld [vmem:[%s383 + $0x78] sm:$0xf]
        %v2133 = vld [vmem:[%s383 + $0x7c] sm:$0xf]
        %v2166 = vunpack.c.l.b16 %v2102
        %v2167 = vunpack.c.l.b16 %v2103
        %v2168 = vunpack.c.l.b16 %v2104
        %v2169 = vunpack.c.l.b16 %v2105
        %v2170 = vunpack.c.l.b16 %v2106
        %v2171 = vunpack.c.l.b16 %v2107
        %v2172 = vunpack.c.l.b16 %v2108
        %v2173 = vunpack.c.l.b16 %v2109
        %v2174 = vunpack.c.l.b16 %v2110
        %v2175 = vunpack.c.l.b16 %v2111
        %v2176 = vunpack.c.l.b16 %v2112
        %v2177 = vunpack.c.l.b16 %v2113
        %v2178 = vunpack.c.l.b16 %v2114
        %v2179 = vunpack.c.l.b16 %v2115
        %v2180 = vunpack.c.l.b16 %v2116
        %v2181 = vunpack.c.l.b16 %v2117
        %v2182 = vunpack.c.l.b16 %v2118
        %v2183 = vunpack.c.l.b16 %v2119
        %v2184 = vunpack.c.l.b16 %v2120
        %v2185 = vunpack.c.l.b16 %v2121
        %v2186 = vunpack.c.l.b16 %v2122
        %v2187 = vunpack.c.l.b16 %v2123
        %v2188 = vunpack.c.l.b16 %v2124
        %v2189 = vunpack.c.l.b16 %v2125
        %v2190 = vunpack.c.l.b16 %v2126
        %v2191 = vunpack.c.l.b16 %v2127
        %v2192 = vunpack.c.l.b16 %v2128
        %v2193 = vunpack.c.l.b16 %v2129
        %v2194 = vunpack.c.l.b16 %v2130
        %v2195 = vunpack.c.l.b16 %v2131
        %v2196 = vunpack.c.l.b16 %v2132
        %v2197 = vunpack.c.l.b16 %v2133
        %v2198 = vpack.c.b16 %v2167, %v2166
        %v2199 = vpack.c.b16 %v2169, %v2168
        %v2200 = vpack.c.b16 %v2171, %v2170
        %v2201 = vpack.c.b16 %v2173, %v2172
        %v2202 = vpack.c.b16 %v2175, %v2174
        %v2203 = vpack.c.b16 %v2177, %v2176
        %v2204 = vpack.c.b16 %v2179, %v2178
        %v2205 = vpack.c.b16 %v2181, %v2180
        %v2206 = vpack.c.b16 %v2183, %v2182
        %v2207 = vpack.c.b16 %v2185, %v2184
        %v2208 = vpack.c.b16 %v2187, %v2186
        %v2209 = vpack.c.b16 %v2189, %v2188
        %v2210 = vpack.c.b16 %v2191, %v2190
        %v2211 = vpack.c.b16 %v2193, %v2192
        %v2212 = vpack.c.b16 %v2195, %v2194
        %v2213 = vpack.c.b16 %v2197, %v2196
        %2230 = vmatprep.subr.bf16.mxu0 0
        %2231 = vmatpush1.bf16.msra.mxu0 %v2198
        %2232 = vmatprep.subr.bf16.mxu0 0
        %2233 = vmatpush1.bf16.msra.mxu0 %v2199
        %2234 = vmatprep.subr.bf16.mxu0 0
        %2235 = vmatpush1.bf16.msra.mxu0 %v2200
        %2236 = vmatprep.subr.bf16.mxu0 0
        %2237 = vmatpush1.bf16.msra.mxu0 %v2201
        %2238 = vmatprep.subr.bf16.mxu0 0
        %2239 = vmatpush1.bf16.msra.mxu0 %v2202
        %2240 = vmatprep.subr.bf16.mxu0 0
        %2241 = vmatpush1.bf16.msra.mxu0 %v2203
        %2242 = vmatprep.subr.bf16.mxu0 0
        %2243 = vmatpush1.bf16.msra.mxu0 %v2204
        %2244 = vmatprep.subr.bf16.mxu0 0
        %2245 = vmatpush1.bf16.msra.mxu0 %v2205
        %2246 = vmatprep.subr.bf16.mxu0 0
        %2247 = vmatpush1.bf16.msra.mxu0 %v2206
        %2248 = vmatprep.subr.bf16.mxu0 0
        %2249 = vmatpush1.bf16.msra.mxu0 %v2207
        %2250 = vmatprep.subr.bf16.mxu0 0
        %2251 = vmatpush1.bf16.msra.mxu0 %v2208
        %2252 = vmatprep.subr.bf16.mxu0 0
        %2253 = vmatpush1.bf16.msra.mxu0 %v2209
        %2254 = vmatprep.subr.bf16.mxu0 0
        %2255 = vmatpush1.bf16.msra.mxu0 %v2210
        %2256 = vmatprep.subr.bf16.mxu0 0
        %2257 = vmatpush1.bf16.msra.mxu0 %v2211
        %2258 = vmatprep.subr.bf16.mxu0 0
        %2259 = vmatpush1.bf16.msra.mxu0 %v2212
        %2260 = vmatprep.subr.bf16.mxu0 0
        %2261 = vmatpush1.bf16.msra.mxu0 %v2213
        %2262 = vmatprep.mubr.bf16.mxu0 %v2071
        %2263 = vmatmul.mubr.bf16.gmra.mrb[0].mxu0 %v2070
        %v2264 = vpop.f32.mrb[0].mxu0
        %v2265 = vadd.f32 0.0, %v2264
        %v2266 = vpop.f32.mrb[0].mxu0
        %v2267 = vpop.f32.mrb[0].mxu0
        %v2268 = vadd.f32 0.0, %v2267
        %v2269 = vpop.f32.mrb[0].mxu0
        %2270 = vmatprep.mubr.bf16.mxu0 %v2073
        %2271 = vmatmul.mubr.bf16.gmra.mrb[0].mxu0 %v2072
        %v2272 = vpop.f32.mrb[0].mxu0
        %v2273 = vadd.f32 0.0, %v2272
        %v2274 = vpop.f32.mrb[0].mxu0
        %v2275 = vpop.f32.mrb[0].mxu0
        %v2276 = vadd.f32 0.0, %v2275
        %v2277 = vpop.f32.mrb[0].mxu0
        %2278 = vmatprep.mubr.bf16.mxu0 %v2075
        %2279 = vmatmul.mubr.bf16.gmra.mrb[0].mxu0 %v2074
        %v2280 = vpop.f32.mrb[0].mxu0
        %v2281 = vadd.f32 0.0, %v2280
        %v2282 = vpop.f32.mrb[0].mxu0
        %v2283 = vpop.f32.mrb[0].mxu0
        %v2284 = vadd.f32 0.0, %v2283
        %v2285 = vpop.f32.mrb[0].mxu0
        %2286 = vmatprep.mubr.bf16.mxu0 %v2077
        %2287 = vmatmul.mubr.bf16.gmra.mrb[0].mxu0 %v2076
        %v2288 = vpop.f32.mrb[0].mxu0
        %v2289 = vadd.f32 0.0, %v2288
        %v2290 = vpop.f32.mrb[0].mxu0
        %v2291 = vpop.f32.mrb[0].mxu0
        %v2292 = vadd.f32 0.0, %v2291
        %v2293 = vpop.f32.mrb[0].mxu0
        %2294 = vmatprep.mubr.bf16.mxu0 %v2079
        %2295 = vmatmul.mubr.bf16.gmra.mrb[0].mxu0 %v2078
        %v2296 = vpop.f32.mrb[0].mxu0
        %v2297 = vadd.f32 0.0, %v2296
        %v2298 = vpop.f32.mrb[0].mxu0
        %v2299 = vpop.f32.mrb[0].mxu0
        %v2300 = vadd.f32 0.0, %v2299
        %v2301 = vpop.f32.mrb[0].mxu0
        %2302 = vmatprep.mubr.bf16.mxu0 %v2081
        %2303 = vmatmul.mubr.bf16.gmra.mrb[0].mxu0 %v2080
        %v2304 = vpop.f32.mrb[0].mxu0
        %v2305 = vadd.f32 0.0, %v2304
        %v2306 = vpop.f32.mrb[0].mxu0
        %v2307 = vpop.f32.mrb[0].mxu0
        %v2308 = vadd.f32 0.0, %v2307
        %v2309 = vpop.f32.mrb[0].mxu0
        %2310 = vmatprep.mubr.bf16.mxu0 %v2083
        %2311 = vmatmul.mubr.bf16.gmra.mrb[0].mxu0 %v2082
        %v2312 = vpop.f32.mrb[0].mxu0
        %v2313 = vadd.f32 0.0, %v2312
        %v2314 = vpop.f32.mrb[0].mxu0
        %v2315 = vpop.f32.mrb[0].mxu0
        %v2316 = vadd.f32 0.0, %v2315
        %v2317 = vpop.f32.mrb[0].mxu0
        %2318 = vmatprep.mubr.bf16.mxu0 %v2085
        %2319 = vmatmul.mubr.bf16.gmra.mrb[0].mxu0 %v2084
        %v2320 = vpop.f32.mrb[0].mxu0
        %v2321 = vadd.f32 0.0, %v2320
        %v2322 = vpop.f32.mrb[0].mxu0
        %v2323 = vpop.f32.mrb[0].mxu0
        %v2324 = vadd.f32 0.0, %v2323
        %v2325 = vpop.f32.mrb[0].mxu0
        %2326 = vmatprep.mubr.bf16.mxu0 %v2087
        %2327 = vmatmul.mubr.bf16.gmra.mrb[0].mxu0 %v2086
        %v2328 = vpop.f32.mrb[0].mxu0
        %v2329 = vadd.f32 0.0, %v2328
        %v2330 = vpop.f32.mrb[0].mxu0
        %v2331 = vpop.f32.mrb[0].mxu0
        %v2332 = vadd.f32 0.0, %v2331
        %v2333 = vpop.f32.mrb[0].mxu0
        %2334 = vmatprep.mubr.bf16.mxu0 %v2089
        %2335 = vmatmul.mubr.bf16.gmra.mrb[0].mxu0 %v2088
        %v2336 = vpop.f32.mrb[0].mxu0
        %v2337 = vadd.f32 0.0, %v2336
        %v2338 = vpop.f32.mrb[0].mxu0
        %v2339 = vpop.f32.mrb[0].mxu0
        %v2340 = vadd.f32 0.0, %v2339
        %v2341 = vpop.f32.mrb[0].mxu0
        %2342 = vmatprep.mubr.bf16.mxu0 %v2091
        %2343 = vmatmul.mubr.bf16.gmra.mrb[0].mxu0 %v2090
        %v2344 = vpop.f32.mrb[0].mxu0
        %v2345 = vadd.f32 0.0, %v2344
        %v2346 = vpop.f32.mrb[0].mxu0
        %v2347 = vpop.f32.mrb[0].mxu0
        %v2348 = vadd.f32 0.0, %v2347
        %v2349 = vpop.f32.mrb[0].mxu0
        %2350 = vmatprep.mubr.bf16.mxu0 %v2093
        %2351 = vmatmul.mubr.bf16.gmra.mrb[0].mxu0 %v2092
        %v2352 = vpop.f32.mrb[0].mxu0
        %v2353 = vadd.f32 0.0, %v2352
        %v2354 = vpop.f32.mrb[0].mxu0
        %v2355 = vpop.f32.mrb[0].mxu0
        %v2356 = vadd.f32 0.0, %v2355
        %v2357 = vpop.f32.mrb[0].mxu0
        %2358 = vmatprep.mubr.bf16.mxu0 %v2095
        %2359 = vmatmul.mubr.bf16.gmra.mrb[0].mxu0 %v2094
        %v2360 = vpop.f32.mrb[0].mxu0
        %v2361 = vadd.f32 0.0, %v2360
        %v2362 = vpop.f32.mrb[0].mxu0
        %v2363 = vpop.f32.mrb[0].mxu0
        %v2364 = vadd.f32 0.0, %v2363
        %v2365 = vpop.f32.mrb[0].mxu0
        %2366 = vmatprep.mubr.bf16.mxu0 %v2097
        %2367 = vmatmul.mubr.bf16.gmra.mrb[0].mxu0 %v2096
        %v2368 = vpop.f32.mrb[0].mxu0
        %v2369 = vadd.f32 0.0, %v2368
        %v2370 = vpop.f32.mrb[0].mxu0
        %v2371 = vpop.f32.mrb[0].mxu0
        %v2372 = vadd.f32 0.0, %v2371
        %v2373 = vpop.f32.mrb[0].mxu0
        %2374 = vmatprep.mubr.bf16.mxu0 %v2099
        %2375 = vmatmul.mubr.bf16.gmra.mrb[0].mxu0 %v2098
        %v2376 = vpop.f32.mrb[0].mxu0
        %v2377 = vadd.f32 0.0, %v2376
        %v2378 = vpop.f32.mrb[0].mxu0
        %v2379 = vpop.f32.mrb[0].mxu0
        %v2380 = vadd.f32 0.0, %v2379
        %v2381 = vpop.f32.mrb[0].mxu0
        %2382 = vmatprep.mubr.bf16.mxu0 %v2101
        %2383 = vmatmul.mubr.bf16.gmra.mrb[0].mxu0 %v2100
        %v2384 = vpop.f32.mrb[0].mxu0
        %v2385 = vadd.f32 0.0, %v2384
        %v2386 = vpop.f32.mrb[0].mxu0
        %v2387 = vpop.f32.mrb[0].mxu0
        %v2388 = vadd.f32 0.0, %v2387
        %v2389 = vpop.f32.mrb[0].mxu0
        %2390 = vdwg.mxu0
        %v2391 = vadd.f32 %v2038, %v2265
        %v2392 = vadd.f32 %v2039, %v2268
        %v2393 = vadd.f32 %v2040, %v2273
        %v2394 = vadd.f32 %v2041, %v2276
        %v2395 = vadd.f32 %v2042, %v2281
        %v2396 = vadd.f32 %v2043, %v2284
        %v2397 = vadd.f32 %v2044, %v2289
        %v2398 = vadd.f32 %v2045, %v2292
        %v2399 = vadd.f32 %v2046, %v2297
        %v2400 = vadd.f32 %v2047, %v2300
        %v2401 = vadd.f32 %v2048, %v2305
        %v2402 = vadd.f32 %v2049, %v2308
        %v2403 = vadd.f32 %v2050, %v2313
        %v2404 = vadd.f32 %v2051, %v2316
        %v2405 = vadd.f32 %v2052, %v2321
        %v2406 = vadd.f32 %v2053, %v2324
        %v2407 = vadd.f32 %v2054, %v2329
        %v2408 = vadd.f32 %v2055, %v2332
        %v2409 = vadd.f32 %v2056, %v2337
        %v2410 = vadd.f32 %v2057, %v2340
        %v2411 = vadd.f32 %v2058, %v2345
        %v2412 = vadd.f32 %v2059, %v2348
        %v2413 = vadd.f32 %v2060, %v2353
        %v2414 = vadd.f32 %v2061, %v2356
        %v2415 = vadd.f32 %v2062, %v2361
        %v2416 = vadd.f32 %v2063, %v2364
        %v2417 = vadd.f32 %v2064, %v2369
        %v2418 = vadd.f32 %v2065, %v2372
        %v2419 = vadd.f32 %v2066, %v2377
        %v2420 = vadd.f32 %v2067, %v2380
        %v2421 = vadd.f32 %v2068, %v2385
        %v2422 = vadd.f32 %v2069, %v2388
        %2423 = vst.msk [vmem:[#allocation4] sm:$0xff] %vm723, %v2391
        %2424 = vst.msk [vmem:[#allocation4 + $0x8] sm:$0xff] %vm723, %v2392
        %2425 = vst.msk [vmem:[#allocation4 + $0x10] sm:$0xff] %vm723, %v2393
        %2426 = vst.msk [vmem:[#allocation4 + $0x18] sm:$0xff] %vm723, %v2394
        %2427 = vst.msk [vmem:[#allocation4 + $0x20] sm:$0xff] %vm723, %v2395
        %2428 = vst.msk [vmem:[#allocation4 + $0x28] sm:$0xff] %vm723, %v2396
        %2429 = vst.msk [vmem:[#allocation4 + $0x30] sm:$0xff] %vm723, %v2397
        %2430 = vst.msk [vmem:[#allocation4 + $0x38] sm:$0xff] %vm723, %v2398
        %2431 = vst.msk [vmem:[#allocation4 + $0x40] sm:$0xff] %vm723, %v2399
        %2432 = vst.msk [vmem:[#allocation4 + $0x48] sm:$0xff] %vm723, %v2400
        %2433 = vst.msk [vmem:[#allocation4 + $0x50] sm:$0xff] %vm723, %v2401
        %2434 = vst.msk [vmem:[#allocation4 + $0x58] sm:$0xff] %vm723, %v2402
        %2435 = vst.msk [vmem:[#allocation4 + $0x60] sm:$0xff] %vm723, %v2403
        %2436 = vst.msk [vmem:[#allocation4 + $0x68] sm:$0xff] %vm723, %v2404
        %2437 = vst.msk [vmem:[#allocation4 + $0x70] sm:$0xff] %vm723, %v2405
        %2438 = vst.msk [vmem:[#allocation4 + $0x78] sm:$0xff] %vm723, %v2406
        %2439 = vst.msk [vmem:[#allocation4 + $0x80] sm:$0xff] %vm723, %v2407
        %2440 = vst.msk [vmem:[#allocation4 + $0x88] sm:$0xff] %vm723, %v2408
        %2441 = vst.msk [vmem:[#allocation4 + $0x90] sm:$0xff] %vm723, %v2409
        %2442 = vst.msk [vmem:[#allocation4 + $0x98] sm:$0xff] %vm723, %v2410
        %2443 = vst.msk [vmem:[#allocation4 + $0xa0] sm:$0xff] %vm723, %v2411
        %2444 = vst.msk [vmem:[#allocation4 + $0xa8] sm:$0xff] %vm723, %v2412
        %2445 = vst.msk [vmem:[#allocation4 + $0xb0] sm:$0xff] %vm723, %v2413
        %2446 = vst.msk [vmem:[#allocation4 + $0xb8] sm:$0xff] %vm723, %v2414
        %2447 = vst.msk [vmem:[#allocation4 + $0xc0] sm:$0xff] %vm723, %v2415
        %2448 = vst.msk [vmem:[#allocation4 + $0xc8] sm:$0xff] %vm723, %v2416
        %2449 = vst.msk [vmem:[#allocation4 + $0xd0] sm:$0xff] %vm723, %v2417
        %2450 = vst.msk [vmem:[#allocation4 + $0xd8] sm:$0xff] %vm723, %v2418
        %2451 = vst.msk [vmem:[#allocation4 + $0xe0] sm:$0xff] %vm723, %v2419
        %2452 = vst.msk [vmem:[#allocation4 + $0xe8] sm:$0xff] %vm723, %v2420
        %2453 = vst.msk [vmem:[#allocation4 + $0xf0] sm:$0xff] %vm723, %v2421
        %2454 = vst.msk [vmem:[#allocation4 + $0xf8] sm:$0xff] %vm723, %v2422
        %2455 = vst.msk [vmem:[#allocation2] sm:$0xff] %vm1813, %v1141
        %2456 = vst.msk [vmem:[#allocation2 + $0x8] sm:$0xff] %vm1813, %v1142
        %2457 = vst.msk [vmem:[#allocation2 + $0x10] sm:$0xff] %vm1813, %v1143
        %2458 = vst.msk [vmem:[#allocation2 + $0x18] sm:$0xff] %vm1813, %v1144
        %2459 = vst.msk [vmem:[#allocation2 + $0x20] sm:$0xff] %vm1813, %v1145
        %2460 = vst.msk [vmem:[#allocation2 + $0x28] sm:$0xff] %vm1813, %v1146
        %2461 = vst.msk [vmem:[#allocation2 + $0x30] sm:$0xff] %vm1813, %v1147
        %2462 = vst.msk [vmem:[#allocation2 + $0x38] sm:$0xff] %vm1813, %v1148
        %2463 = vst.msk [vmem:[#allocation2 + $0x40] sm:$0xff] %vm1813, %v1149
        %2464 = vst.msk [vmem:[#allocation2 + $0x48] sm:$0xff] %vm1813, %v1150
        %2465 = vst.msk [vmem:[#allocation2 + $0x50] sm:$0xff] %vm1813, %v1151
        %2466 = vst.msk [vmem:[#allocation2 + $0x58] sm:$0xff] %vm1813, %v1152
        %2467 = vst.msk [vmem:[#allocation2 + $0x60] sm:$0xff] %vm1813, %v1153
        %2468 = vst.msk [vmem:[#allocation2 + $0x68] sm:$0xff] %vm1813, %v1154
        %2469 = vst.msk [vmem:[#allocation2 + $0x70] sm:$0xff] %vm1813, %v1155
        %2470 = vst.msk [vmem:[#allocation2 + $0x78] sm:$0xff] %vm1813, %v1156
        %2471 = vst.msk [vmem:[#allocation2 + $0x80] sm:$0xff] %vm1813, %v1157
        %2472 = vst.msk [vmem:[#allocation2 + $0x88] sm:$0xff] %vm1813, %v1158
        %2473 = vst.msk [vmem:[#allocation2 + $0x90] sm:$0xff] %vm1813, %v1159
        %2474 = vst.msk [vmem:[#allocation2 + $0x98] sm:$0xff] %vm1813, %v1160
        %2475 = vst.msk [vmem:[#allocation2 + $0xa0] sm:$0xff] %vm1813, %v1161
        %2476 = vst.msk [vmem:[#allocation2 + $0xa8] sm:$0xff] %vm1813, %v1162
        %2477 = vst.msk [vmem:[#allocation2 + $0xb0] sm:$0xff] %vm1813, %v1163
        %2478 = vst.msk [vmem:[#allocation2 + $0xb8] sm:$0xff] %vm1813, %v1164
        %2479 = vst.msk [vmem:[#allocation2 + $0xc0] sm:$0xff] %vm1813, %v1165
        %2480 = vst.msk [vmem:[#allocation2 + $0xc8] sm:$0xff] %vm1813, %v1166
        %2481 = vst.msk [vmem:[#allocation2 + $0xd0] sm:$0xff] %vm1813, %v1167
        %2482 = vst.msk [vmem:[#allocation2 + $0xd8] sm:$0xff] %vm1813, %v1168
        %2483 = vst.msk [vmem:[#allocation2 + $0xe0] sm:$0xff] %vm1813, %v1169
        %2484 = vst.msk [vmem:[#allocation2 + $0xe8] sm:$0xff] %vm1813, %v1170
        %2485 = vst.msk [vmem:[#allocation2 + $0xf0] sm:$0xff] %vm1813, %v1171
        %2486 = vst.msk [vmem:[#allocation2 + $0xf8] sm:$0xff] %vm1813, %v1172
        // Predicated region
        $region49: #{attn_block_forward.3} parent=43 // pred_check
          %p2487 = pneg %p397
        $region50: #{attn_block_forward.3} parent=43 // pred_check_branch
          %2489 = sbr.rel (%p2487) target = $region52
        $region51: #{attn_block_forward.3} parent=43 // pred_region
          %v2490 = vld [vmem:[#allocation4] sm:$0xff]
          %v2491 = vld [vmem:[#allocation4 + $0x8] sm:$0xff]
          %v2492 = vld [vmem:[#allocation4 + $0x10] sm:$0xff]
          %v2493 = vld [vmem:[#allocation4 + $0x18] sm:$0xff]
          %v2494 = vld [vmem:[#allocation4 + $0x20] sm:$0xff]
          %v2495 = vld [vmem:[#allocation4 + $0x28] sm:$0xff]
          %v2496 = vld [vmem:[#allocation4 + $0x30] sm:$0xff]
          %v2497 = vld [vmem:[#allocation4 + $0x38] sm:$0xff]
          %v2498 = vld [vmem:[#allocation4 + $0x40] sm:$0xff]
          %v2499 = vld [vmem:[#allocation4 + $0x48] sm:$0xff]
          %v2500 = vld [vmem:[#allocation4 + $0x50] sm:$0xff]
          %v2501 = vld [vmem:[#allocation4 + $0x58] sm:$0xff]
          %v2502 = vld [vmem:[#allocation4 + $0x60] sm:$0xff]
          %v2503 = vld [vmem:[#allocation4 + $0x68] sm:$0xff]
          %v2504 = vld [vmem:[#allocation4 + $0x70] sm:$0xff]
          %v2505 = vld [vmem:[#allocation4 + $0x78] sm:$0xff]
          %v2506 = vld [vmem:[#allocation4 + $0x80] sm:$0xff]
          %v2507 = vld [vmem:[#allocation4 + $0x88] sm:$0xff]
          %v2508 = vld [vmem:[#allocation4 + $0x90] sm:$0xff]
          %v2509 = vld [vmem:[#allocation4 + $0x98] sm:$0xff]
          %v2510 = vld [vmem:[#allocation4 + $0xa0] sm:$0xff]
          %v2511 = vld [vmem:[#allocation4 + $0xa8] sm:$0xff]
          %v2512 = vld [vmem:[#allocation4 + $0xb0] sm:$0xff]
          %v2513 = vld [vmem:[#allocation4 + $0xb8] sm:$0xff]
          %v2514 = vld [vmem:[#allocation4 + $0xc0] sm:$0xff]
          %v2515 = vld [vmem:[#allocation4 + $0xc8] sm:$0xff]
          %v2516 = vld [vmem:[#allocation4 + $0xd0] sm:$0xff]
          %v2517 = vld [vmem:[#allocation4 + $0xd8] sm:$0xff]
          %v2518 = vld [vmem:[#allocation4 + $0xe0] sm:$0xff]
          %v2519 = vld [vmem:[#allocation4 + $0xe8] sm:$0xff]
          %v2520 = vld [vmem:[#allocation4 + $0xf0] sm:$0xff]
          %v2521 = vld [vmem:[#allocation4 + $0xf8] sm:$0xff]
          %v2522 = vld [vmem:[#allocation3] sm:$0xff]
          %v2523 = vld [vmem:[#allocation3 + $0x8] sm:$0xff]
          %v2524 = vld [vmem:[#allocation3 + $0x10] sm:$0xff]
          %v2525 = vld [vmem:[#allocation3 + $0x18] sm:$0xff]
          %v2526 = vld [vmem:[#allocation3 + $0x20] sm:$0xff]
          %v2527 = vld [vmem:[#allocation3 + $0x28] sm:$0xff]
          %v2528 = vld [vmem:[#allocation3 + $0x30] sm:$0xff]
          %v2529 = vld [vmem:[#allocation3 + $0x38] sm:$0xff]
          %v2530 = vld [vmem:[#allocation3 + $0x40] sm:$0xff]
          %v2531 = vld [vmem:[#allocation3 + $0x48] sm:$0xff]
          %v2532 = vld [vmem:[#allocation3 + $0x50] sm:$0xff]
          %v2533 = vld [vmem:[#allocation3 + $0x58] sm:$0xff]
          %v2534 = vld [vmem:[#allocation3 + $0x60] sm:$0xff]
          %v2535 = vld [vmem:[#allocation3 + $0x68] sm:$0xff]
          %v2536 = vld [vmem:[#allocation3 + $0x70] sm:$0xff]
          %v2537 = vld [vmem:[#allocation3 + $0x78] sm:$0xff]
          %v2538 = vld [vmem:[#allocation3 + $0x80] sm:$0xff]
          %v2539 = vld [vmem:[#allocation3 + $0x88] sm:$0xff]
          %v2540 = vld [vmem:[#allocation3 + $0x90] sm:$0xff]
          %v2541 = vld [vmem:[#allocation3 + $0x98] sm:$0xff]
          %v2542 = vld [vmem:[#allocation3 + $0xa0] sm:$0xff]
          %v2543 = vld [vmem:[#allocation3 + $0xa8] sm:$0xff]
          %v2544 = vld [vmem:[#allocation3 + $0xb0] sm:$0xff]
          %v2545 = vld [vmem:[#allocation3 + $0xb8] sm:$0xff]
          %v2546 = vld [vmem:[#allocation3 + $0xc0] sm:$0xff]
          %v2547 = vld [vmem:[#allocation3 + $0xc8] sm:$0xff]
          %v2548 = vld [vmem:[#allocation3 + $0xd0] sm:$0xff]
          %v2549 = vld [vmem:[#allocation3 + $0xd8] sm:$0xff]
          %v2550 = vld [vmem:[#allocation3 + $0xe0] sm:$0xff]
          %v2551 = vld [vmem:[#allocation3 + $0xe8] sm:$0xff]
          %v2552 = vld [vmem:[#allocation3 + $0xf0] sm:$0xff]
          %v2553 = vld [vmem:[#allocation3 + $0xf8] sm:$0xff]
          %v2554 = vrcp.pop %v2522
          %v2555 = vrcp.pop %v2523
          %v2556 = vrcp.pop %v2524
          %v2557 = vrcp.pop %v2525
          %v2558 = vrcp.pop %v2526
          %v2559 = vrcp.pop %v2527
          %v2560 = vrcp.pop %v2528
          %v2561 = vrcp.pop %v2529
          %v2562 = vrcp.pop %v2530
          %v2563 = vrcp.pop %v2531
          %v2564 = vrcp.pop %v2532
          %v2565 = vrcp.pop %v2533
          %v2566 = vrcp.pop %v2534
          %v2567 = vrcp.pop %v2535
          %v2568 = vrcp.pop %v2536
          %v2569 = vrcp.pop %v2537
          %v2570 = vrcp.pop %v2538
          %v2571 = vrcp.pop %v2539
          %v2572 = vrcp.pop %v2540
          %v2573 = vrcp.pop %v2541
          %v2574 = vrcp.pop %v2542
          %v2575 = vrcp.pop %v2543
          %v2576 = vrcp.pop %v2544
          %v2577 = vrcp.pop %v2545
          %v2578 = vrcp.pop %v2546
          %v2579 = vrcp.pop %v2547
          %v2580 = vrcp.pop %v2548
          %v2581 = vrcp.pop %v2549
          %v2582 = vrcp.pop %v2550
          %v2583 = vrcp.pop %v2551
          %v2584 = vrcp.pop %v2552
          %v2585 = vrcp.pop %v2553
          %2587 = vset.pattern.permute.xlu0 0
          %2588 = vperm.xlu0 %2587, %v2554
          %v2589 = vpop.permute.xlu0 %2588
          %2592 = vset.pattern.permute.xlu0 0
          %2593 = vperm.xlu0 %2592, %v2555
          %v2594 = vpop.permute.xlu0 %2593
          %2597 = vset.pattern.permute.xlu0 0
          %2598 = vperm.xlu0 %2597, %v2556
          %v2599 = vpop.permute.xlu0 %2598
          %2602 = vset.pattern.permute.xlu0 0
          %2603 = vperm.xlu0 %2602, %v2557
          %v2604 = vpop.permute.xlu0 %2603
          %2607 = vset.pattern.permute.xlu0 0
          %2608 = vperm.xlu0 %2607, %v2558
          %v2609 = vpop.permute.xlu0 %2608
          %2612 = vset.pattern.permute.xlu0 0
          %2613 = vperm.xlu0 %2612, %v2559
          %v2614 = vpop.permute.xlu0 %2613
          %2617 = vset.pattern.permute.xlu0 0
          %2618 = vperm.xlu0 %2617, %v2560
          %v2619 = vpop.permute.xlu0 %2618
          %2622 = vset.pattern.permute.xlu0 0
          %2623 = vperm.xlu0 %2622, %v2561
          %v2624 = vpop.permute.xlu0 %2623
          %2627 = vset.pattern.permute.xlu0 0
          %2628 = vperm.xlu0 %2627, %v2562
          %v2629 = vpop.permute.xlu0 %2628
          %2632 = vset.pattern.permute.xlu0 0
          %2633 = vperm.xlu0 %2632, %v2563
          %v2634 = vpop.permute.xlu0 %2633
          %2637 = vset.pattern.permute.xlu0 0
          %2638 = vperm.xlu0 %2637, %v2564
          %v2639 = vpop.permute.xlu0 %2638
          %2642 = vset.pattern.permute.xlu0 0
          %2643 = vperm.xlu0 %2642, %v2565
          %v2644 = vpop.permute.xlu0 %2643
          %2647 = vset.pattern.permute.xlu0 0
          %2648 = vperm.xlu0 %2647, %v2566
          %v2649 = vpop.permute.xlu0 %2648
          %2652 = vset.pattern.permute.xlu0 0
          %2653 = vperm.xlu0 %2652, %v2567
          %v2654 = vpop.permute.xlu0 %2653
          %2657 = vset.pattern.permute.xlu0 0
          %2658 = vperm.xlu0 %2657, %v2568
          %v2659 = vpop.permute.xlu0 %2658
          %2662 = vset.pattern.permute.xlu0 0
          %2663 = vperm.xlu0 %2662, %v2569
          %v2664 = vpop.permute.xlu0 %2663
          %2667 = vset.pattern.permute.xlu0 0
          %2668 = vperm.xlu0 %2667, %v2570
          %v2669 = vpop.permute.xlu0 %2668
          %2672 = vset.pattern.permute.xlu0 0
          %2673 = vperm.xlu0 %2672, %v2571
          %v2674 = vpop.permute.xlu0 %2673
          %2677 = vset.pattern.permute.xlu0 0
          %2678 = vperm.xlu0 %2677, %v2572
          %v2679 = vpop.permute.xlu0 %2678
          %2682 = vset.pattern.permute.xlu0 0
          %2683 = vperm.xlu0 %2682, %v2573
          %v2684 = vpop.permute.xlu0 %2683
          %2687 = vset.pattern.permute.xlu0 0
          %2688 = vperm.xlu0 %2687, %v2574
          %v2689 = vpop.permute.xlu0 %2688
          %2692 = vset.pattern.permute.xlu0 0
          %2693 = vperm.xlu0 %2692, %v2575
          %v2694 = vpop.permute.xlu0 %2693
          %2697 = vset.pattern.permute.xlu0 0
          %2698 = vperm.xlu0 %2697, %v2576
          %v2699 = vpop.permute.xlu0 %2698
          %2702 = vset.pattern.permute.xlu0 0
          %2703 = vperm.xlu0 %2702, %v2577
          %v2704 = vpop.permute.xlu0 %2703
          %2707 = vset.pattern.permute.xlu0 0
          %2708 = vperm.xlu0 %2707, %v2578
          %v2709 = vpop.permute.xlu0 %2708
          %2712 = vset.pattern.permute.xlu0 0
          %2713 = vperm.xlu0 %2712, %v2579
          %v2714 = vpop.permute.xlu0 %2713
          %2717 = vset.pattern.permute.xlu0 0
          %2718 = vperm.xlu0 %2717, %v2580
          %v2719 = vpop.permute.xlu0 %2718
          %2722 = vset.pattern.permute.xlu0 0
          %2723 = vperm.xlu0 %2722, %v2581
          %v2724 = vpop.permute.xlu0 %2723
          %2727 = vset.pattern.permute.xlu0 0
          %2728 = vperm.xlu0 %2727, %v2582
          %v2729 = vpop.permute.xlu0 %2728
          %2732 = vset.pattern.permute.xlu0 0
          %2733 = vperm.xlu0 %2732, %v2583
          %v2734 = vpop.permute.xlu0 %2733
          %2737 = vset.pattern.permute.xlu0 0
          %2738 = vperm.xlu0 %2737, %v2584
          %v2739 = vpop.permute.xlu0 %2738
          %2742 = vset.pattern.permute.xlu0 0
          %2743 = vperm.xlu0 %2742, %v2585
          %v2744 = vpop.permute.xlu0 %2743
          %v2746 = vmul.f32 %v2490, %v2589
          %v2747 = vmul.f32 %v2491, %v2594
          %v2748 = vmul.f32 %v2492, %v2599
          %v2749 = vmul.f32 %v2493, %v2604
          %v2750 = vmul.f32 %v2494, %v2609
          %v2751 = vmul.f32 %v2495, %v2614
          %v2752 = vmul.f32 %v2496, %v2619
          %v2753 = vmul.f32 %v2497, %v2624
          %v2754 = vmul.f32 %v2498, %v2629
          %v2755 = vmul.f32 %v2499, %v2634
          %v2756 = vmul.f32 %v2500, %v2639
          %v2757 = vmul.f32 %v2501, %v2644
          %v2758 = vmul.f32 %v2502, %v2649
          %v2759 = vmul.f32 %v2503, %v2654
          %v2760 = vmul.f32 %v2504, %v2659
          %v2761 = vmul.f32 %v2505, %v2664
          %v2762 = vmul.f32 %v2506, %v2669
          %v2763 = vmul.f32 %v2507, %v2674
          %v2764 = vmul.f32 %v2508, %v2679
          %v2765 = vmul.f32 %v2509, %v2684
          %v2766 = vmul.f32 %v2510, %v2689
          %v2767 = vmul.f32 %v2511, %v2694
          %v2768 = vmul.f32 %v2512, %v2699
          %v2769 = vmul.f32 %v2513, %v2704
          %v2770 = vmul.f32 %v2514, %v2709
          %v2771 = vmul.f32 %v2515, %v2714
          %v2772 = vmul.f32 %v2516, %v2719
          %v2773 = vmul.f32 %v2517, %v2724
          %v2774 = vmul.f32 %v2518, %v2729
          %v2775 = vmul.f32 %v2519, %v2734
          %v2776 = vmul.f32 %v2520, %v2739
          %v2777 = vmul.f32 %v2521, %v2744
          %v2778 = vpack.c.bf16 %v2747, %v2746
          %v2779 = vpack.c.bf16 %v2749, %v2748
          %v2780 = vpack.c.bf16 %v2751, %v2750
          %v2781 = vpack.c.bf16 %v2753, %v2752
          %v2782 = vpack.c.bf16 %v2755, %v2754
          %v2783 = vpack.c.bf16 %v2757, %v2756
          %v2784 = vpack.c.bf16 %v2759, %v2758
          %v2785 = vpack.c.bf16 %v2761, %v2760
          %v2786 = vpack.c.bf16 %v2763, %v2762
          %v2787 = vpack.c.bf16 %v2765, %v2764
          %v2788 = vpack.c.bf16 %v2767, %v2766
          %v2789 = vpack.c.bf16 %v2769, %v2768
          %v2790 = vpack.c.bf16 %v2771, %v2770
          %v2791 = vpack.c.bf16 %v2773, %v2772
          %v2792 = vpack.c.bf16 %v2775, %v2774
          %v2793 = vpack.c.bf16 %v2777, %v2776
          %v2794 = vld [vmem:[%s4] sm:$0xf]
          %v2795 = vld [vmem:[%s4 + $0x4] sm:$0xf]
          %v2796 = vld [vmem:[%s4 + $0x8] sm:$0xf]
          %v2797 = vld [vmem:[%s4 + $0xc] sm:$0xf]
          %v2798 = vld [vmem:[%s5] sm:$0x1]
          %v2800 = vlaneseq
          %v2801 = vshrl.u32 %v2800, 7
          %v2802 = vsub.s32 0, %v2801
          %v2803 = vrot.slane %v2798, %v2802
          %v2809 = vunpack.c.l.b16 %v2794
          %v2810 = vunpack.c.l.b16 %v2795
          %v2811 = vunpack.c.l.b16 %v2796
          %v2812 = vunpack.c.l.b16 %v2797
          %v2813 = vpack.c.b16 %v2810, %v2809
          %v2814 = vpack.c.b16 %v2812, %v2811
          %v2818 = vsel %vm723, %v2778, 0
          %v2821 = vsel %vm723, %v2779, 0
          %v2824 = vsel %vm723, %v2780, 0
          %v2827 = vsel %vm723, %v2781, 0
          %v2830 = vsel %vm723, %v2782, 0
          %v2833 = vsel %vm723, %v2783, 0
          %v2836 = vsel %vm723, %v2784, 0
          %v2839 = vsel %vm723, %v2785, 0
          %v2842 = vsel %vm723, %v2786, 0
          %v2845 = vsel %vm723, %v2787, 0
          %v2848 = vsel %vm723, %v2788, 0
          %v2851 = vsel %vm723, %v2789, 0
          %v2854 = vsel %vm723, %v2790, 0
          %v2857 = vsel %vm723, %v2791, 0
          %v2860 = vsel %vm723, %v2792, 0
          %v2863 = vsel %vm723, %v2793, 0
          %2865 = vmatprep.subr.bf16.mxu0 0
          %2866 = vmatpush1.bf16.msra.mxu0 %v2813
          %2867 = vmatprep.subr.bf16.mxu0 0
          %2868 = vmatpush1.bf16.msra.mxu0 %v2814
          %2869 = vmatprep.subr.bf16.mxu0 0
          %2870 = vmatpush1.bf16.msra.mxu0 0
          %2871 = vmatprep.subr.bf16.mxu0 0
          %2872 = vmatpush1.bf16.msra.mxu0 0
          %2873 = vmatprep.subr.bf16.mxu0 0
          %2874 = vmatpush1.bf16.msra.mxu0 0
          %2875 = vmatprep.subr.bf16.mxu0 0
          %2876 = vmatpush1.bf16.msra.mxu0 0
          %2877 = vmatprep.subr.bf16.mxu0 0
          %2878 = vmatpush1.bf16.msra.mxu0 0
          %2879 = vmatprep.subr.bf16.mxu0 0
          %2880 = vmatpush1.bf16.msra.mxu0 0
          %2881 = vmatprep.subr.bf16.mxu0 0
          %2882 = vmatpush1.bf16.msra.mxu0 0
          %2883 = vmatprep.subr.bf16.mxu0 0
          %2884 = vmatpush1.bf16.msra.mxu0 0
          %2885 = vmatprep.subr.bf16.mxu0 0
          %2886 = vmatpush1.bf16.msra.mxu0 0
          %2887 = vmatprep.subr.bf16.mxu0 0
          %2888 = vmatpush1.bf16.msra.mxu0 0
          %2889 = vmatprep.subr.bf16.mxu0 0
          %2890 = vmatpush1.bf16.msra.mxu0 0
          %2891 = vmatprep.subr.bf16.mxu0 0
          %2892 = vmatpush1.bf16.msra.mxu0 0
          %2893 = vmatprep.subr.bf16.mxu0 0
          %2894 = vmatpush1.bf16.msra.mxu0 0
          %2895 = vmatprep.subr.bf16.mxu0 0
          %2896 = vmatpush1.bf16.msra.mxu0 0
          %2897 = vmatprep.mubr.bf16.mxu0 0
          %2898 = vmatmul.mubr.bf16.gmra.mrb[0].mxu0 %v2818
          %v2899 = vpop.f32.mrb[0].mxu0
          %v2900 = vadd.f32 %v2803, %v2899
          %v2901 = vpop.f32.mrb[0].mxu0
          %v2902 = vpop.f32.mrb[0].mxu0
          %v2903 = vadd.f32 %v2803, %v2902
          %v2904 = vpop.f32.mrb[0].mxu0
          %2905 = vmatprep.mubr.bf16.mxu0 0
          %2906 = vmatmul.mubr.bf16.gmra.mrb[0].mxu0 %v2821
          %v2907 = vpop.f32.mrb[0].mxu0
          %v2908 = vadd.f32 %v2803, %v2907
          %v2909 = vpop.f32.mrb[0].mxu0
          %v2910 = vpop.f32.mrb[0].mxu0
          %v2911 = vadd.f32 %v2803, %v2910
          %v2912 = vpop.f32.mrb[0].mxu0
          %2913 = vmatprep.mubr.bf16.mxu0 0
          %2914 = vmatmul.mubr.bf16.gmra.mrb[0].mxu0 %v2824
          %v2915 = vpop.f32.mrb[0].mxu0
          %v2916 = vadd.f32 %v2803, %v2915
          %v2917 = vpop.f32.mrb[0].mxu0
          %v2918 = vpop.f32.mrb[0].mxu0
          %v2919 = vadd.f32 %v2803, %v2918
          %v2920 = vpop.f32.mrb[0].mxu0
          %2921 = vmatprep.mubr.bf16.mxu0 0
          %2922 = vmatmul.mubr.bf16.gmra.mrb[0].mxu0 %v2827
          %v2923 = vpop.f32.mrb[0].mxu0
          %v2924 = vadd.f32 %v2803, %v2923
          %v2925 = vpop.f32.mrb[0].mxu0
          %v2926 = vpop.f32.mrb[0].mxu0
          %v2927 = vadd.f32 %v2803, %v2926
          %v2928 = vpop.f32.mrb[0].mxu0
          %2929 = vmatprep.mubr.bf16.mxu0 0
          %2930 = vmatmul.mubr.bf16.gmra.mrb[0].mxu0 %v2830
          %v2931 = vpop.f32.mrb[0].mxu0
          %v2932 = vadd.f32 %v2803, %v2931
          %v2933 = vpop.f32.mrb[0].mxu0
          %v2934 = vpop.f32.mrb[0].mxu0
          %v2935 = vadd.f32 %v2803, %v2934
          %v2936 = vpop.f32.mrb[0].mxu0
          %2937 = vmatprep.mubr.bf16.mxu0 0
          %2938 = vmatmul.mubr.bf16.gmra.mrb[0].mxu0 %v2833
          %v2939 = vpop.f32.mrb[0].mxu0
          %v2940 = vadd.f32 %v2803, %v2939
          %v2941 = vpop.f32.mrb[0].mxu0
          %v2942 = vpop.f32.mrb[0].mxu0
          %v2943 = vadd.f32 %v2803, %v2942
          %v2944 = vpop.f32.mrb[0].mxu0
          %2945 = vmatprep.mubr.bf16.mxu0 0
          %2946 = vmatmul.mubr.bf16.gmra.mrb[0].mxu0 %v2836
          %v2947 = vpop.f32.mrb[0].mxu0
          %v2948 = vadd.f32 %v2803, %v2947
          %v2949 = vpop.f32.mrb[0].mxu0
          %v2950 = vpop.f32.mrb[0].mxu0
          %v2951 = vadd.f32 %v2803, %v2950
          %v2952 = vpop.f32.mrb[0].mxu0
          %2953 = vmatprep.mubr.bf16.mxu0 0
          %2954 = vmatmul.mubr.bf16.gmra.mrb[0].mxu0 %v2839
          %v2955 = vpop.f32.mrb[0].mxu0
          %v2956 = vadd.f32 %v2803, %v2955
          %v2957 = vpop.f32.mrb[0].mxu0
          %v2958 = vpop.f32.mrb[0].mxu0
          %v2959 = vadd.f32 %v2803, %v2958
          %v2960 = vpop.f32.mrb[0].mxu0
          %2961 = vmatprep.mubr.bf16.mxu0 0
          %2962 = vmatmul.mubr.bf16.gmra.mrb[0].mxu0 %v2842
          %v2963 = vpop.f32.mrb[0].mxu0
          %v2964 = vadd.f32 %v2803, %v2963
          %v2965 = vpop.f32.mrb[0].mxu0
          %v2966 = vpop.f32.mrb[0].mxu0
          %v2967 = vadd.f32 %v2803, %v2966
          %v2968 = vpop.f32.mrb[0].mxu0
          %2969 = vmatprep.mubr.bf16.mxu0 0
          %2970 = vmatmul.mubr.bf16.gmra.mrb[0].mxu0 %v2845
          %v2971 = vpop.f32.mrb[0].mxu0
          %v2972 = vadd.f32 %v2803, %v2971
          %v2973 = vpop.f32.mrb[0].mxu0
          %v2974 = vpop.f32.mrb[0].mxu0
          %v2975 = vadd.f32 %v2803, %v2974
          %v2976 = vpop.f32.mrb[0].mxu0
          %2977 = vmatprep.mubr.bf16.mxu0 0
          %2978 = vmatmul.mubr.bf16.gmra.mrb[0].mxu0 %v2848
          %v2979 = vpop.f32.mrb[0].mxu0
          %v2980 = vadd.f32 %v2803, %v2979
          %v2981 = vpop.f32.mrb[0].mxu0
          %v2982 = vpop.f32.mrb[0].mxu0
          %v2983 = vadd.f32 %v2803, %v2982
          %v2984 = vpop.f32.mrb[0].mxu0
          %2985 = vmatprep.mubr.bf16.mxu0 0
          %2986 = vmatmul.mubr.bf16.gmra.mrb[0].mxu0 %v2851
          %v2987 = vpop.f32.mrb[0].mxu0
          %v2988 = vadd.f32 %v2803, %v2987
          %v2989 = vpop.f32.mrb[0].mxu0
          %v2990 = vpop.f32.mrb[0].mxu0
          %v2991 = vadd.f32 %v2803, %v2990
          %v2992 = vpop.f32.mrb[0].mxu0
          %2993 = vmatprep.mubr.bf16.mxu0 0
          %2994 = vmatmul.mubr.bf16.gmra.mrb[0].mxu0 %v2854
          %v2995 = vpop.f32.mrb[0].mxu0
          %v2996 = vadd.f32 %v2803, %v2995
          %v2997 = vpop.f32.mrb[0].mxu0
          %v2998 = vpop.f32.mrb[0].mxu0
          %v2999 = vadd.f32 %v2803, %v2998
          %v3000 = vpop.f32.mrb[0].mxu0
          %3001 = vmatprep.mubr.bf16.mxu0 0
          %3002 = vmatmul.mubr.bf16.gmra.mrb[0].mxu0 %v2857
          %v3003 = vpop.f32.mrb[0].mxu0
          %v3004 = vadd.f32 %v2803, %v3003
          %v3005 = vpop.f32.mrb[0].mxu0
          %v3006 = vpop.f32.mrb[0].mxu0
          %v3007 = vadd.f32 %v2803, %v3006
          %v3008 = vpop.f32.mrb[0].mxu0
          %3009 = vmatprep.mubr.bf16.mxu0 0
          %3010 = vmatmul.mubr.bf16.gmra.mrb[0].mxu0 %v2860
          %v3011 = vpop.f32.mrb[0].mxu0
          %v3012 = vadd.f32 %v2803, %v3011
          %v3013 = vpop.f32.mrb[0].mxu0
          %v3014 = vpop.f32.mrb[0].mxu0
          %v3015 = vadd.f32 %v2803, %v3014
          %v3016 = vpop.f32.mrb[0].mxu0
          %3017 = vmatprep.mubr.bf16.mxu0 0
          %3018 = vmatmul.mubr.bf16.gmra.mrb[0].mxu0 %v2863
          %v3019 = vpop.f32.mrb[0].mxu0
          %v3020 = vadd.f32 %v2803, %v3019
          %v3021 = vpop.f32.mrb[0].mxu0
          %v3022 = vpop.f32.mrb[0].mxu0
          %v3023 = vadd.f32 %v2803, %v3022
          %v3024 = vpop.f32.mrb[0].mxu0
          %3025 = vdwg.mxu0
          %v3026 = vld [vmem:[%s393] sm:$0xff]
          %v3027 = vld [vmem:[%s393 + $0x8] sm:$0xff]
          %v3028 = vld [vmem:[%s393 + $0x10] sm:$0xff]
          %v3029 = vld [vmem:[%s393 + $0x18] sm:$0xff]
          %v3030 = vld [vmem:[%s393 + $0x20] sm:$0xff]
          %v3031 = vld [vmem:[%s393 + $0x28] sm:$0xff]
          %v3032 = vld [vmem:[%s393 + $0x30] sm:$0xff]
          %v3033 = vld [vmem:[%s393 + $0x38] sm:$0xff]
          %v3034 = vld [vmem:[%s393 + $0x40] sm:$0xff]
          %v3035 = vld [vmem:[%s393 + $0x48] sm:$0xff]
          %v3036 = vld [vmem:[%s393 + $0x50] sm:$0xff]
          %v3037 = vld [vmem:[%s393 + $0x58] sm:$0xff]
          %v3038 = vld [vmem:[%s393 + $0x60] sm:$0xff]
          %v3039 = vld [vmem:[%s393 + $0x68] sm:$0xff]
          %v3040 = vld [vmem:[%s393 + $0x70] sm:$0xff]
          %v3041 = vld [vmem:[%s393 + $0x78] sm:$0xff]
          %v3042 = vld [vmem:[%s393 + $0x80] sm:$0xff]
          %v3043 = vld [vmem:[%s393 + $0x88] sm:$0xff]
          %v3044 = vld [vmem:[%s393 + $0x90] sm:$0xff]
          %v3045 = vld [vmem:[%s393 + $0x98] sm:$0xff]
          %v3046 = vld [vmem:[%s393 + $0xa0] sm:$0xff]
          %v3047 = vld [vmem:[%s393 + $0xa8] sm:$0xff]
          %v3048 = vld [vmem:[%s393 + $0xb0] sm:$0xff]
          %v3049 = vld [vmem:[%s393 + $0xb8] sm:$0xff]
          %v3050 = vld [vmem:[%s393 + $0xc0] sm:$0xff]
          %v3051 = vld [vmem:[%s393 + $0xc8] sm:$0xff]
          %v3052 = vld [vmem:[%s393 + $0xd0] sm:$0xff]
          %v3053 = vld [vmem:[%s393 + $0xd8] sm:$0xff]
          %v3054 = vld [vmem:[%s393 + $0xe0] sm:$0xff]
          %v3055 = vld [vmem:[%s393 + $0xe8] sm:$0xff]
          %v3056 = vld [vmem:[%s393 + $0xf0] sm:$0xff]
          %v3057 = vld [vmem:[%s393 + $0xf8] sm:$0xff]
          %v3058 = vadd.f32 %v2900, %v3026
          %v3059 = vadd.f32 %v2903, %v3027
          %v3060 = vadd.f32 %v2908, %v3028
          %v3061 = vadd.f32 %v2911, %v3029
          %v3062 = vadd.f32 %v2916, %v3030
          %v3063 = vadd.f32 %v2919, %v3031
          %v3064 = vadd.f32 %v2924, %v3032
          %v3065 = vadd.f32 %v2927, %v3033
          %v3066 = vadd.f32 %v2932, %v3034
          %v3067 = vadd.f32 %v2935, %v3035
          %v3068 = vadd.f32 %v2940, %v3036
          %v3069 = vadd.f32 %v2943, %v3037
          %v3070 = vadd.f32 %v2948, %v3038
          %v3071 = vadd.f32 %v2951, %v3039
          %v3072 = vadd.f32 %v2956, %v3040
          %v3073 = vadd.f32 %v2959, %v3041
          %v3074 = vadd.f32 %v2964, %v3042
          %v3075 = vadd.f32 %v2967, %v3043
          %v3076 = vadd.f32 %v2972, %v3044
          %v3077 = vadd.f32 %v2975, %v3045
          %v3078 = vadd.f32 %v2980, %v3046
          %v3079 = vadd.f32 %v2983, %v3047
          %v3080 = vadd.f32 %v2988, %v3048
          %v3081 = vadd.f32 %v2991, %v3049
          %v3082 = vadd.f32 %v2996, %v3050
          %v3083 = vadd.f32 %v2999, %v3051
          %v3084 = vadd.f32 %v3004, %v3052
          %v3085 = vadd.f32 %v3007, %v3053
          %v3086 = vadd.f32 %v3012, %v3054
          %v3087 = vadd.f32 %v3015, %v3055
          %v3088 = vadd.f32 %v3020, %v3056
          %v3089 = vadd.f32 %v3023, %v3057
          %3090 = vst.msk [vmem:[%s354] sm:$0xff] %vm723, %v3058
          %3091 = vst.msk [vmem:[%s354 + $0x8] sm:$0xff] %vm723, %v3059
          %3092 = vst.msk [vmem:[%s354 + $0x10] sm:$0xff] %vm723, %v3060
          %3093 = vst.msk [vmem:[%s354 + $0x18] sm:$0xff] %vm723, %v3061
          %3094 = vst.msk [vmem:[%s354 + $0x20] sm:$0xff] %vm723, %v3062
          %3095 = vst.msk [vmem:[%s354 + $0x28] sm:$0xff] %vm723, %v3063
          %3096 = vst.msk [vmem:[%s354 + $0x30] sm:$0xff] %vm723, %v3064
          %3097 = vst.msk [vmem:[%s354 + $0x38] sm:$0xff] %vm723, %v3065
          %3098 = vst.msk [vmem:[%s354 + $0x40] sm:$0xff] %vm723, %v3066
          %3099 = vst.msk [vmem:[%s354 + $0x48] sm:$0xff] %vm723, %v3067
          %3100 = vst.msk [vmem:[%s354 + $0x50] sm:$0xff] %vm723, %v3068
          %3101 = vst.msk [vmem:[%s354 + $0x58] sm:$0xff] %vm723, %v3069
          %3102 = vst.msk [vmem:[%s354 + $0x60] sm:$0xff] %vm723, %v3070
          %3103 = vst.msk [vmem:[%s354 + $0x68] sm:$0xff] %vm723, %v3071
          %3104 = vst.msk [vmem:[%s354 + $0x70] sm:$0xff] %vm723, %v3072
          %3105 = vst.msk [vmem:[%s354 + $0x78] sm:$0xff] %vm723, %v3073
          %3106 = vst.msk [vmem:[%s354 + $0x80] sm:$0xff] %vm723, %v3074
          %3107 = vst.msk [vmem:[%s354 + $0x88] sm:$0xff] %vm723, %v3075
          %3108 = vst.msk [vmem:[%s354 + $0x90] sm:$0xff] %vm723, %v3076
          %3109 = vst.msk [vmem:[%s354 + $0x98] sm:$0xff] %vm723, %v3077
          %3110 = vst.msk [vmem:[%s354 + $0xa0] sm:$0xff] %vm723, %v3078
          %3111 = vst.msk [vmem:[%s354 + $0xa8] sm:$0xff] %vm723, %v3079
          %3112 = vst.msk [vmem:[%s354 + $0xb0] sm:$0xff] %vm723, %v3080
          %3113 = vst.msk [vmem:[%s354 + $0xb8] sm:$0xff] %vm723, %v3081
          %3114 = vst.msk [vmem:[%s354 + $0xc0] sm:$0xff] %vm723, %v3082
          %3115 = vst.msk [vmem:[%s354 + $0xc8] sm:$0xff] %vm723, %v3083
          %3116 = vst.msk [vmem:[%s354 + $0xd0] sm:$0xff] %vm723, %v3084
          %3117 = vst.msk [vmem:[%s354 + $0xd8] sm:$0xff] %vm723, %v3085
          %3118 = vst.msk [vmem:[%s354 + $0xe0] sm:$0xff] %vm723, %v3086
          %3119 = vst.msk [vmem:[%s354 + $0xe8] sm:$0xff] %vm723, %v3087
          %3120 = vst.msk [vmem:[%s354 + $0xf0] sm:$0xff] %vm723, %v3088
          %3121 = vst.msk [vmem:[%s354 + $0xf8] sm:$0xff] %vm723, %v3089
        $region52: #{attn_block_forward.3} parent=43 // pred_fallthru
          _
        %s3122 = sand.u32 %s203, 1
        %s3123 = scalar_lea.sflag [#allocation6], %s3122
        %s3124 = sand.u32 %s203, 1
        %s3125 = smul.addr %s3124, 256
        %s3126 = scalar_lea.vmem [#allocation5], %s3125
        // Predicated region
        $region53: #{attn_block_forward.3} parent=43 // pred_check
          %p3127 = pneg %p213
        $region54: #{attn_block_forward.3} parent=43 // pred_check_branch
          %3129 = sbr.rel (%p3127) target = $region56
        $region55: #{attn_block_forward.3} parent=43 // pred_region
          %s3130 = smul.u32 32, %s26
          %s3132 = ssub.s32 4096, 4096
          %3133 = vsyncadd %s3123, %s3132
          %s3134 = smul.addr %s25, 32
          %s3135 = sadd.s32 %s3130, %s3134
          %s3136 = smul.addr %s3135, 128
          %s3137 = scalar_lea.hbm %s6, %s3136
          %s3138 = sshll.u32 %s3126, 4
          %s3139 = int_to_ptr.vmem [resolvable:$true] %s3138
          %3144 = dma.vmem_to_hbm [thread:$0]  %s3139, 4096, %s3137, %s3123, 128, 128, 8
        $region56: #{attn_block_forward.3} parent=43 // pred_fallthru
          _
      $region44: #{attn_block_forward.3} parent=5 // pred_fallthru
        _
      %p3145 = scmp.le.s32.totalorder 2, %s15
      // Predicated region
      $region57: #{attn_block_forward.3} parent=5 // pred_check
        %p3146 = pneg %p3145
      $region58: #{attn_block_forward.3} parent=5 // pred_check_branch
        %3148 = sbr.rel (%p3146) target = $region60
      $region59: #{attn_block_forward.3} parent=5 // pred_region
        %s3149 = ssub.s32 %s15, 2
        // Predicated region
        $region61: #{attn_block_forward.3} parent=59 // pred_check
          %p3150 = pneg %p219
        $region62: #{attn_block_forward.3} parent=59 // pred_check_branch
          %3152 = sbr.rel (%p3150) target = $region64
        $region63: #{attn_block_forward.3} parent=59 // pred_region
          %s3153 = sand.u32 %s204, 1
          %s3154 = scalar_lea.sflag [#allocation6], %s3153
          %s3155 = sand.u32 %s204, 1
          %s3156 = smul.addr %s3155, 256
          %s3157 = scalar_lea.vmem [#allocation5], %s3156
          %3158 = dma.done %s3154, 4096
        $region64: #{attn_block_forward.3} parent=59 // pred_fallthru
          _
      $region60: #{attn_block_forward.3} parent=5 // pred_fallthru
        _
    $region6: #{attn_block_forward.3} parent=1 // loop_footer
      %s19 = sadd.s32 1, %s15
    $region7: #{attn_block_forward.3} parent=1 // loop_footer_branch
      %14 = sbr.rel target = $region3
    $region8: #{attn_block_forward.3} parent=1 // loop_exit
      _
    %3159 = vsyncpa [#allocation6], 1
    %s3160 = scalar_lea.sflag [#allocation6], 1
    %3161 = vsyncpa %s3160, 1

</llo_original>
